<compile_context>
chip_gen: v7x
topology: tpu7x:2x2x1
jax: 0.10.0
libtpu: 0.0.40
codegen_flags: <defaults>
</compile_context>

<pallas_src>
import functools
import math

import jax
import jax.numpy as jnp
from jax.experimental import pallas as pl
from jax.experimental.pallas import tpu as pltpu

# ----------------------------- configuration (small) -----------------------------
HIDDEN    = 32                       # hidden_size
NUM_HEADS = 2
EXPAND_K  = 0.75
EXPAND_V  = 1.5
KEY_DIM   = int(HIDDEN * EXPAND_K)   # 24
VALUE_DIM = int(HIDDEN * EXPAND_V)   # 48
HEAD_QK   = KEY_DIM // NUM_HEADS     # 12
HEAD_V    = VALUE_DIM // NUM_HEADS   # 24
CONV_DIM  = 2 * KEY_DIM + VALUE_DIM  # 96  (q|k|v channels fed through the conv)
CONV_SIZE = 4
NORM_EPS  = 1e-5
L2_EPS    = 1e-6
BATCH     = 2
SEQ       = 8

# lane-aligned column offsets inside the packed input-projection weight
_QKV_OFF, _G_OFF, _GB_OFF, _WIN_COLS = 0, 128, 256, 384


def _softplus(x):
    # matches torch.nn.functional.softplus (threshold=20)
    return jnp.where(x > 20.0, x, jnp.log1p(jnp.exp(jnp.minimum(x, 20.0))))


def _dot_t(a, b):
    # a @ b.T without materializing a transpose (contract last dim of both).
    return jax.lax.dot_general(a, b, (((1,), (1,)), ((), ())),
                               preferred_element_type=jnp.float32)


# ------------------------------ fused forward kernel ------------------------------
def _fused_gdn_kernel(x_ref, w_in_ref, misc_ref, w_o_ref, out_ref, *, seq_len):
    L = seq_len
    R = x_ref.shape[0]                 # rows in this grid step = batches_in_block * L
    b_blk = R // L
    H, Dk, Dv, K = NUM_HEADS, HEAD_QK, HEAD_V, CONV_SIZE
    scale = Dk ** -0.5

    x = x_ref[...].astype(jnp.float32)                                     # (R, 32)

    # ---- single fused projection dot:  [q|k|v | g | gk|b] ----
    proj = jnp.dot(x, w_in_ref[...], preferred_element_type=jnp.float32)   # (R, 384)
    qkv_lin = proj[:, _QKV_OFF:_QKV_OFF + CONV_DIM]                        # (R, 96)
    g_lin   = proj[:, _G_OFF:_G_OFF + VALUE_DIM]                           # (R, 48)
    gb_lin  = proj[:, _GB_OFF:_GB_OFF + 2 * H]                             # (R, 2H)

    # ---- unpack the small packed parameter tile ----
    misc  = misc_ref[...].astype(jnp.float32)                              # (8, 128)
    cw    = misc[0:K, 0:CONV_DIM]                                          # (K, 96) conv taps
    a_log = misc[4:5, 0:H]                                                 # (1, H)
    dt_b  = misc[4:5, H:2 * H]                                             # (1, H)
    b_b   = misc[4:5, 2 * H:3 * H]                                         # (1, H)
    gw    = misc[5:6, 0:Dv]                                                # (1, Dv) RMSNorm w

    # ---- depthwise causal conv over time (+ SiLU) via XLU sublane rolls ----
    # out[t, c] = sum_j w[K-1-j, c] * x[t-j, c], zero-padded; mask prevents
    # cross-batch leakage when several batches are folded into the row axis.
    local_t = jax.lax.broadcasted_iota(jnp.int32, (R, 1), 0) % L           # (R, 1)
    acc = qkv_lin * cw[K - 1:K, :]                                         # j = 0 tap
    for j in range(1, K):
        shifted = pltpu.roll(qkv_lin, shift=j, axis=0)                     # rows x[t-j]
        valid = (local_t >= j).astype(jnp.float32)
        acc = acc + (shifted * valid) * cw[K - 1 - j:K - j, :]
    conv_out = acc * jax.nn.sigmoid(acc)                                   # SiLU

    # ---- mamba-style log-decay gate & beta ----
    gk   = -jnp.exp(a_log) * _softplus(gb_lin[:, 0:H] + dt_b)              # (R, H), <= 0
    beta = jax.nn.sigmoid(gb_lin[:, H:2 * H] + b_b)                        # (R, H)

    # causal masks, shared across batches/heads
    rows_i = jax.lax.broadcasted_iota(jnp.int32, (L, L), 0)
    cols_i = jax.lax.broadcasted_iota(jnp.int32, (L, L), 1)
    incl_mask   = (rows_i >= cols_i).astype(jnp.float32)                   # s <= t
    strict_mask = (rows_i > cols_i).astype(jnp.float32)                    # s <  t

    batch_outs = []
    for b in range(b_blk):
        r0 = b * L
        gk_b   = gk[r0:r0 + L, :]                                          # (L, H)
        beta_b = beta[r0:r0 + L, :]                                        # (L, H)
        # inclusive cumulative log-decay via a lower-triangular matmul (no cumsum op)
        csum  = jnp.dot(incl_mask, gk_b, preferred_element_type=jnp.float32)  # (L, H)
        d_pos = jnp.exp(csum)                                              # exp(+c_t) <= 1
        d_neg = jnp.exp(-csum)                                             # exp(-c_s) >= 1

        head_outs = []
        for h in range(H):
            q_h = conv_out[r0:r0 + L, h * Dk:(h + 1) * Dk]                 # (L, Dk)
            k_h = conv_out[r0:r0 + L, KEY_DIM + h * Dk:KEY_DIM + (h + 1) * Dk]
            v_h = conv_out[r0:r0 + L, 2 * KEY_DIM + h * Dv:2 * KEY_DIM + (h + 1) * Dv]
            g_h = g_lin[r0:r0 + L, h * Dv:(h + 1) * Dv]                    # (L, Dv)
            beta_h = beta_b[:, h:h + 1]                                    # (L, 1)
            dpos_h = d_pos[:, h:h + 1]
            dneg_h = d_neg[:, h:h + 1]

            # qk_norm == 'l2' (FLA default scale Dk**-0.5 folded into q)
            qn = q_h * jax.lax.rsqrt(jnp.sum(q_h * q_h, -1, keepdims=True) + L2_EPS) * scale
            kn = k_h * jax.lax.rsqrt(jnp.sum(k_h * k_h, -1, keepdims=True) + L2_EPS)

            # absorb the cumulative decay into q/k so the (L,L) decay matrix
            # exp(c_t - c_s) never needs an explicit transpose.
            q_dec  = qn * dpos_h
            k_dec  = kn * dneg_h
            k_beta = kn * (beta_h * dpos_h)

            # chunkwise WY form of the gated delta rule:
            #   (I - N) W = beta * v,  N[t,s] = -beta_t exp(c_t-c_s) (k_t.k_s), s<t
            # N is strictly lower -> nilpotent -> (I-N)^{-1} = prod_m (I + N^{2^m}).
            n_mat = -(strict_mask * _dot_t(k_beta, k_dec))                 # (L, L)
            w = v_h * beta_h                                               # (L, Dv)
            n_pow, m = n_mat, 1
            while m < L:
                w = w + jnp.dot(n_pow, w, preferred_element_type=jnp.float32)
                if 2 * m < L:
                    n_pow = jnp.dot(n_pow, n_pow, preferred_element_type=jnp.float32)
                m *= 2

            # outputs: o_t = sum_{s<=t} exp(c_t-c_s) (q_t.k_s) w_s
            attn = incl_mask * _dot_t(q_dec, k_dec)                        # (L, L)
            o_h = jnp.dot(attn, w, preferred_element_type=jnp.float32)     # (L, Dv)

            # fused per-head RMSNorm + swish gate (all still resident in vregs)
            var = jnp.mean(o_h * o_h, axis=-1, keepdims=True)
            o_n = o_h * jax.lax.rsqrt(var + NORM_EPS) * gw
            head_outs.append(o_n * g_h * jax.nn.sigmoid(g_h))

        batch_outs.append(jnp.concatenate(head_outs, axis=1))              # (L, H*Dv)

    o_cat = jnp.concatenate(batch_outs, axis=0) if b_blk > 1 else batch_outs[0]
    out = jnp.dot(o_cat, w_o_ref[...], preferred_element_type=jnp.float32) # (R, 32)
    out_ref[...] = out.astype(out_ref.dtype)


# --------------------------------- full forward -----------------------------------
def _tensorcores_per_chip():
    try:
        kind = jax.devices()[0].device_kind.lower()
        if "v7" in kind or "7x" in kind:
            return 2
    except Exception:
        pass
    return 1


def gated_delta_net_forward(params, hidden_states):
    B, L, Dm = hidden_states.shape
    # Single-TC chips (v5e/v6e): fold the whole batch into one grid step.
    # v7x (2 TCs): keep grid=(B,) "parallel" so megacore shards the batches.
    batch_block = B if _tensorcores_per_chip() == 1 else 1
    if B % batch_block:
        batch_block = 1
    num_blocks = B // batch_block
    rows = batch_block * L

    x2 = hidden_states.reshape(B * L, Dm)

    out2 = pl.pallas_call(
        functools.partial(_fused_gdn_kernel, seq_len=L),
        out_shape=jax.ShapeDtypeStruct((B * L, Dm), hidden_states.dtype),
        grid=(num_blocks,),
        in_specs=[
            pl.BlockSpec((rows, Dm), lambda b: (b, 0)),                 # hidden states
            pl.BlockSpec((Dm, _WIN_COLS), lambda b: (0, 0)),            # packed [Wq|Wk|Wv | Wg | Wgk|Wb]^T
            pl.BlockSpec((8, 128), lambda b: (0, 0)),                   # packed conv/gate/norm params
            pl.BlockSpec((VALUE_DIM, Dm), lambda b: (0, 0)),            # Wo^T
        ],
        out_specs=pl.BlockSpec((rows, Dm), lambda b: (b, 0)),
        compiler_params=pltpu.CompilerParams(dimension_semantics=("parallel",)),
    )(x2, params["w_in"], params["misc"], params["w_o_t"])
    return out2.reshape(B, L, Dm)


# ------------------------------ deterministic params -------------------------------
def init_params(key):
    ks = jax.random.split(key, 13)

    def lin_w(k, out_dim, in_dim):
        b = 1.0 / math.sqrt(in_dim)
        return jax.random.uniform(k, (out_dim, in_dim), jnp.float32, -b, b)

    def conv_w(k, dim, ksize):
        b = 1.0 / math.sqrt(ksize)
        return jax.random.uniform(k, (ksize, dim), jnp.float32, -b, b)   # (K, D)

    w_q = lin_w(ks[0], KEY_DIM, HIDDEN)
    w_k = lin_w(ks[1], KEY_DIM, HIDDEN)
    w_v = lin_w(ks[2], VALUE_DIM, HIDDEN)
    w_g = lin_w(ks[3], VALUE_DIM, HIDDEN)
    w_gk = lin_w(ks[4], NUM_HEADS, HIDDEN)
    w_b = lin_w(ks[5], NUM_HEADS, HIDDEN)
    bb = 1.0 / math.sqrt(HIDDEN)
    b_bias = jax.random.uniform(ks[6], (NUM_HEADS,), jnp.float32, -bb, bb)
    conv_q = conv_w(ks[7], KEY_DIM, CONV_SIZE)
    conv_k = conv_w(ks[8], KEY_DIM, CONV_SIZE)
    conv_v = conv_w(ks[9], VALUE_DIM, CONV_SIZE)

    # mamba gate parameters: A ~ U(0,16), dt init as in the module
    A = jax.random.uniform(ks[10], (NUM_HEADS,), jnp.float32, 0.0, 16.0)
    A_log = jnp.log(A)
    dt = jnp.exp(jax.random.uniform(ks[11], (NUM_HEADS,), jnp.float32)
                 * (math.log(0.1) - math.log(0.001)) + math.log(0.001))
    dt = jnp.maximum(dt, 1e-4)
    dt_bias = dt + jnp.log(-jnp.expm1(-dt))
    w_o = lin_w(ks[12], HIDDEN, VALUE_DIM)

    # ---- pre-pack everything into 3 lane-aligned arrays (fewer, denser DMAs) ----
    w_in = jnp.zeros((HIDDEN, _WIN_COLS), jnp.float32)
    w_in = w_in.at[:, _QKV_OFF:_QKV_OFF + CONV_DIM].set(
        jnp.concatenate([w_q.T, w_k.T, w_v.T], axis=1))
    w_in = w_in.at[:, _G_OFF:_G_OFF + VALUE_DIM].set(w_g.T)
    w_in = w_in.at[:, _GB_OFF:_GB_OFF + 2 * NUM_HEADS].set(
        jnp.concatenate([w_gk.T, w_b.T], axis=1))

    misc = jnp.zeros((8, 128), jnp.float32)
    misc = misc.at[0:CONV_SIZE, 0:CONV_DIM].set(
        jnp.concatenate([conv_q, conv_k, conv_v], axis=1))
    misc = misc.at[4, 0:NUM_HEADS].set(A_log)
    misc = misc.at[4, NUM_HEADS:2 * NUM_HEADS].set(dt_bias)
    misc = misc.at[4, 2 * NUM_HEADS:3 * NUM_HEADS].set(b_bias)
    misc = misc.at[5, 0:HEAD_V].set(jnp.ones((HEAD_V,), jnp.float32))   # RMSNorm weight

    return {"w_in": w_in, "misc": misc, "w_o_t": w_o.T}


if __name__ == "__main__":
    key = jax.random.PRNGKey(0)
    pkey, xkey = jax.random.split(key)
    params = init_params(pkey)
    x = jax.random.normal(xkey, (BATCH, SEQ, HIDDEN), jnp.float32)

    fwd = jax.jit(gated_delta_net_forward)
    out = fwd(params, x)
    jax.block_until_ready(out)
    assert out.shape == (BATCH, SEQ, HIDDEN)
    assert bool(jnp.all(jnp.isfinite(out)))
    print("KERNEL_OK")
</pallas_src>

<mosaic_0001>
module attributes {stable_mosaic.version = 11 : i64} {
  func.func @_fused_gdn_kernel(%arg0: i32, %arg1: memref<16x32xf32, #tpu.memory_space<vmem>>, %arg2: memref<32x384xf32, #tpu.memory_space<vmem>>, %arg3: memref<8x128xf32, #tpu.memory_space<vmem>>, %arg4: memref<48x32xf32, #tpu.memory_space<vmem>>, %arg5: memref<16x32xf32, #tpu.memory_space<vmem>>) attributes {dimension_semantics = [#tpu.dimension_semantics<parallel>], iteration_bounds = array<i64: 1>, scalar_prefetch = 0 : i64, scratch_operands = 0 : i64, tpu.core_type = #tpu.core_type<tc>, window_params = [{transform_indices = @transform_0, window_bounds = array<i64: 16, 32>}, {pipeline_mode = #tpu.pipeline_mode<synchronous>, transform_indices = @transform_1, window_bounds = array<i64: 32, 384>}, {pipeline_mode = #tpu.pipeline_mode<synchronous>, transform_indices = @transform_2, window_bounds = array<i64: 8, 128>}, {pipeline_mode = #tpu.pipeline_mode<synchronous>, transform_indices = @transform_3, window_bounds = array<i64: 48, 32>}, {transform_indices = @transform_4, window_bounds = array<i64: 16, 32>}]} {
    %c0 = arith.constant 0 : index
    %c0_0 = arith.constant 0 : index
    %0 = vector.load %arg1[%c0, %c0_0] : memref<16x32xf32, #tpu.memory_space<vmem>>, vector<16x32xf32>
    %c0_1 = arith.constant 0 : index
    %c0_2 = arith.constant 0 : index
    %1 = vector.load %arg2[%c0_1, %c0_2] : memref<32x384xf32, #tpu.memory_space<vmem>>, vector<32x384xf32>
    %cst = arith.constant dense<0.000000e+00> : vector<16x384xf32>
    %2 = tpu.matmul %0, %1, %cst {dimension_numbers = #tpu.dot_dimension_numbers<[1], [0], [0], [1], [0, 0, 1, 1], [], []>} : vector<16x32xf32>, vector<32x384xf32>, vector<16x384xf32> -> vector<16x384xf32>
    %3 = vector.extract_strided_slice %2 {offsets = [0, 0], sizes = [16, 96], strides = [1, 1]} : vector<16x384xf32> to vector<16x96xf32>
    %4 = vector.extract_strided_slice %2 {offsets = [0, 128], sizes = [16, 48], strides = [1, 1]} : vector<16x384xf32> to vector<16x48xf32>
    %5 = vector.extract_strided_slice %2 {offsets = [0, 256], sizes = [16, 4], strides = [1, 1]} : vector<16x384xf32> to vector<16x4xf32>
    %c0_3 = arith.constant 0 : index
    %c0_4 = arith.constant 0 : index
    %6 = vector.load %arg3[%c0_3, %c0_4] : memref<8x128xf32, #tpu.memory_space<vmem>>, vector<8x128xf32>
    %7 = vector.extract_strided_slice %6 {offsets = [0, 0], sizes = [4, 96], strides = [1, 1]} : vector<8x128xf32> to vector<4x96xf32>
    %8 = vector.extract_strided_slice %6 {offsets = [4, 0], sizes = [1, 2], strides = [1, 1]} : vector<8x128xf32> to vector<1x2xf32>
    %9 = vector.extract_strided_slice %6 {offsets = [4, 2], sizes = [1, 2], strides = [1, 1]} : vector<8x128xf32> to vector<1x2xf32>
    %10 = vector.extract_strided_slice %6 {offsets = [4, 4], sizes = [1, 2], strides = [1, 1]} : vector<8x128xf32> to vector<1x2xf32>
    %11 = vector.extract_strided_slice %6 {offsets = [5, 0], sizes = [1, 24], strides = [1, 1]} : vector<8x128xf32> to vector<1x24xf32>
    %12 = tpu.iota {dimensions = array<i32: 0>} : vector<16x1xi32>
    %c8_i32 = arith.constant 8 : i32
    %c0_i32 = arith.constant 0 : i32
    %13 = arith.cmpi eq, %c8_i32, %c0_i32 : i32
    %c1_i32 = arith.constant 1 : i32
    %14 = arith.select %13, %c1_i32, %c8_i32 : i32
    %15 = vector.broadcast %14 : i32 to vector<16x1xi32>
    %16 = arith.remsi %12, %15 : vector<16x1xi32>
    %c0_i32_5 = arith.constant 0 : i32
    %17 = vector.broadcast %c0_i32_5 : i32 to vector<16x1xi32>
    %18 = arith.cmpi ne, %16, %17 : vector<16x1xi32>
    %c0_i32_6 = arith.constant 0 : i32
    %19 = vector.broadcast %c0_i32_6 : i32 to vector<16x1xi32>
    %20 = arith.cmpi slt, %16, %19 : vector<16x1xi32>
    %c0_i32_7 = arith.constant 0 : i32
    %21 = arith.cmpi slt, %14, %c0_i32_7 : i32
    %22 = vector.broadcast %21 : i1 to vector<16x1xi1>
    %23 = vector.broadcast %22 : vector<16x1xi1> to vector<16x1xi1>
    %24 = arith.xori %20, %23 : vector<16x1xi1>
    %25 = arith.andi %24, %18 : vector<16x1xi1>
    %26 = vector.broadcast %14 : i32 to vector<16x1xi32>
    %27 = arith.addi %16, %26 : vector<16x1xi32>
    %28 = arith.select %25, %27, %16 : vector<16x1xi1>, vector<16x1xi32>
    %29 = vector.extract_strided_slice %7 {offsets = [3, 0], sizes = [1, 96], strides = [1, 1]} : vector<4x96xf32> to vector<1x96xf32>
    %30 = vector.broadcast %29 : vector<1x96xf32> to vector<16x96xf32>
    %31 = arith.mulf %3, %30 : vector<16x96xf32>
    %c1_i32_8 = arith.constant 1 : i32
    %32 = tpu.dynamic_rotate %3 by %c1_i32_8 dim 0 : vector<16x96xf32>, i32 -> vector<16x96xf32>
    %c1_i32_9 = arith.constant 1 : i32
    %33 = vector.broadcast %c1_i32_9 : i32 to vector<16x1xi32>
    %34 = arith.cmpi sge, %28, %33 : vector<16x1xi32>
    %35 = arith.extui %34 : vector<16x1xi1> to vector<16x1xi32>
    %36 = arith.sitofp %35 : vector<16x1xi32> to vector<16x1xf32>
    %37 = vector.broadcast %36 : vector<16x1xf32> to vector<16x96xf32>
    %38 = arith.mulf %32, %37 : vector<16x96xf32>
    %39 = vector.extract_strided_slice %7 {offsets = [2, 0], sizes = [1, 96], strides = [1, 1]} : vector<4x96xf32> to vector<1x96xf32>
    %40 = vector.broadcast %39 : vector<1x96xf32> to vector<16x96xf32>
    %41 = arith.mulf %38, %40 : vector<16x96xf32>
    %42 = arith.addf %31, %41 : vector<16x96xf32>
    %c2_i32 = arith.constant 2 : i32
    %43 = tpu.dynamic_rotate %3 by %c2_i32 dim 0 : vector<16x96xf32>, i32 -> vector<16x96xf32>
    %c2_i32_10 = arith.constant 2 : i32
    %44 = vector.broadcast %c2_i32_10 : i32 to vector<16x1xi32>
    %45 = arith.cmpi sge, %28, %44 : vector<16x1xi32>
    %46 = arith.extui %45 : vector<16x1xi1> to vector<16x1xi32>
    %47 = arith.sitofp %46 : vector<16x1xi32> to vector<16x1xf32>
    %48 = vector.broadcast %47 : vector<16x1xf32> to vector<16x96xf32>
    %49 = arith.mulf %43, %48 : vector<16x96xf32>
    %50 = vector.extract_strided_slice %7 {offsets = [1, 0], sizes = [1, 96], strides = [1, 1]} : vector<4x96xf32> to vector<1x96xf32>
    %51 = vector.broadcast %50 : vector<1x96xf32> to vector<16x96xf32>
    %52 = arith.mulf %49, %51 : vector<16x96xf32>
    %53 = arith.addf %42, %52 : vector<16x96xf32>
    %c3_i32 = arith.constant 3 : i32
    %54 = tpu.dynamic_rotate %3 by %c3_i32 dim 0 : vector<16x96xf32>, i32 -> vector<16x96xf32>
    %c3_i32_11 = arith.constant 3 : i32
    %55 = vector.broadcast %c3_i32_11 : i32 to vector<16x1xi32>
    %56 = arith.cmpi sge, %28, %55 : vector<16x1xi32>
    %57 = arith.extui %56 : vector<16x1xi1> to vector<16x1xi32>
    %58 = arith.sitofp %57 : vector<16x1xi32> to vector<16x1xf32>
    %59 = vector.broadcast %58 : vector<16x1xf32> to vector<16x96xf32>
    %60 = arith.mulf %54, %59 : vector<16x96xf32>
    %61 = vector.extract_strided_slice %7 {offsets = [0, 0], sizes = [1, 96], strides = [1, 1]} : vector<4x96xf32> to vector<1x96xf32>
    %62 = vector.broadcast %61 : vector<1x96xf32> to vector<16x96xf32>
    %63 = arith.mulf %60, %62 : vector<16x96xf32>
    %64 = arith.addf %53, %63 : vector<16x96xf32>
    %65 = arith.negf %64 : vector<16x96xf32>
    %66 = math.exp %65 : vector<16x96xf32>
    %cst_12 = arith.constant 1.000000e+00 : f32
    %67 = vector.broadcast %cst_12 : f32 to vector<16x96xf32>
    %68 = arith.addf %67, %66 : vector<16x96xf32>
    %69 = arith.divf %67, %68 : vector<16x96xf32>
    %70 = arith.mulf %64, %69 : vector<16x96xf32>
    %71 = math.exp %8 : vector<1x2xf32>
    %cst_13 = arith.constant 0.000000e+00 : f32
    %72 = vector.broadcast %cst_13 : f32 to vector<1x2xf32>
    %73 = arith.subf %72, %71 : vector<1x2xf32>
    %74 = vector.extract_strided_slice %5 {offsets = [0, 0], sizes = [16, 2], strides = [1, 1]} : vector<16x4xf32> to vector<16x2xf32>
    %75 = vector.broadcast %9 : vector<1x2xf32> to vector<16x2xf32>
    %76 = arith.addf %74, %75 : vector<16x2xf32>
    %cst_14 = arith.constant 2.000000e+01 : f32
    %77 = vector.broadcast %cst_14 : f32 to vector<16x2xf32>
    %78 = arith.cmpf ogt, %76, %77 : vector<16x2xf32>
    %cst_15 = arith.constant 2.000000e+01 : f32
    %79 = vector.broadcast %cst_15 : f32 to vector<16x2xf32>
    %80 = arith.minimumf %76, %79 : vector<16x2xf32>
    %81 = math.exp %80 : vector<16x2xf32>
    %82 = math.log1p %81 : vector<16x2xf32>
    %83 = arith.select %78, %76, %82 : vector<16x2xi1>, vector<16x2xf32>
    %84 = vector.broadcast %73 : vector<1x2xf32> to vector<16x2xf32>
    %85 = arith.mulf %84, %83 : vector<16x2xf32>
    %86 = vector.extract_strided_slice %5 {offsets = [0, 2], sizes = [16, 2], strides = [1, 1]} : vector<16x4xf32> to vector<16x2xf32>
    %87 = vector.broadcast %10 : vector<1x2xf32> to vector<16x2xf32>
    %88 = arith.addf %86, %87 : vector<16x2xf32>
    %89 = arith.negf %88 : vector<16x2xf32>
    %90 = math.exp %89 : vector<16x2xf32>
    %cst_16 = arith.constant 1.000000e+00 : f32
    %91 = vector.broadcast %cst_16 : f32 to vector<16x2xf32>
    %92 = arith.addf %91, %90 : vector<16x2xf32>
    %93 = arith.divf %91, %92 : vector<16x2xf32>
    %94 = tpu.iota {dimensions = array<i32: 0>} : vector<8x8xi32>
    %95 = tpu.iota {dimensions = array<i32: 1>} : vector<8x8xi32>
    %96 = arith.cmpi sge, %94, %95 : vector<8x8xi32>
    %97 = arith.extui %96 : vector<8x8xi1> to vector<8x8xi32>
    %98 = arith.sitofp %97 : vector<8x8xi32> to vector<8x8xf32>
    %99 = arith.cmpi sgt, %94, %95 : vector<8x8xi32>
    %100 = arith.extui %99 : vector<8x8xi1> to vector<8x8xi32>
    %101 = arith.sitofp %100 : vector<8x8xi32> to vector<8x8xf32>
    %102 = vector.extract_strided_slice %85 {offsets = [0, 0], sizes = [8, 2], strides = [1, 1]} : vector<16x2xf32> to vector<8x2xf32>
    %103 = vector.extract_strided_slice %93 {offsets = [0, 0], sizes = [8, 2], strides = [1, 1]} : vector<16x2xf32> to vector<8x2xf32>
    %cst_17 = arith.constant dense<0.000000e+00> : vector<8x2xf32>
    %104 = tpu.matmul %98, %102, %cst_17 {dimension_numbers = #tpu.dot_dimension_numbers<[1], [0], [0], [1], [0, 0, 1, 1], [], []>} : vector<8x8xf32>, vector<8x2xf32>, vector<8x2xf32> -> vector<8x2xf32>
    %105 = math.exp %104 : vector<8x2xf32>
    %cst_18 = arith.constant 0.000000e+00 : f32
    %106 = vector.broadcast %cst_18 : f32 to vector<8x2xf32>
    %107 = arith.subf %106, %104 : vector<8x2xf32>
    %108 = math.exp %107 : vector<8x2xf32>
    %109 = vector.extract_strided_slice %70 {offsets = [0, 0], sizes = [8, 12], strides = [1, 1]} : vector<16x96xf32> to vector<8x12xf32>
    %110 = vector.extract_strided_slice %70 {offsets = [0, 24], sizes = [8, 12], strides = [1, 1]} : vector<16x96xf32> to vector<8x12xf32>
    %111 = vector.extract_strided_slice %70 {offsets = [0, 48], sizes = [8, 24], strides = [1, 1]} : vector<16x96xf32> to vector<8x24xf32>
    %112 = vector.extract_strided_slice %4 {offsets = [0, 0], sizes = [8, 24], strides = [1, 1]} : vector<16x48xf32> to vector<8x24xf32>
    %113 = vector.extract_strided_slice %103 {offsets = [0, 0], sizes = [8, 1], strides = [1, 1]} : vector<8x2xf32> to vector<8x1xf32>
    %114 = vector.extract_strided_slice %105 {offsets = [0, 0], sizes = [8, 1], strides = [1, 1]} : vector<8x2xf32> to vector<8x1xf32>
    %115 = vector.extract_strided_slice %108 {offsets = [0, 0], sizes = [8, 1], strides = [1, 1]} : vector<8x2xf32> to vector<8x1xf32>
    %116 = arith.mulf %109, %109 : vector<8x12xf32>
    %cst_19 = arith.constant dense<0.000000e+00> : vector<8xf32>
    %117 = vector.multi_reduction <add>, %116, %cst_19 [1] : vector<8x12xf32> to vector<8xf32>
    %118 = vector.shape_cast %117 : vector<8xf32> to vector<8x1xf32>
    %cst_20 = arith.constant 9.99999997E-7 : f32
    %119 = vector.broadcast %cst_20 : f32 to vector<8x1xf32>
    %120 = arith.addf %118, %119 : vector<8x1xf32>
    %121 = math.rsqrt %120 : vector<8x1xf32>
    %122 = vector.broadcast %121 : vector<8x1xf32> to vector<8x12xf32>
    %123 = arith.mulf %109, %122 : vector<8x12xf32>
    %cst_21 = arith.constant 0.288675129 : f32
    %124 = vector.broadcast %cst_21 : f32 to vector<8x12xf32>
    %125 = arith.mulf %123, %124 : vector<8x12xf32>
    %126 = arith.mulf %110, %110 : vector<8x12xf32>
    %cst_22 = arith.constant dense<0.000000e+00> : vector<8xf32>
    %127 = vector.multi_reduction <add>, %126, %cst_22 [1] : vector<8x12xf32> to vector<8xf32>
    %128 = vector.shape_cast %127 : vector<8xf32> to vector<8x1xf32>
    %cst_23 = arith.constant 9.99999997E-7 : f32
    %129 = vector.broadcast %cst_23 : f32 to vector<8x1xf32>
    %130 = arith.addf %128, %129 : vector<8x1xf32>
    %131 = math.rsqrt %130 : vector<8x1xf32>
    %132 = vector.broadcast %131 : vector<8x1xf32> to vector<8x12xf32>
    %133 = arith.mulf %110, %132 : vector<8x12xf32>
    %134 = vector.broadcast %114 : vector<8x1xf32> to vector<8x12xf32>
    %135 = arith.mulf %125, %134 : vector<8x12xf32>
    %136 = vector.broadcast %115 : vector<8x1xf32> to vector<8x12xf32>
    %137 = arith.mulf %133, %136 : vector<8x12xf32>
    %138 = arith.mulf %113, %114 : vector<8x1xf32>
    %139 = vector.broadcast %138 : vector<8x1xf32> to vector<8x12xf32>
    %140 = arith.mulf %133, %139 : vector<8x12xf32>
    %cst_24 = arith.constant dense<0.000000e+00> : vector<8x8xf32>
    %141 = tpu.matmul %140, %137, %cst_24 {dimension_numbers = #tpu.dot_dimension_numbers<[1], [1], [0], [0], [0, 0, 1, 0], [], []>} : vector<8x12xf32>, vector<8x12xf32>, vector<8x8xf32> -> vector<8x8xf32>
    %142 = arith.mulf %101, %141 : vector<8x8xf32>
    %cst_25 = arith.constant 0.000000e+00 : f32
    %143 = vector.broadcast %cst_25 : f32 to vector<8x8xf32>
    %144 = arith.subf %143, %142 : vector<8x8xf32>
    %145 = vector.broadcast %113 : vector<8x1xf32> to vector<8x24xf32>
    %146 = arith.mulf %111, %145 : vector<8x24xf32>
    %cst_26 = arith.constant dense<0.000000e+00> : vector<8x24xf32>
    %147 = tpu.matmul %144, %146, %cst_26 {dimension_numbers = #tpu.dot_dimension_numbers<[1], [0], [0], [1], [0, 0, 1, 1], [], []>} : vector<8x8xf32>, vector<8x24xf32>, vector<8x24xf32> -> vector<8x24xf32>
    %148 = arith.addf %146, %147 : vector<8x24xf32>
    %cst_27 = arith.constant dense<0.000000e+00> : vector<8x8xf32>
    %149 = tpu.matmul %144, %144, %cst_27 {dimension_numbers = #tpu.dot_dimension_numbers<[1], [0], [0], [1], [0, 0, 1, 1], [], []>} : vector<8x8xf32>, vector<8x8xf32>, vector<8x8xf32> -> vector<8x8xf32>
    %cst_28 = arith.constant dense<0.000000e+00> : vector<8x24xf32>
    %150 = tpu.matmul %149, %148, %cst_28 {dimension_numbers = #tpu.dot_dimension_numbers<[1], [0], [0], [1], [0, 0, 1, 1], [], []>} : vector<8x8xf32>, vector<8x24xf32>, vector<8x24xf32> -> vector<8x24xf32>
    %151 = arith.addf %148, %150 : vector<8x24xf32>
    %cst_29 = arith.constant dense<0.000000e+00> : vector<8x8xf32>
    %152 = tpu.matmul %149, %149, %cst_29 {dimension_numbers = #tpu.dot_dimension_numbers<[1], [0], [0], [1], [0, 0, 1, 1], [], []>} : vector<8x8xf32>, vector<8x8xf32>, vector<8x8xf32> -> vector<8x8xf32>
    %cst_30 = arith.constant dense<0.000000e+00> : vector<8x24xf32>
    %153 = tpu.matmul %152, %151, %cst_30 {dimension_numbers = #tpu.dot_dimension_numbers<[1], [0], [0], [1], [0, 0, 1, 1], [], []>} : vector<8x8xf32>, vector<8x24xf32>, vector<8x24xf32> -> vector<8x24xf32>
    %154 = arith.addf %151, %153 : vector<8x24xf32>
    %cst_31 = arith.constant dense<0.000000e+00> : vector<8x8xf32>
    %155 = tpu.matmul %135, %137, %cst_31 {dimension_numbers = #tpu.dot_dimension_numbers<[1], [1], [0], [0], [0, 0, 1, 0], [], []>} : vector<8x12xf32>, vector<8x12xf32>, vector<8x8xf32> -> vector<8x8xf32>
    %156 = arith.mulf %98, %155 : vector<8x8xf32>
    %cst_32 = arith.constant dense<0.000000e+00> : vector<8x24xf32>
    %157 = tpu.matmul %156, %154, %cst_32 {dimension_numbers = #tpu.dot_dimension_numbers<[1], [0], [0], [1], [0, 0, 1, 1], [], []>} : vector<8x8xf32>, vector<8x24xf32>, vector<8x24xf32> -> vector<8x24xf32>
    %158 = arith.mulf %157, %157 : vector<8x24xf32>
    %cst_33 = arith.constant dense<0.000000e+00> : vector<8xf32>
    %159 = vector.multi_reduction <add>, %158, %cst_33 [1] : vector<8x24xf32> to vector<8xf32>
    %160 = vector.shape_cast %159 : vector<8xf32> to vector<8x1xf32>
    %cst_34 = arith.constant 2.400000e+01 : f32
    %161 = vector.broadcast %cst_34 : f32 to vector<8x1xf32>
    %162 = arith.divf %160, %161 : vector<8x1xf32>
    %cst_35 = arith.constant 9.99999974E-6 : f32
    %163 = vector.broadcast %cst_35 : f32 to vector<8x1xf32>
    %164 = arith.addf %162, %163 : vector<8x1xf32>
    %165 = math.rsqrt %164 : vector<8x1xf32>
    %166 = vector.broadcast %165 : vector<8x1xf32> to vector<8x24xf32>
    %167 = arith.mulf %157, %166 : vector<8x24xf32>
    %168 = vector.broadcast %11 : vector<1x24xf32> to vector<8x24xf32>
    %169 = arith.mulf %167, %168 : vector<8x24xf32>
    %170 = arith.mulf %169, %112 : vector<8x24xf32>
    %171 = arith.negf %112 : vector<8x24xf32>
    %172 = math.exp %171 : vector<8x24xf32>
    %cst_36 = arith.constant 1.000000e+00 : f32
    %173 = vector.broadcast %cst_36 : f32 to vector<8x24xf32>
    %174 = arith.addf %173, %172 : vector<8x24xf32>
    %175 = arith.divf %173, %174 : vector<8x24xf32>
    %176 = arith.mulf %170, %175 : vector<8x24xf32>
    %177 = vector.extract_strided_slice %70 {offsets = [0, 12], sizes = [8, 12], strides = [1, 1]} : vector<16x96xf32> to vector<8x12xf32>
    %178 = vector.extract_strided_slice %70 {offsets = [0, 36], sizes = [8, 12], strides = [1, 1]} : vector<16x96xf32> to vector<8x12xf32>
    %179 = vector.extract_strided_slice %70 {offsets = [0, 72], sizes = [8, 24], strides = [1, 1]} : vector<16x96xf32> to vector<8x24xf32>
    %180 = vector.extract_strided_slice %4 {offsets = [0, 24], sizes = [8, 24], strides = [1, 1]} : vector<16x48xf32> to vector<8x24xf32>
    %181 = vector.extract_strided_slice %103 {offsets = [0, 1], sizes = [8, 1], strides = [1, 1]} : vector<8x2xf32> to vector<8x1xf32>
    %182 = vector.extract_strided_slice %105 {offsets = [0, 1], sizes = [8, 1], strides = [1, 1]} : vector<8x2xf32> to vector<8x1xf32>
    %183 = vector.extract_strided_slice %108 {offsets = [0, 1], sizes = [8, 1], strides = [1, 1]} : vector<8x2xf32> to vector<8x1xf32>
    %184 = arith.mulf %177, %177 : vector<8x12xf32>
    %cst_37 = arith.constant dense<0.000000e+00> : vector<8xf32>
    %185 = vector.multi_reduction <add>, %184, %cst_37 [1] : vector<8x12xf32> to vector<8xf32>
    %186 = vector.shape_cast %185 : vector<8xf32> to vector<8x1xf32>
    %cst_38 = arith.constant 9.99999997E-7 : f32
    %187 = vector.broadcast %cst_38 : f32 to vector<8x1xf32>
    %188 = arith.addf %186, %187 : vector<8x1xf32>
    %189 = math.rsqrt %188 : vector<8x1xf32>
    %190 = vector.broadcast %189 : vector<8x1xf32> to vector<8x12xf32>
    %191 = arith.mulf %177, %190 : vector<8x12xf32>
    %cst_39 = arith.constant 0.288675129 : f32
    %192 = vector.broadcast %cst_39 : f32 to vector<8x12xf32>
    %193 = arith.mulf %191, %192 : vector<8x12xf32>
    %194 = arith.mulf %178, %178 : vector<8x12xf32>
    %cst_40 = arith.constant dense<0.000000e+00> : vector<8xf32>
    %195 = vector.multi_reduction <add>, %194, %cst_40 [1] : vector<8x12xf32> to vector<8xf32>
    %196 = vector.shape_cast %195 : vector<8xf32> to vector<8x1xf32>
    %cst_41 = arith.constant 9.99999997E-7 : f32
    %197 = vector.broadcast %cst_41 : f32 to vector<8x1xf32>
    %198 = arith.addf %196, %197 : vector<8x1xf32>
    %199 = math.rsqrt %198 : vector<8x1xf32>
    %200 = vector.broadcast %199 : vector<8x1xf32> to vector<8x12xf32>
    %201 = arith.mulf %178, %200 : vector<8x12xf32>
    %202 = vector.broadcast %182 : vector<8x1xf32> to vector<8x12xf32>
    %203 = arith.mulf %193, %202 : vector<8x12xf32>
    %204 = vector.broadcast %183 : vector<8x1xf32> to vector<8x12xf32>
    %205 = arith.mulf %201, %204 : vector<8x12xf32>
    %206 = arith.mulf %181, %182 : vector<8x1xf32>
    %207 = vector.broadcast %206 : vector<8x1xf32> to vector<8x12xf32>
    %208 = arith.mulf %201, %207 : vector<8x12xf32>
    %cst_42 = arith.constant dense<0.000000e+00> : vector<8x8xf32>
    %209 = tpu.matmul %208, %205, %cst_42 {dimension_numbers = #tpu.dot_dimension_numbers<[1], [1], [0], [0], [0, 0, 1, 0], [], []>} : vector<8x12xf32>, vector<8x12xf32>, vector<8x8xf32> -> vector<8x8xf32>
    %210 = arith.mulf %101, %209 : vector<8x8xf32>
    %cst_43 = arith.constant 0.000000e+00 : f32
    %211 = vector.broadcast %cst_43 : f32 to vector<8x8xf32>
    %212 = arith.subf %211, %210 : vector<8x8xf32>
    %213 = vector.broadcast %181 : vector<8x1xf32> to vector<8x24xf32>
    %214 = arith.mulf %179, %213 : vector<8x24xf32>
    %cst_44 = arith.constant dense<0.000000e+00> : vector<8x24xf32>
    %215 = tpu.matmul %212, %214, %cst_44 {dimension_numbers = #tpu.dot_dimension_numbers<[1], [0], [0], [1], [0, 0, 1, 1], [], []>} : vector<8x8xf32>, vector<8x24xf32>, vector<8x24xf32> -> vector<8x24xf32>
    %216 = arith.addf %214, %215 : vector<8x24xf32>
    %cst_45 = arith.constant dense<0.000000e+00> : vector<8x8xf32>
    %217 = tpu.matmul %212, %212, %cst_45 {dimension_numbers = #tpu.dot_dimension_numbers<[1], [0], [0], [1], [0, 0, 1, 1], [], []>} : vector<8x8xf32>, vector<8x8xf32>, vector<8x8xf32> -> vector<8x8xf32>
    %cst_46 = arith.constant dense<0.000000e+00> : vector<8x24xf32>
    %218 = tpu.matmul %217, %216, %cst_46 {dimension_numbers = #tpu.dot_dimension_numbers<[1], [0], [0], [1], [0, 0, 1, 1], [], []>} : vector<8x8xf32>, vector<8x24xf32>, vector<8x24xf32> -> vector<8x24xf32>
    %219 = arith.addf %216, %218 : vector<8x24xf32>
    %cst_47 = arith.constant dense<0.000000e+00> : vector<8x8xf32>
    %220 = tpu.matmul %217, %217, %cst_47 {dimension_numbers = #tpu.dot_dimension_numbers<[1], [0], [0], [1], [0, 0, 1, 1], [], []>} : vector<8x8xf32>, vector<8x8xf32>, vector<8x8xf32> -> vector<8x8xf32>
    %cst_48 = arith.constant dense<0.000000e+00> : vector<8x24xf32>
    %221 = tpu.matmul %220, %219, %cst_48 {dimension_numbers = #tpu.dot_dimension_numbers<[1], [0], [0], [1], [0, 0, 1, 1], [], []>} : vector<8x8xf32>, vector<8x24xf32>, vector<8x24xf32> -> vector<8x24xf32>
    %222 = arith.addf %219, %221 : vector<8x24xf32>
    %cst_49 = arith.constant dense<0.000000e+00> : vector<8x8xf32>
    %223 = tpu.matmul %203, %205, %cst_49 {dimension_numbers = #tpu.dot_dimension_numbers<[1], [1], [0], [0], [0, 0, 1, 0], [], []>} : vector<8x12xf32>, vector<8x12xf32>, vector<8x8xf32> -> vector<8x8xf32>
    %224 = arith.mulf %98, %223 : vector<8x8xf32>
    %cst_50 = arith.constant dense<0.000000e+00> : vector<8x24xf32>
    %225 = tpu.matmul %224, %222, %cst_50 {dimension_numbers = #tpu.dot_dimension_numbers<[1], [0], [0], [1], [0, 0, 1, 1], [], []>} : vector<8x8xf32>, vector<8x24xf32>, vector<8x24xf32> -> vector<8x24xf32>
    %226 = arith.mulf %225, %225 : vector<8x24xf32>
    %cst_51 = arith.constant dense<0.000000e+00> : vector<8xf32>
    %227 = vector.multi_reduction <add>, %226, %cst_51 [1] : vector<8x24xf32> to vector<8xf32>
    %228 = vector.shape_cast %227 : vector<8xf32> to vector<8x1xf32>
    %cst_52 = arith.constant 2.400000e+01 : f32
    %229 = vector.broadcast %cst_52 : f32 to vector<8x1xf32>
    %230 = arith.divf %228, %229 : vector<8x1xf32>
    %cst_53 = arith.constant 9.99999974E-6 : f32
    %231 = vector.broadcast %cst_53 : f32 to vector<8x1xf32>
    %232 = arith.addf %230, %231 : vector<8x1xf32>
    %233 = math.rsqrt %232 : vector<8x1xf32>
    %234 = vector.broadcast %233 : vector<8x1xf32> to vector<8x24xf32>
    %235 = arith.mulf %225, %234 : vector<8x24xf32>
    %236 = vector.broadcast %11 : vector<1x24xf32> to vector<8x24xf32>
    %237 = arith.mulf %235, %236 : vector<8x24xf32>
    %238 = arith.mulf %237, %180 : vector<8x24xf32>
    %239 = arith.negf %180 : vector<8x24xf32>
    %240 = math.exp %239 : vector<8x24xf32>
    %cst_54 = arith.constant 1.000000e+00 : f32
    %241 = vector.broadcast %cst_54 : f32 to vector<8x24xf32>
    %242 = arith.addf %241, %240 : vector<8x24xf32>
    %243 = arith.divf %241, %242 : vector<8x24xf32>
    %244 = arith.mulf %238, %243 : vector<8x24xf32>
    %245 = tpu.concatenate %176, %244 in 1 : vector<8x24xf32>, vector<8x24xf32> -> vector<8x48xf32>
    %246 = vector.extract_strided_slice %85 {offsets = [8, 0], sizes = [8, 2], strides = [1, 1]} : vector<16x2xf32> to vector<8x2xf32>
    %247 = vector.extract_strided_slice %93 {offsets = [8, 0], sizes = [8, 2], strides = [1, 1]} : vector<16x2xf32> to vector<8x2xf32>
    %cst_55 = arith.constant dense<0.000000e+00> : vector<8x2xf32>
    %248 = tpu.matmul %98, %246, %cst_55 {dimension_numbers = #tpu.dot_dimension_numbers<[1], [0], [0], [1], [0, 0, 1, 1], [], []>} : vector<8x8xf32>, vector<8x2xf32>, vector<8x2xf32> -> vector<8x2xf32>
    %249 = math.exp %248 : vector<8x2xf32>
    %cst_56 = arith.constant 0.000000e+00 : f32
    %250 = vector.broadcast %cst_56 : f32 to vector<8x2xf32>
    %251 = arith.subf %250, %248 : vector<8x2xf32>
    %252 = math.exp %251 : vector<8x2xf32>
    %253 = vector.extract_strided_slice %70 {offsets = [8, 0], sizes = [8, 12], strides = [1, 1]} : vector<16x96xf32> to vector<8x12xf32>
    %254 = vector.extract_strided_slice %70 {offsets = [8, 24], sizes = [8, 12], strides = [1, 1]} : vector<16x96xf32> to vector<8x12xf32>
    %255 = vector.extract_strided_slice %70 {offsets = [8, 48], sizes = [8, 24], strides = [1, 1]} : vector<16x96xf32> to vector<8x24xf32>
    %256 = vector.extract_strided_slice %4 {offsets = [8, 0], sizes = [8, 24], strides = [1, 1]} : vector<16x48xf32> to vector<8x24xf32>
    %257 = vector.extract_strided_slice %247 {offsets = [0, 0], sizes = [8, 1], strides = [1, 1]} : vector<8x2xf32> to vector<8x1xf32>
    %258 = vector.extract_strided_slice %249 {offsets = [0, 0], sizes = [8, 1], strides = [1, 1]} : vector<8x2xf32> to vector<8x1xf32>
    %259 = vector.extract_strided_slice %252 {offsets = [0, 0], sizes = [8, 1], strides = [1, 1]} : vector<8x2xf32> to vector<8x1xf32>
    %260 = arith.mulf %253, %253 : vector<8x12xf32>
    %cst_57 = arith.constant dense<0.000000e+00> : vector<8xf32>
    %261 = vector.multi_reduction <add>, %260, %cst_57 [1] : vector<8x12xf32> to vector<8xf32>
    %262 = vector.shape_cast %261 : vector<8xf32> to vector<8x1xf32>
    %cst_58 = arith.constant 9.99999997E-7 : f32
    %263 = vector.broadcast %cst_58 : f32 to vector<8x1xf32>
    %264 = arith.addf %262, %263 : vector<8x1xf32>
    %265 = math.rsqrt %264 : vector<8x1xf32>
    %266 = vector.broadcast %265 : vector<8x1xf32> to vector<8x12xf32>
    %267 = arith.mulf %253, %266 : vector<8x12xf32>
    %cst_59 = arith.constant 0.288675129 : f32
    %268 = vector.broadcast %cst_59 : f32 to vector<8x12xf32>
    %269 = arith.mulf %267, %268 : vector<8x12xf32>
    %270 = arith.mulf %254, %254 : vector<8x12xf32>
    %cst_60 = arith.constant dense<0.000000e+00> : vector<8xf32>
    %271 = vector.multi_reduction <add>, %270, %cst_60 [1] : vector<8x12xf32> to vector<8xf32>
    %272 = vector.shape_cast %271 : vector<8xf32> to vector<8x1xf32>
    %cst_61 = arith.constant 9.99999997E-7 : f32
    %273 = vector.broadcast %cst_61 : f32 to vector<8x1xf32>
    %274 = arith.addf %272, %273 : vector<8x1xf32>
    %275 = math.rsqrt %274 : vector<8x1xf32>
    %276 = vector.broadcast %275 : vector<8x1xf32> to vector<8x12xf32>
    %277 = arith.mulf %254, %276 : vector<8x12xf32>
    %278 = vector.broadcast %258 : vector<8x1xf32> to vector<8x12xf32>
    %279 = arith.mulf %269, %278 : vector<8x12xf32>
    %280 = vector.broadcast %259 : vector<8x1xf32> to vector<8x12xf32>
    %281 = arith.mulf %277, %280 : vector<8x12xf32>
    %282 = arith.mulf %257, %258 : vector<8x1xf32>
    %283 = vector.broadcast %282 : vector<8x1xf32> to vector<8x12xf32>
    %284 = arith.mulf %277, %283 : vector<8x12xf32>
    %cst_62 = arith.constant dense<0.000000e+00> : vector<8x8xf32>
    %285 = tpu.matmul %284, %281, %cst_62 {dimension_numbers = #tpu.dot_dimension_numbers<[1], [1], [0], [0], [0, 0, 1, 0], [], []>} : vector<8x12xf32>, vector<8x12xf32>, vector<8x8xf32> -> vector<8x8xf32>
    %286 = arith.mulf %101, %285 : vector<8x8xf32>
    %cst_63 = arith.constant 0.000000e+00 : f32
    %287 = vector.broadcast %cst_63 : f32 to vector<8x8xf32>
    %288 = arith.subf %287, %286 : vector<8x8xf32>
    %289 = vector.broadcast %257 : vector<8x1xf32> to vector<8x24xf32>
    %290 = arith.mulf %255, %289 : vector<8x24xf32>
    %cst_64 = arith.constant dense<0.000000e+00> : vector<8x24xf32>
    %291 = tpu.matmul %288, %290, %cst_64 {dimension_numbers = #tpu.dot_dimension_numbers<[1], [0], [0], [1], [0, 0, 1, 1], [], []>} : vector<8x8xf32>, vector<8x24xf32>, vector<8x24xf32> -> vector<8x24xf32>
    %292 = arith.addf %290, %291 : vector<8x24xf32>
    %cst_65 = arith.constant dense<0.000000e+00> : vector<8x8xf32>
    %293 = tpu.matmul %288, %288, %cst_65 {dimension_numbers = #tpu.dot_dimension_numbers<[1], [0], [0], [1], [0, 0, 1, 1], [], []>} : vector<8x8xf32>, vector<8x8xf32>, vector<8x8xf32> -> vector<8x8xf32>
    %cst_66 = arith.constant dense<0.000000e+00> : vector<8x24xf32>
    %294 = tpu.matmul %293, %292, %cst_66 {dimension_numbers = #tpu.dot_dimension_numbers<[1], [0], [0], [1], [0, 0, 1, 1], [], []>} : vector<8x8xf32>, vector<8x24xf32>, vector<8x24xf32> -> vector<8x24xf32>
    %295 = arith.addf %292, %294 : vector<8x24xf32>
    %cst_67 = arith.constant dense<0.000000e+00> : vector<8x8xf32>
    %296 = tpu.matmul %293, %293, %cst_67 {dimension_numbers = #tpu.dot_dimension_numbers<[1], [0], [0], [1], [0, 0, 1, 1], [], []>} : vector<8x8xf32>, vector<8x8xf32>, vector<8x8xf32> -> vector<8x8xf32>
    %cst_68 = arith.constant dense<0.000000e+00> : vector<8x24xf32>
    %297 = tpu.matmul %296, %295, %cst_68 {dimension_numbers = #tpu.dot_dimension_numbers<[1], [0], [0], [1], [0, 0, 1, 1], [], []>} : vector<8x8xf32>, vector<8x24xf32>, vector<8x24xf32> -> vector<8x24xf32>
    %298 = arith.addf %295, %297 : vector<8x24xf32>
    %cst_69 = arith.constant dense<0.000000e+00> : vector<8x8xf32>
    %299 = tpu.matmul %279, %281, %cst_69 {dimension_numbers = #tpu.dot_dimension_numbers<[1], [1], [0], [0], [0, 0, 1, 0], [], []>} : vector<8x12xf32>, vector<8x12xf32>, vector<8x8xf32> -> vector<8x8xf32>
    %300 = arith.mulf %98, %299 : vector<8x8xf32>
    %cst_70 = arith.constant dense<0.000000e+00> : vector<8x24xf32>
    %301 = tpu.matmul %300, %298, %cst_70 {dimension_numbers = #tpu.dot_dimension_numbers<[1], [0], [0], [1], [0, 0, 1, 1], [], []>} : vector<8x8xf32>, vector<8x24xf32>, vector<8x24xf32> -> vector<8x24xf32>
    %302 = arith.mulf %301, %301 : vector<8x24xf32>
    %cst_71 = arith.constant dense<0.000000e+00> : vector<8xf32>
    %303 = vector.multi_reduction <add>, %302, %cst_71 [1] : vector<8x24xf32> to vector<8xf32>
    %304 = vector.shape_cast %303 : vector<8xf32> to vector<8x1xf32>
    %cst_72 = arith.constant 2.400000e+01 : f32
    %305 = vector.broadcast %cst_72 : f32 to vector<8x1xf32>
    %306 = arith.divf %304, %305 : vector<8x1xf32>
    %cst_73 = arith.constant 9.99999974E-6 : f32
    %307 = vector.broadcast %cst_73 : f32 to vector<8x1xf32>
    %308 = arith.addf %306, %307 : vector<8x1xf32>
    %309 = math.rsqrt %308 : vector<8x1xf32>
    %310 = vector.broadcast %309 : vector<8x1xf32> to vector<8x24xf32>
    %311 = arith.mulf %301, %310 : vector<8x24xf32>
    %312 = vector.broadcast %11 : vector<1x24xf32> to vector<8x24xf32>
    %313 = arith.mulf %311, %312 : vector<8x24xf32>
    %314 = arith.mulf %313, %256 : vector<8x24xf32>
    %315 = arith.negf %256 : vector<8x24xf32>
    %316 = math.exp %315 : vector<8x24xf32>
    %cst_74 = arith.constant 1.000000e+00 : f32
    %317 = vector.broadcast %cst_74 : f32 to vector<8x24xf32>
    %318 = arith.addf %317, %316 : vector<8x24xf32>
    %319 = arith.divf %317, %318 : vector<8x24xf32>
    %320 = arith.mulf %314, %319 : vector<8x24xf32>
    %321 = vector.extract_strided_slice %70 {offsets = [8, 12], sizes = [8, 12], strides = [1, 1]} : vector<16x96xf32> to vector<8x12xf32>
    %322 = vector.extract_strided_slice %70 {offsets = [8, 36], sizes = [8, 12], strides = [1, 1]} : vector<16x96xf32> to vector<8x12xf32>
    %323 = vector.extract_strided_slice %70 {offsets = [8, 72], sizes = [8, 24], strides = [1, 1]} : vector<16x96xf32> to vector<8x24xf32>
    %324 = vector.extract_strided_slice %4 {offsets = [8, 24], sizes = [8, 24], strides = [1, 1]} : vector<16x48xf32> to vector<8x24xf32>
    %325 = vector.extract_strided_slice %247 {offsets = [0, 1], sizes = [8, 1], strides = [1, 1]} : vector<8x2xf32> to vector<8x1xf32>
    %326 = vector.extract_strided_slice %249 {offsets = [0, 1], sizes = [8, 1], strides = [1, 1]} : vector<8x2xf32> to vector<8x1xf32>
    %327 = vector.extract_strided_slice %252 {offsets = [0, 1], sizes = [8, 1], strides = [1, 1]} : vector<8x2xf32> to vector<8x1xf32>
    %328 = arith.mulf %321, %321 : vector<8x12xf32>
    %cst_75 = arith.constant dense<0.000000e+00> : vector<8xf32>
    %329 = vector.multi_reduction <add>, %328, %cst_75 [1] : vector<8x12xf32> to vector<8xf32>
    %330 = vector.shape_cast %329 : vector<8xf32> to vector<8x1xf32>
    %cst_76 = arith.constant 9.99999997E-7 : f32
    %331 = vector.broadcast %cst_76 : f32 to vector<8x1xf32>
    %332 = arith.addf %330, %331 : vector<8x1xf32>
    %333 = math.rsqrt %332 : vector<8x1xf32>
    %334 = vector.broadcast %333 : vector<8x1xf32> to vector<8x12xf32>
    %335 = arith.mulf %321, %334 : vector<8x12xf32>
    %cst_77 = arith.constant 0.288675129 : f32
    %336 = vector.broadcast %cst_77 : f32 to vector<8x12xf32>
    %337 = arith.mulf %335, %336 : vector<8x12xf32>
    %338 = arith.mulf %322, %322 : vector<8x12xf32>
    %cst_78 = arith.constant dense<0.000000e+00> : vector<8xf32>
    %339 = vector.multi_reduction <add>, %338, %cst_78 [1] : vector<8x12xf32> to vector<8xf32>
    %340 = vector.shape_cast %339 : vector<8xf32> to vector<8x1xf32>
    %cst_79 = arith.constant 9.99999997E-7 : f32
    %341 = vector.broadcast %cst_79 : f32 to vector<8x1xf32>
    %342 = arith.addf %340, %341 : vector<8x1xf32>
    %343 = math.rsqrt %342 : vector<8x1xf32>
    %344 = vector.broadcast %343 : vector<8x1xf32> to vector<8x12xf32>
    %345 = arith.mulf %322, %344 : vector<8x12xf32>
    %346 = vector.broadcast %326 : vector<8x1xf32> to vector<8x12xf32>
    %347 = arith.mulf %337, %346 : vector<8x12xf32>
    %348 = vector.broadcast %327 : vector<8x1xf32> to vector<8x12xf32>
    %349 = arith.mulf %345, %348 : vector<8x12xf32>
    %350 = arith.mulf %325, %326 : vector<8x1xf32>
    %351 = vector.broadcast %350 : vector<8x1xf32> to vector<8x12xf32>
    %352 = arith.mulf %345, %351 : vector<8x12xf32>
    %cst_80 = arith.constant dense<0.000000e+00> : vector<8x8xf32>
    %353 = tpu.matmul %352, %349, %cst_80 {dimension_numbers = #tpu.dot_dimension_numbers<[1], [1], [0], [0], [0, 0, 1, 0], [], []>} : vector<8x12xf32>, vector<8x12xf32>, vector<8x8xf32> -> vector<8x8xf32>
    %354 = arith.mulf %101, %353 : vector<8x8xf32>
    %cst_81 = arith.constant 0.000000e+00 : f32
    %355 = vector.broadcast %cst_81 : f32 to vector<8x8xf32>
    %356 = arith.subf %355, %354 : vector<8x8xf32>
    %357 = vector.broadcast %325 : vector<8x1xf32> to vector<8x24xf32>
    %358 = arith.mulf %323, %357 : vector<8x24xf32>
    %cst_82 = arith.constant dense<0.000000e+00> : vector<8x24xf32>
    %359 = tpu.matmul %356, %358, %cst_82 {dimension_numbers = #tpu.dot_dimension_numbers<[1], [0], [0], [1], [0, 0, 1, 1], [], []>} : vector<8x8xf32>, vector<8x24xf32>, vector<8x24xf32> -> vector<8x24xf32>
    %360 = arith.addf %358, %359 : vector<8x24xf32>
    %cst_83 = arith.constant dense<0.000000e+00> : vector<8x8xf32>
    %361 = tpu.matmul %356, %356, %cst_83 {dimension_numbers = #tpu.dot_dimension_numbers<[1], [0], [0], [1], [0, 0, 1, 1], [], []>} : vector<8x8xf32>, vector<8x8xf32>, vector<8x8xf32> -> vector<8x8xf32>
    %cst_84 = arith.constant dense<0.000000e+00> : vector<8x24xf32>
    %362 = tpu.matmul %361, %360, %cst_84 {dimension_numbers = #tpu.dot_dimension_numbers<[1], [0], [0], [1], [0, 0, 1, 1], [], []>} : vector<8x8xf32>, vector<8x24xf32>, vector<8x24xf32> -> vector<8x24xf32>
    %363 = arith.addf %360, %362 : vector<8x24xf32>
    %cst_85 = arith.constant dense<0.000000e+00> : vector<8x8xf32>
    %364 = tpu.matmul %361, %361, %cst_85 {dimension_numbers = #tpu.dot_dimension_numbers<[1], [0], [0], [1], [0, 0, 1, 1], [], []>} : vector<8x8xf32>, vector<8x8xf32>, vector<8x8xf32> -> vector<8x8xf32>
    %cst_86 = arith.constant dense<0.000000e+00> : vector<8x24xf32>
    %365 = tpu.matmul %364, %363, %cst_86 {dimension_numbers = #tpu.dot_dimension_numbers<[1], [0], [0], [1], [0, 0, 1, 1], [], []>} : vector<8x8xf32>, vector<8x24xf32>, vector<8x24xf32> -> vector<8x24xf32>
    %366 = arith.addf %363, %365 : vector<8x24xf32>
    %cst_87 = arith.constant dense<0.000000e+00> : vector<8x8xf32>
    %367 = tpu.matmul %347, %349, %cst_87 {dimension_numbers = #tpu.dot_dimension_numbers<[1], [1], [0], [0], [0, 0, 1, 0], [], []>} : vector<8x12xf32>, vector<8x12xf32>, vector<8x8xf32> -> vector<8x8xf32>
    %368 = arith.mulf %98, %367 : vector<8x8xf32>
    %cst_88 = arith.constant dense<0.000000e+00> : vector<8x24xf32>
    %369 = tpu.matmul %368, %366, %cst_88 {dimension_numbers = #tpu.dot_dimension_numbers<[1], [0], [0], [1], [0, 0, 1, 1], [], []>} : vector<8x8xf32>, vector<8x24xf32>, vector<8x24xf32> -> vector<8x24xf32>
    %370 = arith.mulf %369, %369 : vector<8x24xf32>
    %cst_89 = arith.constant dense<0.000000e+00> : vector<8xf32>
    %371 = vector.multi_reduction <add>, %370, %cst_89 [1] : vector<8x24xf32> to vector<8xf32>
    %372 = vector.shape_cast %371 : vector<8xf32> to vector<8x1xf32>
    %cst_90 = arith.constant 2.400000e+01 : f32
    %373 = vector.broadcast %cst_90 : f32 to vector<8x1xf32>
    %374 = arith.divf %372, %373 : vector<8x1xf32>
    %cst_91 = arith.constant 9.99999974E-6 : f32
    %375 = vector.broadcast %cst_91 : f32 to vector<8x1xf32>
    %376 = arith.addf %374, %375 : vector<8x1xf32>
    %377 = math.rsqrt %376 : vector<8x1xf32>
    %378 = vector.broadcast %377 : vector<8x1xf32> to vector<8x24xf32>
    %379 = arith.mulf %369, %378 : vector<8x24xf32>
    %380 = vector.broadcast %11 : vector<1x24xf32> to vector<8x24xf32>
    %381 = arith.mulf %379, %380 : vector<8x24xf32>
    %382 = arith.mulf %381, %324 : vector<8x24xf32>
    %383 = arith.negf %324 : vector<8x24xf32>
    %384 = math.exp %383 : vector<8x24xf32>
    %cst_92 = arith.constant 1.000000e+00 : f32
    %385 = vector.broadcast %cst_92 : f32 to vector<8x24xf32>
    %386 = arith.addf %385, %384 : vector<8x24xf32>
    %387 = arith.divf %385, %386 : vector<8x24xf32>
    %388 = arith.mulf %382, %387 : vector<8x24xf32>
    %389 = tpu.concatenate %320, %388 in 1 : vector<8x24xf32>, vector<8x24xf32> -> vector<8x48xf32>
    %390 = tpu.concatenate %245, %389 in 0 : vector<8x48xf32>, vector<8x48xf32> -> vector<16x48xf32>
    %c0_93 = arith.constant 0 : index
    %c0_94 = arith.constant 0 : index
    %391 = vector.load %arg4[%c0_93, %c0_94] : memref<48x32xf32, #tpu.memory_space<vmem>>, vector<48x32xf32>
    %cst_95 = arith.constant dense<0.000000e+00> : vector<16x32xf32>
    %392 = tpu.matmul %390, %391, %cst_95 {dimension_numbers = #tpu.dot_dimension_numbers<[1], [0], [0], [1], [0, 0, 1, 1], [], []>} : vector<16x48xf32>, vector<48x32xf32>, vector<16x32xf32> -> vector<16x32xf32>
    %c0_96 = arith.constant 0 : index
    %c0_97 = arith.constant 0 : index
    %393 = vector.load %arg5[%c0_96, %c0_97] : memref<16x32xf32, #tpu.memory_space<vmem>>, vector<16x32xf32>
    tpu.vector_store %arg5[%c0_96, %c0_97], %392 {strides = array<i32>} : memref<16x32xf32, #tpu.memory_space<vmem>>, vector<16x32xf32>,
    return
  }
  func.func @transform_0(%arg0: i32) -> (i32, i32) {
    %c0_i32 = arith.constant 0 : i32
    %c0_i32_0 = arith.constant 0 : i32
    return %arg0, %c0_i32 : i32, i32
  }
  func.func @transform_1(%arg0: i32) -> (i32, i32) {
    %c0_i32 = arith.constant 0 : i32
    %c0_i32_0 = arith.constant 0 : i32
    %c0_i32_1 = arith.constant 0 : i32
    return %c0_i32, %c0_i32_0 : i32, i32
  }
  func.func @transform_2(%arg0: i32) -> (i32, i32) {
    %c0_i32 = arith.constant 0 : i32
    %c0_i32_0 = arith.constant 0 : i32
    %c0_i32_1 = arith.constant 0 : i32
    return %c0_i32, %c0_i32_0 : i32, i32
  }
  func.func @transform_3(%arg0: i32) -> (i32, i32) {
    %c0_i32 = arith.constant 0 : i32
    %c0_i32_0 = arith.constant 0 : i32
    %c0_i32_1 = arith.constant 0 : i32
    return %c0_i32, %c0_i32_0 : i32, i32
  }
  func.func @transform_4(%arg0: i32) -> (i32, i32) {
    %c0_i32 = arith.constant 0 : i32
    %c0_i32_0 = arith.constant 0 : i32
    return %arg0, %c0_i32 : i32, i32
  }
}

</mosaic_0001>

<llo_original>
// kernel: gated_delta_net_forward.1
$region0: #{gated_delta_net_forward.1}
  #allocation0 [shape = 'u32[]', space=smem, size = 0x4, offset = 0x4, fixed_abs, tag = 'smem constant byte address 0x4 - core index']
  #allocation1 [shape = 'u32[144,128]{1,0:T(1,128)}', space=vmem, size = 0x12000, scoped, tag = 'internal scratch']
  %s0 = inlined_call_operand.vmem [shape: f32[16,32], index: 0, kind: input, shape index: {}]
  %s1 = inlined_call_operand.hbm [shape: f32[32,384], index: 1, kind: input, shape index: {}]
  %s2 = inlined_call_operand.vmem [shape: f32[8,128], index: 2, kind: input, shape index: {}]
  %s3 = inlined_call_operand.vmem [shape: f32[48,32], index: 3, kind: input, shape index: {}]
  %s4 = inlined_call_operand.hbm [shape: f32[16,32], index: 4, kind: output, shape index: {}]
  %s5 = sld [smem:[#allocation0]]
  $region30: #{gated_delta_net_forward.1} parent=0
    _
  %s7 = ssub.s32 1, %s5
  %s8 = scalar_select 0, %s7, %s5
  $region1: #{gated_delta_net_forward.1} parent=0
    #allocation2 [shape = 'u8[49152]{0}', space=vmem, size = 0xc000, scoped, tag = 'input window, operand 1, single buffered']
    #allocation3 [shape = 's32[1]{0}', space=sflag, size = 0x4, scoped, tag = 'scoped memory for gated_delta_net_forward.1']
    #allocation4 [shape = 's32[1]{0}', space=sflag, size = 0x4, scoped, tag = 'scoped memory for gated_delta_net_forward.1']
    #allocation5 [shape = 'u8[8192]{0}', space=vmem, size = 0x2000, scoped, tag = 'output window, operand 0, single buffered']
    %9 = vsyncpa [#allocation3], 0
    %10 = vsyncpa [#allocation4], 0
    // Predicated region
    $region2: #{gated_delta_net_forward.1} parent=1 // pred_check
      _
    $region3: #{gated_delta_net_forward.1} parent=1 // pred_check_branch
      %12 = sbr.rel (0) target = $region5
    $region4: #{gated_delta_net_forward.1} parent=1 // pred_region
      _
    $region5: #{gated_delta_net_forward.1} parent=1 // pred_fallthru
      _
    // Predicated region
    $region6: #{gated_delta_net_forward.1} parent=1 // pred_check
      _
    $region7: #{gated_delta_net_forward.1} parent=1 // pred_check_branch
      %14 = sbr.rel (0) target = $region9
    $region8: #{gated_delta_net_forward.1} parent=1 // pred_region
      %s16 = ssub.s32 1536, 1536
      %17 = vsyncadd [#allocation3], %s16
      %s18 = sshll.u32 [#allocation2], 4
      %s19 = int_to_ptr.vmem [resolvable:$true] %s18
      %24 = dma.hbm_to_vmem [thread:$0]  %s1, 1536, %s19, [#allocation3], 384, 384, 24
    $region9: #{gated_delta_net_forward.1} parent=1 // pred_fallthru
      _
    // Predicated region
    $region10: #{gated_delta_net_forward.1} parent=1 // pred_check
      _
    $region11: #{gated_delta_net_forward.1} parent=1 // pred_check_branch
      %26 = sbr.rel (0) target = $region13
    $region12: #{gated_delta_net_forward.1} parent=1 // pred_region
      _
    $region13: #{gated_delta_net_forward.1} parent=1 // pred_fallthru
      _
    // Predicated region
    $region14: #{gated_delta_net_forward.1} parent=1 // pred_check
      _
    $region15: #{gated_delta_net_forward.1} parent=1 // pred_check_branch
      %28 = sbr.rel (0) target = $region17
    $region16: #{gated_delta_net_forward.1} parent=1 // pred_region
      _
    $region17: #{gated_delta_net_forward.1} parent=1 // pred_fallthru
      _
    // Predicated region
    $region18: #{gated_delta_net_forward.1} parent=1 // pred_check
      _
    $region19: #{gated_delta_net_forward.1} parent=1 // pred_check_branch
      %30 = sbr.rel (0) target = $region21
    $region20: #{gated_delta_net_forward.1} parent=1 // pred_region
      %31 = dma.done [#allocation3], 1536
    $region21: #{gated_delta_net_forward.1} parent=1 // pred_fallthru
      _
    %v32 = vld [vmem:[%s0] sm:$0xff]
    %v33 = vld [vmem:[%s0 + $0x8] sm:$0xff]
    %v34 = vld [vmem:[#allocation2] sm:$0xff]
    %v35 = vld [vmem:[#allocation2 + $0x8] sm:$0xff]
    %v36 = vld [vmem:[#allocation2 + $0x10] sm:$0xff]
    %v37 = vld [vmem:[#allocation2 + $0x18] sm:$0xff]
    %v38 = vld [vmem:[#allocation2 + $0x20] sm:$0xff]
    %v39 = vld [vmem:[#allocation2 + $0x28] sm:$0xff]
    %v40 = vld [vmem:[#allocation2 + $0x30] sm:$0xff]
    %v41 = vld [vmem:[#allocation2 + $0x38] sm:$0xff]
    %v42 = vld [vmem:[#allocation2 + $0x40] sm:$0xff]
    %v43 = vld [vmem:[#allocation2 + $0x48] sm:$0xff]
    %v44 = vld [vmem:[#allocation2 + $0x50] sm:$0xff]
    %v45 = vld [vmem:[#allocation2 + $0x58] sm:$0xff]
    %vm46 = vcmask 261120
    %v48 = vsel %vm46, %v32, 0
    %v51 = vsel %vm46, %v33, 0
    %53 = vmatprep.subr.mxu0 %v35
    %54 = vmatpush1.msra.mxu0 %v34
    %55 = vmatprep.subr.mxu0 %v38
    %56 = vmatpush1.msra.mxu0 %v37
    %57 = vmatprep.subr.mxu0 %v41
    %58 = vmatpush1.msra.mxu0 %v40
    %59 = vmatprep.subr.mxu0 %v44
    %60 = vmatpush1.msra.mxu0 %v43
    %61 = vmatprep.subr.mxu0 0.0
    %62 = vmatpush1.msra.mxu0 0.0
    %63 = vmatprep.subr.mxu0 0.0
    %64 = vmatpush1.msra.mxu0 0.0
    %65 = vmatprep.subr.mxu0 0.0
    %66 = vmatpush1.msra.mxu0 0.0
    %67 = vmatprep.subr.mxu0 0.0
    %68 = vmatpush1.msra.mxu0 0.0
    %69 = vmatprep.subr.mxu0 0.0
    %70 = vmatpush1.msra.mxu0 0.0
    %71 = vmatprep.subr.mxu0 0.0
    %72 = vmatpush1.msra.mxu0 0.0
    %73 = vmatprep.subr.mxu0 0.0
    %74 = vmatpush1.msra.mxu0 0.0
    %75 = vmatprep.subr.mxu0 0.0
    %76 = vmatpush1.msra.mxu0 0.0
    %77 = vmatprep.subr.mxu0 0.0
    %78 = vmatpush1.msra.mxu0 0.0
    %79 = vmatprep.subr.mxu0 0.0
    %80 = vmatpush1.msra.mxu0 0.0
    %81 = vmatprep.subr.mxu0 0.0
    %82 = vmatpush1.msra.mxu0 0.0
    %83 = vmatprep.subr.mxu0 0.0
    %84 = vmatpush1.msra.mxu0 0.0
    %85 = vmatprep.subr.mxu0 0.0
    %86 = vmatpush1.msra.mxu0 0.0
    %87 = vmatprep.subr.mxu0 0.0
    %88 = vmatpush1.msra.mxu0 0.0
    %89 = vmatprep.subr.mxu0 0.0
    %90 = vmatpush1.msra.mxu0 0.0
    %91 = vmatprep.subr.mxu0 0.0
    %92 = vmatpush1.msra.mxu0 0.0
    %93 = vmatprep.subr.mxu0 0.0
    %94 = vmatpush1.msra.mxu0 0.0
    %95 = vmatprep.subr.mxu0 0.0
    %96 = vmatpush1.msra.mxu0 0.0
    %97 = vmatprep.subr.mxu0 0.0
    %98 = vmatpush1.msra.mxu0 0.0
    %99 = vmatprep.subr.mxu0 0.0
    %100 = vmatpush1.msra.mxu0 0.0
    %101 = vmatprep.subr.mxu0 0.0
    %102 = vmatpush1.msra.mxu0 0.0
    %103 = vmatprep.subr.mxu0 0.0
    %104 = vmatpush1.msra.mxu0 0.0
    %105 = vmatprep.subr.mxu0 0.0
    %106 = vmatpush1.msra.mxu0 0.0
    %107 = vmatprep.subr.mxu0 0.0
    %108 = vmatpush1.msra.mxu0 0.0
    %109 = vmatprep.subr.mxu0 0.0
    %110 = vmatpush1.msra.mxu0 0.0
    %111 = vmatprep.subr.mxu0 0.0
    %112 = vmatpush1.msra.mxu0 0.0
    %113 = vmatprep.subr.mxu0 0.0
    %114 = vmatpush1.msra.mxu0 0.0
    %115 = vmatprep.subr.mxu0 0.0
    %116 = vmatpush1.msra.mxu0 0.0
    %117 = vmatprep.mubr.f32.mxu0 0.0
    %118 = vmatmul.mubr.f32.gmra.mrb[0].mxu0 %v48
    %v119 = vpop.f32.mrb[0].mxu0
    %v120 = vadd.f32 0.0, %v119
    %v121 = vpop.f32.mrb[0].mxu0
    %v122 = vadd.f32 0.0, %v121
    %123 = vmatprep.mubr.f32.mxu0 0.0
    %124 = vmatmul.mubr.f32.gmra.mrb[0].mxu0 %v51
    %v125 = vpop.f32.mrb[0].mxu0
    %v126 = vadd.f32 0.0, %v125
    %v127 = vpop.f32.mrb[0].mxu0
    %v128 = vadd.f32 0.0, %v127
    %129 = vdwg.mxu0
    %130 = vmatprep.subr.mxu0 0.0
    %131 = vmatpush1.msra.mxu0 %v36
    %132 = vmatprep.subr.mxu0 0.0
    %133 = vmatpush1.msra.mxu0 %v39
    %134 = vmatprep.subr.mxu0 0.0
    %135 = vmatpush1.msra.mxu0 %v42
    %136 = vmatprep.subr.mxu0 0.0
    %137 = vmatpush1.msra.mxu0 %v45
    %138 = vmatprep.subr.mxu0 0.0
    %139 = vmatpush1.msra.mxu0 0.0
    %140 = vmatprep.subr.mxu0 0.0
    %141 = vmatpush1.msra.mxu0 0.0
    %142 = vmatprep.subr.mxu0 0.0
    %143 = vmatpush1.msra.mxu0 0.0
    %144 = vmatprep.subr.mxu0 0.0
    %145 = vmatpush1.msra.mxu0 0.0
    %146 = vmatprep.subr.mxu0 0.0
    %147 = vmatpush1.msra.mxu0 0.0
    %148 = vmatprep.subr.mxu0 0.0
    %149 = vmatpush1.msra.mxu0 0.0
    %150 = vmatprep.subr.mxu0 0.0
    %151 = vmatpush1.msra.mxu0 0.0
    %152 = vmatprep.subr.mxu0 0.0
    %153 = vmatpush1.msra.mxu0 0.0
    %154 = vmatprep.subr.mxu0 0.0
    %155 = vmatpush1.msra.mxu0 0.0
    %156 = vmatprep.subr.mxu0 0.0
    %157 = vmatpush1.msra.mxu0 0.0
    %158 = vmatprep.subr.mxu0 0.0
    %159 = vmatpush1.msra.mxu0 0.0
    %160 = vmatprep.subr.mxu0 0.0
    %161 = vmatpush1.msra.mxu0 0.0
    %162 = vmatprep.subr.mxu0 0.0
    %163 = vmatpush1.msra.mxu0 0.0
    %164 = vmatprep.subr.mxu0 0.0
    %165 = vmatpush1.msra.mxu0 0.0
    %166 = vmatprep.subr.mxu0 0.0
    %167 = vmatpush1.msra.mxu0 0.0
    %168 = vmatprep.subr.mxu0 0.0
    %169 = vmatpush1.msra.mxu0 0.0
    %170 = vmatprep.subr.mxu0 0.0
    %171 = vmatpush1.msra.mxu0 0.0
    %172 = vmatprep.subr.mxu0 0.0
    %173 = vmatpush1.msra.mxu0 0.0
    %174 = vmatprep.subr.mxu0 0.0
    %175 = vmatpush1.msra.mxu0 0.0
    %176 = vmatprep.subr.mxu0 0.0
    %177 = vmatpush1.msra.mxu0 0.0
    %178 = vmatprep.subr.mxu0 0.0
    %179 = vmatpush1.msra.mxu0 0.0
    %180 = vmatprep.subr.mxu0 0.0
    %181 = vmatpush1.msra.mxu0 0.0
    %182 = vmatprep.subr.mxu0 0.0
    %183 = vmatpush1.msra.mxu0 0.0
    %184 = vmatprep.subr.mxu0 0.0
    %185 = vmatpush1.msra.mxu0 0.0
    %186 = vmatprep.subr.mxu0 0.0
    %187 = vmatpush1.msra.mxu0 0.0
    %188 = vmatprep.subr.mxu0 0.0
    %189 = vmatpush1.msra.mxu0 0.0
    %190 = vmatprep.subr.mxu0 0.0
    %191 = vmatpush1.msra.mxu0 0.0
    %192 = vmatprep.subr.mxu0 0.0
    %193 = vmatpush1.msra.mxu0 0.0
    %194 = vmatprep.mubr.f32.mxu0 0.0
    %195 = vmatmul.mubr.f32.gmra.mrb[0].mxu0 %v48
    %v196 = vpop.f32.mrb[0].mxu0
    %v197 = vadd.f32 0.0, %v196
    %v198 = vpop.f32.mrb[0].mxu0
    %199 = vmatprep.mubr.f32.mxu0 0.0
    %200 = vmatmul.mubr.f32.gmra.mrb[0].mxu0 %v51
    %v201 = vpop.f32.mrb[0].mxu0
    %v202 = vadd.f32 0.0, %v201
    %v203 = vpop.f32.mrb[0].mxu0
    %204 = vdwg.mxu0
    %v205 = vld [vmem:[%s2] sm:$0xff]
    %v206 = vlaneseq
    %v207 = vshrl.u32 %v206, 7
    %v208 = vadd.s32 %v207, 8
    %vm209 = vcmp.lt.s32.totalorder %v207, 0
    %v210 = vsub.s32 0, %v207
    %v211 = vsel %vm209, %v210, %v207
    %v212 = vshrl.u32 %v211, 3
    %v213 = vand.u32 %v211, 7
    %v214 = vsub.s32 0, %v213
    %v215 = vsel %vm209, %v214, %v213
    %vm216 = vcmp.lt.s32.totalorder %v208, 0
    %v217 = vsub.s32 0, %v208
    %v218 = vsel %vm216, %v217, %v208
    %v219 = vshrl.u32 %v218, 3
    %v220 = vand.u32 %v218, 7
    %v221 = vsub.s32 0, %v220
    %v222 = vsel %vm216, %v221, %v220
    %vm223 = vcmp.ne.s32.totalorder %v215, 0
    %vm224 = vcmp.ne.s32.totalorder %v222, 0
    %vm225 = vcmp.lt.s32.totalorder %v215, 0
    %vm226 = vcmp.lt.s32.totalorder %v222, 0
    %vm227 = vmand %vm225, %vm223
    %vm228 = vmand %vm226, %vm224
    %v229 = vadd.s32 %v215, 8
    %v230 = vadd.s32 %v222, 8
    %v231 = vsel %vm227, %v229, %v215
    %v232 = vsel %vm228, %v230, %v222
    %v233 = vlaneseq
    %v234 = vshrl.u32 %v233, 7
    %v235 = vsub.s32 3, %v234
    %v236 = vrot.slane %v205, %v235
    %v237 = vmul.f32 %v120, %v236
    %v238 = vmul.f32 %v126, %v236
    %v239 = vrot.slane %v120, 7
    %v240 = vrot.slane %v126, 7
    %vm241 = vcmp.lt.s32.totalorder %v207, 1
    %v242 = vsel %vm241, %v239, %v240
    %v243 = vsel %vm241, %v240, %v239
    %vm244 = vcmp.ge.s32.totalorder %v231, 1
    %vm245 = vcmp.ge.s32.totalorder %v232, 1
    %v246 = vsel %vm244, 1, 0
    %v247 = vsel %vm245, 1, 0
    %v248 = vcvt.s32.f32 %v246
    %v249 = vcvt.s32.f32 %v247
    %v250 = vmul.f32 %v243, %v248
    %v251 = vmul.f32 %v242, %v249
    %v252 = vlaneseq
    %v253 = vshrl.u32 %v252, 7
    %v254 = vsub.s32 2, %v253
    %v255 = vrot.slane %v205, %v254
    %v256 = vmul.f32 %v250, %v255
    %v257 = vmul.f32 %v251, %v255
    %v258 = vadd.f32 %v237, %v256
    %v259 = vadd.f32 %v238, %v257
    %v260 = vrot.slane %v120, 6
    %v261 = vrot.slane %v126, 6
    %vm262 = vcmp.lt.s32.totalorder %v207, 2
    %v263 = vsel %vm262, %v260, %v261
    %v264 = vsel %vm262, %v261, %v260
    %vm265 = vcmp.ge.s32.totalorder %v231, 2
    %vm266 = vcmp.ge.s32.totalorder %v232, 2
    %v267 = vsel %vm265, 1, 0
    %v268 = vsel %vm266, 1, 0
    %v269 = vcvt.s32.f32 %v267
    %v270 = vcvt.s32.f32 %v268
    %v271 = vmul.f32 %v264, %v269
    %v272 = vmul.f32 %v263, %v270
    %v273 = vlaneseq
    %v274 = vshrl.u32 %v273, 7
    %v275 = vsub.s32 1, %v274
    %v276 = vrot.slane %v205, %v275
    %v277 = vmul.f32 %v271, %v276
    %v278 = vmul.f32 %v272, %v276
    %v279 = vadd.f32 %v258, %v277
    %v280 = vadd.f32 %v259, %v278
    %v281 = vrot.slane %v120, 5
    %v282 = vrot.slane %v126, 5
    %vm283 = vcmp.lt.s32.totalorder %v207, 3
    %v284 = vsel %vm283, %v281, %v282
    %v285 = vsel %vm283, %v282, %v281
    %vm286 = vcmp.ge.s32.totalorder %v231, 3
    %vm287 = vcmp.ge.s32.totalorder %v232, 3
    %v288 = vsel %vm286, 1, 0
    %v289 = vsel %vm287, 1, 0
    %v290 = vcvt.s32.f32 %v288
    %v291 = vcvt.s32.f32 %v289
    %v292 = vmul.f32 %v285, %v290
    %v293 = vmul.f32 %v284, %v291
    %v294 = vlaneseq
    %v295 = vshrl.u32 %v294, 7
    %v296 = vsub.s32 0, %v295
    %v297 = vrot.slane %v205, %v296
    %v298 = vmul.f32 %v292, %v297
    %v299 = vmul.f32 %v293, %v297
    %v300 = vadd.f32 %v279, %v298
    %v301 = vadd.f32 %v280, %v299
    %v302 = vxor.u32 %v300, 2147483648
    %v303 = vxor.u32 %v301, 2147483648
    %v304 = vmul.f32 %v302, 1.442695
    %v305 = vpow.pop %v304
    %v306 = vmul.f32 %v303, 1.442695
    %v307 = vpow.pop %v306
    %v308 = vadd.f32 %v305, 1.0
    %v309 = vadd.f32 %v307, 1.0
    %v310 = vrcp.pop %v308
    %v311 = vmul.f32 1.0, %v310
    %v312 = vrcp.pop %v309
    %v313 = vmul.f32 1.0, %v312
    %v314 = vmul.f32 %v300, %v311
    %v315 = vmul.f32 %v301, %v313
    %v316 = vmul.f32 %v205, 1.442695
    %v317 = vpow.pop %v316
    %v318 = vsub.f32 0.0, %v317
    %v319 = vlaneseq
    %v320 = vshrl.u32 %v319, 7
    %v321 = vsub.s32 4, %v320
    %v322 = vrot.slane %v205, %v321
    %324 = vrot.lane.b32.xlu0 %v322, 126
    %v325 = vpop.permute.xlu0 %324
    %v327 = vadd.f32 %v197, %v325
    %v328 = vadd.f32 %v202, %v325
    %vm329 = vcmp.gt.f32.partialorder %v327, 20.0
    %vm330 = vcmp.gt.f32.partialorder %v328, 20.0
    %v331 = vmin.f32 %v327, 20.0
    %v332 = vmin.f32 %v328, 20.0
    %v333 = vmul.f32 %v331, 1.442695
    %v334 = vpow.pop %v333
    %v335 = vmul.f32 %v332, 1.442695
    %v336 = vpow.pop %v335
    %v337 = vadd.f32 %v334, 1.0
    %v338 = vlog2.pop %v337
    %v339 = vmul.f32 %v338, 0.6931472
    %v340 = vmul.f32 -0.5, %v334
    %v341 = vadd.f32 %v340, 1.0
    %v342 = vmul.f32 %v341, %v334
    %v343 = vand.u32 2147483647, %v334
    %vm344 = vcmp.lt.f32.partialorder %v343, 0.0004427343
    %v345 = vsel %vm344, %v342, %v339
    %v346 = vadd.f32 %v336, 1.0
    %v347 = vlog2.pop %v346
    %v348 = vmul.f32 %v347, 0.6931472
    %v349 = vmul.f32 -0.5, %v336
    %v350 = vadd.f32 %v349, 1.0
    %v351 = vmul.f32 %v350, %v336
    %v352 = vand.u32 2147483647, %v336
    %vm353 = vcmp.lt.f32.partialorder %v352, 0.0004427343
    %v354 = vsel %vm353, %v351, %v348
    %v355 = vsel %vm329, %v327, %v345
    %v356 = vsel %vm330, %v328, %v354
    %v357 = vlaneseq
    %v358 = vshrl.u32 %v357, 7
    %v359 = vsub.s32 4, %v358
    %v360 = vrot.slane %v318, %v359
    %v361 = vmul.f32 %v360, %v355
    %v362 = vmul.f32 %v360, %v356
    %v363 = vxor.u32 %v327, 2147483648
    %v364 = vxor.u32 %v328, 2147483648
    %v365 = vmul.f32 %v363, 1.442695
    %v366 = vpow.pop %v365
    %v367 = vmul.f32 %v364, 1.442695
    %v368 = vpow.pop %v367
    %v369 = vadd.f32 %v366, 1.0
    %v370 = vadd.f32 %v368, 1.0
    %v371 = vrcp.pop %v369
    %v372 = vmul.f32 1.0, %v371
    %v373 = vrcp.pop %v370
    %v374 = vmul.f32 1.0, %v373
    %v375 = vlaneseq
    %v376 = vand.u32 %v375, 127
    %vm377 = vcmp.ge.s32.totalorder %v207, %v376
    %v378 = vsel %vm377, 1, 0
    %v379 = vcvt.s32.f32 %v378
    %vm380 = vcmp.gt.s32.totalorder %v207, %v376
    %v381 = vsel %vm380, 1, 0
    %v382 = vcvt.s32.f32 %v381
    %vm383 = vcmask 64512
    %v385 = vsel %vm383, %v379, 0
    %387 = vmatprep.subr.mxu0 0.0
    %388 = vmatpush1.msra.mxu0 %v361
    %389 = vmatprep.subr.mxu0 0.0
    %390 = vmatpush1.msra.mxu0 0.0
    %391 = vmatprep.subr.mxu0 0.0
    %392 = vmatpush1.msra.mxu0 0.0
    %393 = vmatprep.subr.mxu0 0.0
    %394 = vmatpush1.msra.mxu0 0.0
    %395 = vmatprep.subr.mxu0 0.0
    %396 = vmatpush1.msra.mxu0 0.0
    %397 = vmatprep.subr.mxu0 0.0
    %398 = vmatpush1.msra.mxu0 0.0
    %399 = vmatprep.subr.mxu0 0.0
    %400 = vmatpush1.msra.mxu0 0.0
    %401 = vmatprep.subr.mxu0 0.0
    %402 = vmatpush1.msra.mxu0 0.0
    %403 = vmatprep.subr.mxu0 0.0
    %404 = vmatpush1.msra.mxu0 0.0
    %405 = vmatprep.subr.mxu0 0.0
    %406 = vmatpush1.msra.mxu0 0.0
    %407 = vmatprep.subr.mxu0 0.0
    %408 = vmatpush1.msra.mxu0 0.0
    %409 = vmatprep.subr.mxu0 0.0
    %410 = vmatpush1.msra.mxu0 0.0
    %411 = vmatprep.subr.mxu0 0.0
    %412 = vmatpush1.msra.mxu0 0.0
    %413 = vmatprep.subr.mxu0 0.0
    %414 = vmatpush1.msra.mxu0 0.0
    %415 = vmatprep.subr.mxu0 0.0
    %416 = vmatpush1.msra.mxu0 0.0
    %417 = vmatprep.subr.mxu0 0.0
    %418 = vmatpush1.msra.mxu0 0.0
    %419 = vmatprep.subr.mxu0 0.0
    %420 = vmatpush1.msra.mxu0 0.0
    %421 = vmatprep.subr.mxu0 0.0
    %422 = vmatpush1.msra.mxu0 0.0
    %423 = vmatprep.subr.mxu0 0.0
    %424 = vmatpush1.msra.mxu0 0.0
    %425 = vmatprep.subr.mxu0 0.0
    %426 = vmatpush1.msra.mxu0 0.0
    %427 = vmatprep.subr.mxu0 0.0
    %428 = vmatpush1.msra.mxu0 0.0
    %429 = vmatprep.subr.mxu0 0.0
    %430 = vmatpush1.msra.mxu0 0.0
    %431 = vmatprep.subr.mxu0 0.0
    %432 = vmatpush1.msra.mxu0 0.0
    %433 = vmatprep.subr.mxu0 0.0
    %434 = vmatpush1.msra.mxu0 0.0
    %435 = vmatprep.subr.mxu0 0.0
    %436 = vmatpush1.msra.mxu0 0.0
    %437 = vmatprep.subr.mxu0 0.0
    %438 = vmatpush1.msra.mxu0 0.0
    %439 = vmatprep.subr.mxu0 0.0
    %440 = vmatpush1.msra.mxu0 0.0
    %441 = vmatprep.subr.mxu0 0.0
    %442 = vmatpush1.msra.mxu0 0.0
    %443 = vmatprep.subr.mxu0 0.0
    %444 = vmatpush1.msra.mxu0 0.0
    %445 = vmatprep.subr.mxu0 0.0
    %446 = vmatpush1.msra.mxu0 0.0
    %447 = vmatprep.subr.mxu0 0.0
    %448 = vmatpush1.msra.mxu0 0.0
    %449 = vmatprep.subr.mxu0 0.0
    %450 = vmatpush1.msra.mxu0 0.0
    %451 = vmatprep.mubr.f32.mxu0 0.0
    %452 = vmatmul.mubr.f32.gmra.mrb[0].mxu0 %v385
    %v453 = vpop.f32.mrb[0].mxu0
    %v454 = vadd.f32 0.0, %v453
    %v455 = vpop.f32.mrb[0].mxu0
    %456 = vdwg.mxu0
    %v457 = vmul.f32 %v454, 1.442695
    %v458 = vpow.pop %v457
    %v459 = vsub.f32 0.0, %v454
    %v460 = vmul.f32 %v459, 1.442695
    %v461 = vpow.pop %v460
    %v462 = vmul.f32 %v314, %v314
    %vm463 = vcmask 97280
    %v464 = vsel %vm463, %v462, 0.0
    %465 = vadd.xlane.f32.xlu0 %v464
    %v466 = vpop.xlane.xlu0 %465
    %v467 = vadd.f32 %v466, 1e-06
    %v468 = vrsqrt.pop %v467
    %v469 = vmul.f32 %v314, %v468
    %v470 = vmul.f32 %v469, 0.28867513
    %472 = vrot.lane.b32.xlu0 %v462, 104
    %v473 = vpop.permute.xlu0 %472
    %v475 = vsel %vm463, %v473, 0.0
    %476 = vadd.xlane.f32.xlu0 %v475
    %v477 = vpop.xlane.xlu0 %476
    %v478 = vadd.f32 %v477, 1e-06
    %v479 = vrsqrt.pop %v478
    %v480 = vmul.f32 %v314, %v479
    %482 = vset.pattern.permute.xlu0 0
    %483 = vperm.xlu0 %482, %v458
    %v484 = vpop.permute.xlu0 %483
    %v486 = vmul.f32 %v470, %v484
    %488 = vset.pattern.permute.xlu0 0
    %489 = vperm.xlu0 %488, %v461
    %v490 = vpop.permute.xlu0 %489
    %v492 = vmul.f32 %v480, %v490
    %493 = vrot.lane.b32.xlu0 %v458, 2
    %v494 = vpop.permute.xlu0 %493
    %v496 = vmul.f32 %v372, %v494
    %498 = vset.pattern.permute.xlu0 2
    %499 = vperm.xlu0 %498, %v496
    %v500 = vpop.permute.xlu0 %499
    %v502 = vmul.f32 %v480, %v500
    %504 = vrot.lane.b32.xlu0 %v502, 104
    %v505 = vpop.permute.xlu0 %504
    %507 = vrot.lane.b32.xlu0 %v492, 104
    %v508 = vpop.permute.xlu0 %507
    %v509 = vsel %vm463, %v505, 0
    %v511 = vsel %vm463, %v508, 0
    %513 = vmatprep.subr.mxu0 0.0
    %514 = vmatpush1.xpose.msra.mxu0 %v511
    %515 = vmatprep.subr.mxu0 0.0
    %516 = vmatpush1.xpose.msra.mxu0 0.0
    %517 = vmatprep.subr.mxu0 0.0
    %518 = vmatpush1.xpose.msra.mxu0 0.0
    %519 = vmatprep.subr.mxu0 0.0
    %520 = vmatpush1.xpose.msra.mxu0 0.0
    %521 = vmatprep.subr.mxu0 0.0
    %522 = vmatpush1.xpose.msra.mxu0 0.0
    %523 = vmatprep.subr.mxu0 0.0
    %524 = vmatpush1.xpose.msra.mxu0 0.0
    %525 = vmatprep.subr.mxu0 0.0
    %526 = vmatpush1.xpose.msra.mxu0 0.0
    %527 = vmatprep.subr.mxu0 0.0
    %528 = vmatpush1.xpose.msra.mxu0 0.0
    %529 = vmatprep.subr.mxu0 0.0
    %530 = vmatpush1.xpose.msra.mxu0 0.0
    %531 = vmatprep.subr.mxu0 0.0
    %532 = vmatpush1.xpose.msra.mxu0 0.0
    %533 = vmatprep.subr.mxu0 0.0
    %534 = vmatpush1.xpose.msra.mxu0 0.0
    %535 = vmatprep.subr.mxu0 0.0
    %536 = vmatpush1.xpose.msra.mxu0 0.0
    %537 = vmatprep.subr.mxu0 0.0
    %538 = vmatpush1.xpose.msra.mxu0 0.0
    %539 = vmatprep.subr.mxu0 0.0
    %540 = vmatpush1.xpose.msra.mxu0 0.0
    %541 = vmatprep.subr.mxu0 0.0
    %542 = vmatpush1.xpose.msra.mxu0 0.0
    %543 = vmatprep.subr.mxu0 0.0
    %544 = vmatpush1.xpose.msra.mxu0 0.0
    %545 = vmatprep.subr.mxu0 0.0
    %546 = vmatpush1.xpose.msra.mxu0 0.0
    %547 = vmatprep.subr.mxu0 0.0
    %548 = vmatpush1.xpose.msra.mxu0 0.0
    %549 = vmatprep.subr.mxu0 0.0
    %550 = vmatpush1.xpose.msra.mxu0 0.0
    %551 = vmatprep.subr.mxu0 0.0
    %552 = vmatpush1.xpose.msra.mxu0 0.0
    %553 = vmatprep.subr.mxu0 0.0
    %554 = vmatpush1.xpose.msra.mxu0 0.0
    %555 = vmatprep.subr.mxu0 0.0
    %556 = vmatpush1.xpose.msra.mxu0 0.0
    %557 = vmatprep.subr.mxu0 0.0
    %558 = vmatpush1.xpose.msra.mxu0 0.0
    %559 = vmatprep.subr.mxu0 0.0
    %560 = vmatpush1.xpose.msra.mxu0 0.0
    %561 = vmatprep.subr.mxu0 0.0
    %562 = vmatpush1.xpose.msra.mxu0 0.0
    %563 = vmatprep.subr.mxu0 0.0
    %564 = vmatpush1.xpose.msra.mxu0 0.0
    %565 = vmatprep.subr.mxu0 0.0
    %566 = vmatpush1.xpose.msra.mxu0 0.0
    %567 = vmatprep.subr.mxu0 0.0
    %568 = vmatpush1.xpose.msra.mxu0 0.0
    %569 = vmatprep.subr.mxu0 0.0
    %570 = vmatpush1.xpose.msra.mxu0 0.0
    %571 = vmatprep.subr.mxu0 0.0
    %572 = vmatpush1.xpose.msra.mxu0 0.0
    %573 = vmatprep.subr.mxu0 0.0
    %574 = vmatpush1.xpose.msra.mxu0 0.0
    %575 = vmatprep.subr.mxu0 0.0
    %576 = vmatpush1.xpose.msra.mxu0 0.0
    %577 = vmatprep.mubr.f32.mxu0 0.0
    %578 = vmatmul.mubr.f32.gmra.mrb[0].mxu0 %v509
    %v579 = vpop.f32.mrb[0].mxu0
    %v580 = vadd.f32 0.0, %v579
    %v581 = vpop.f32.mrb[0].mxu0
    %582 = vdwg.mxu0
    %v583 = vmul.f32 %v382, %v580
    %v584 = vsub.f32 0.0, %v583
    %586 = vset.pattern.permute.xlu0 2
    %587 = vperm.xlu0 %586, %v372
    %v588 = vpop.permute.xlu0 %587
    %v590 = vmul.f32 %v314, %v588
    %592 = vrot.lane.b32.xlu0 %v590, 80
    %v593 = vpop.permute.xlu0 %592
    %v596 = vsel %vm383, %v584, 0
    %598 = vmatprep.subr.mxu0 0.0
    %599 = vmatpush1.msra.mxu0 %v593
    %600 = vmatprep.subr.mxu0 0.0
    %601 = vmatpush1.msra.mxu0 0.0
    %602 = vmatprep.subr.mxu0 0.0
    %603 = vmatpush1.msra.mxu0 0.0
    %604 = vmatprep.subr.mxu0 0.0
    %605 = vmatpush1.msra.mxu0 0.0
    %606 = vmatprep.subr.mxu0 0.0
    %607 = vmatpush1.msra.mxu0 0.0
    %608 = vmatprep.subr.mxu0 0.0
    %609 = vmatpush1.msra.mxu0 0.0
    %610 = vmatprep.subr.mxu0 0.0
    %611 = vmatpush1.msra.mxu0 0.0
    %612 = vmatprep.subr.mxu0 0.0
    %613 = vmatpush1.msra.mxu0 0.0
    %614 = vmatprep.subr.mxu0 0.0
    %615 = vmatpush1.msra.mxu0 0.0
    %616 = vmatprep.subr.mxu0 0.0
    %617 = vmatpush1.msra.mxu0 0.0
    %618 = vmatprep.subr.mxu0 0.0
    %619 = vmatpush1.msra.mxu0 0.0
    %620 = vmatprep.subr.mxu0 0.0
    %621 = vmatpush1.msra.mxu0 0.0
    %622 = vmatprep.subr.mxu0 0.0
    %623 = vmatpush1.msra.mxu0 0.0
    %624 = vmatprep.subr.mxu0 0.0
    %625 = vmatpush1.msra.mxu0 0.0
    %626 = vmatprep.subr.mxu0 0.0
    %627 = vmatpush1.msra.mxu0 0.0
    %628 = vmatprep.subr.mxu0 0.0
    %629 = vmatpush1.msra.mxu0 0.0
    %630 = vmatprep.subr.mxu0 0.0
    %631 = vmatpush1.msra.mxu0 0.0
    %632 = vmatprep.subr.mxu0 0.0
    %633 = vmatpush1.msra.mxu0 0.0
    %634 = vmatprep.subr.mxu0 0.0
    %635 = vmatpush1.msra.mxu0 0.0
    %636 = vmatprep.subr.mxu0 0.0
    %637 = vmatpush1.msra.mxu0 0.0
    %638 = vmatprep.subr.mxu0 0.0
    %639 = vmatpush1.msra.mxu0 0.0
    %640 = vmatprep.subr.mxu0 0.0
    %641 = vmatpush1.msra.mxu0 0.0
    %642 = vmatprep.subr.mxu0 0.0
    %643 = vmatpush1.msra.mxu0 0.0
    %644 = vmatprep.subr.mxu0 0.0
    %645 = vmatpush1.msra.mxu0 0.0
    %646 = vmatprep.subr.mxu0 0.0
    %647 = vmatpush1.msra.mxu0 0.0
    %648 = vmatprep.subr.mxu0 0.0
    %649 = vmatpush1.msra.mxu0 0.0
    %650 = vmatprep.subr.mxu0 0.0
    %651 = vmatpush1.msra.mxu0 0.0
    %652 = vmatprep.subr.mxu0 0.0
    %653 = vmatpush1.msra.mxu0 0.0
    %654 = vmatprep.subr.mxu0 0.0
    %655 = vmatpush1.msra.mxu0 0.0
    %656 = vmatprep.subr.mxu0 0.0
    %657 = vmatpush1.msra.mxu0 0.0
    %658 = vmatprep.subr.mxu0 0.0
    %659 = vmatpush1.msra.mxu0 0.0
    %660 = vmatprep.subr.mxu0 0.0
    %661 = vmatpush1.msra.mxu0 0.0
    %662 = vmatprep.mubr.f32.mxu0 0.0
    %663 = vmatmul.mubr.f32.gmra.mrb[0].mxu0 %v596
    %v664 = vpop.f32.mrb[0].mxu0
    %v665 = vadd.f32 0.0, %v664
    %v666 = vpop.f32.mrb[0].mxu0
    %667 = vdwg.mxu0
    %669 = vrot.lane.b32.xlu0 %v665, 48
    %v670 = vpop.permute.xlu0 %669
    %v672 = vadd.f32 %v590, %v670
    %673 = vmatprep.subr.mxu0 0.0
    %674 = vmatpush1.msra.mxu0 %v584
    %675 = vmatprep.subr.mxu0 0.0
    %676 = vmatpush1.msra.mxu0 0.0
    %677 = vmatprep.subr.mxu0 0.0
    %678 = vmatpush1.msra.mxu0 0.0
    %679 = vmatprep.subr.mxu0 0.0
    %680 = vmatpush1.msra.mxu0 0.0
    %681 = vmatprep.subr.mxu0 0.0
    %682 = vmatpush1.msra.mxu0 0.0
    %683 = vmatprep.subr.mxu0 0.0
    %684 = vmatpush1.msra.mxu0 0.0
    %685 = vmatprep.subr.mxu0 0.0
    %686 = vmatpush1.msra.mxu0 0.0
    %687 = vmatprep.subr.mxu0 0.0
    %688 = vmatpush1.msra.mxu0 0.0
    %689 = vmatprep.subr.mxu0 0.0
    %690 = vmatpush1.msra.mxu0 0.0
    %691 = vmatprep.subr.mxu0 0.0
    %692 = vmatpush1.msra.mxu0 0.0
    %693 = vmatprep.subr.mxu0 0.0
    %694 = vmatpush1.msra.mxu0 0.0
    %695 = vmatprep.subr.mxu0 0.0
    %696 = vmatpush1.msra.mxu0 0.0
    %697 = vmatprep.subr.mxu0 0.0
    %698 = vmatpush1.msra.mxu0 0.0
    %699 = vmatprep.subr.mxu0 0.0
    %700 = vmatpush1.msra.mxu0 0.0
    %701 = vmatprep.subr.mxu0 0.0
    %702 = vmatpush1.msra.mxu0 0.0
    %703 = vmatprep.subr.mxu0 0.0
    %704 = vmatpush1.msra.mxu0 0.0
    %705 = vmatprep.subr.mxu0 0.0
    %706 = vmatpush1.msra.mxu0 0.0
    %707 = vmatprep.subr.mxu0 0.0
    %708 = vmatpush1.msra.mxu0 0.0
    %709 = vmatprep.subr.mxu0 0.0
    %710 = vmatpush1.msra.mxu0 0.0
    %711 = vmatprep.subr.mxu0 0.0
    %712 = vmatpush1.msra.mxu0 0.0
    %713 = vmatprep.subr.mxu0 0.0
    %714 = vmatpush1.msra.mxu0 0.0
    %715 = vmatprep.subr.mxu0 0.0
    %716 = vmatpush1.msra.mxu0 0.0
    %717 = vmatprep.subr.mxu0 0.0
    %718 = vmatpush1.msra.mxu0 0.0
    %719 = vmatprep.subr.mxu0 0.0
    %720 = vmatpush1.msra.mxu0 0.0
    %721 = vmatprep.subr.mxu0 0.0
    %722 = vmatpush1.msra.mxu0 0.0
    %723 = vmatprep.subr.mxu0 0.0
    %724 = vmatpush1.msra.mxu0 0.0
    %725 = vmatprep.subr.mxu0 0.0
    %726 = vmatpush1.msra.mxu0 0.0
    %727 = vmatprep.subr.mxu0 0.0
    %728 = vmatpush1.msra.mxu0 0.0
    %729 = vmatprep.subr.mxu0 0.0
    %730 = vmatpush1.msra.mxu0 0.0
    %731 = vmatprep.subr.mxu0 0.0
    %732 = vmatpush1.msra.mxu0 0.0
    %733 = vmatprep.subr.mxu0 0.0
    %734 = vmatpush1.msra.mxu0 0.0
    %735 = vmatprep.subr.mxu0 0.0
    %736 = vmatpush1.msra.mxu0 0.0
    %737 = vmatprep.mubr.f32.mxu0 0.0
    %738 = vmatmul.mubr.f32.gmra.mrb[0].mxu0 %v596
    %v739 = vpop.f32.mrb[0].mxu0
    %v740 = vadd.f32 0.0, %v739
    %v741 = vpop.f32.mrb[0].mxu0
    %742 = vdwg.mxu0
    %744 = vrot.lane.b32.xlu0 %v672, 80
    %v745 = vpop.permute.xlu0 %744
    %v748 = vsel %vm383, %v740, 0
    %750 = vmatprep.subr.mxu0 0.0
    %751 = vmatpush1.msra.mxu0 %v745
    %752 = vmatprep.subr.mxu0 0.0
    %753 = vmatpush1.msra.mxu0 0.0
    %754 = vmatprep.subr.mxu0 0.0
    %755 = vmatpush1.msra.mxu0 0.0
    %756 = vmatprep.subr.mxu0 0.0
    %757 = vmatpush1.msra.mxu0 0.0
    %758 = vmatprep.subr.mxu0 0.0
    %759 = vmatpush1.msra.mxu0 0.0
    %760 = vmatprep.subr.mxu0 0.0
    %761 = vmatpush1.msra.mxu0 0.0
    %762 = vmatprep.subr.mxu0 0.0
    %763 = vmatpush1.msra.mxu0 0.0
    %764 = vmatprep.subr.mxu0 0.0
    %765 = vmatpush1.msra.mxu0 0.0
    %766 = vmatprep.subr.mxu0 0.0
    %767 = vmatpush1.msra.mxu0 0.0
    %768 = vmatprep.subr.mxu0 0.0
    %769 = vmatpush1.msra.mxu0 0.0
    %770 = vmatprep.subr.mxu0 0.0
    %771 = vmatpush1.msra.mxu0 0.0
    %772 = vmatprep.subr.mxu0 0.0
    %773 = vmatpush1.msra.mxu0 0.0
    %774 = vmatprep.subr.mxu0 0.0
    %775 = vmatpush1.msra.mxu0 0.0
    %776 = vmatprep.subr.mxu0 0.0
    %777 = vmatpush1.msra.mxu0 0.0
    %778 = vmatprep.subr.mxu0 0.0
    %779 = vmatpush1.msra.mxu0 0.0
    %780 = vmatprep.subr.mxu0 0.0
    %781 = vmatpush1.msra.mxu0 0.0
    %782 = vmatprep.subr.mxu0 0.0
    %783 = vmatpush1.msra.mxu0 0.0
    %784 = vmatprep.subr.mxu0 0.0
    %785 = vmatpush1.msra.mxu0 0.0
    %786 = vmatprep.subr.mxu0 0.0
    %787 = vmatpush1.msra.mxu0 0.0
    %788 = vmatprep.subr.mxu0 0.0
    %789 = vmatpush1.msra.mxu0 0.0
    %790 = vmatprep.subr.mxu0 0.0
    %791 = vmatpush1.msra.mxu0 0.0
    %792 = vmatprep.subr.mxu0 0.0
    %793 = vmatpush1.msra.mxu0 0.0
    %794 = vmatprep.subr.mxu0 0.0
    %795 = vmatpush1.msra.mxu0 0.0
    %796 = vmatprep.subr.mxu0 0.0
    %797 = vmatpush1.msra.mxu0 0.0
    %798 = vmatprep.subr.mxu0 0.0
    %799 = vmatpush1.msra.mxu0 0.0
    %800 = vmatprep.subr.mxu0 0.0
    %801 = vmatpush1.msra.mxu0 0.0
    %802 = vmatprep.subr.mxu0 0.0
    %803 = vmatpush1.msra.mxu0 0.0
    %804 = vmatprep.subr.mxu0 0.0
    %805 = vmatpush1.msra.mxu0 0.0
    %806 = vmatprep.subr.mxu0 0.0
    %807 = vmatpush1.msra.mxu0 0.0
    %808 = vmatprep.subr.mxu0 0.0
    %809 = vmatpush1.msra.mxu0 0.0
    %810 = vmatprep.subr.mxu0 0.0
    %811 = vmatpush1.msra.mxu0 0.0
    %812 = vmatprep.subr.mxu0 0.0
    %813 = vmatpush1.msra.mxu0 0.0
    %814 = vmatprep.mubr.f32.mxu0 0.0
    %815 = vmatmul.mubr.f32.gmra.mrb[0].mxu0 %v748
    %v816 = vpop.f32.mrb[0].mxu0
    %v817 = vadd.f32 0.0, %v816
    %v818 = vpop.f32.mrb[0].mxu0
    %819 = vdwg.mxu0
    %821 = vrot.lane.b32.xlu0 %v817, 48
    %v822 = vpop.permute.xlu0 %821
    %v824 = vadd.f32 %v672, %v822
    %825 = vmatprep.subr.mxu0 0.0
    %826 = vmatpush1.msra.mxu0 %v740
    %827 = vmatprep.subr.mxu0 0.0
    %828 = vmatpush1.msra.mxu0 0.0
    %829 = vmatprep.subr.mxu0 0.0
    %830 = vmatpush1.msra.mxu0 0.0
    %831 = vmatprep.subr.mxu0 0.0
    %832 = vmatpush1.msra.mxu0 0.0
    %833 = vmatprep.subr.mxu0 0.0
    %834 = vmatpush1.msra.mxu0 0.0
    %835 = vmatprep.subr.mxu0 0.0
    %836 = vmatpush1.msra.mxu0 0.0
    %837 = vmatprep.subr.mxu0 0.0
    %838 = vmatpush1.msra.mxu0 0.0
    %839 = vmatprep.subr.mxu0 0.0
    %840 = vmatpush1.msra.mxu0 0.0
    %841 = vmatprep.subr.mxu0 0.0
    %842 = vmatpush1.msra.mxu0 0.0
    %843 = vmatprep.subr.mxu0 0.0
    %844 = vmatpush1.msra.mxu0 0.0
    %845 = vmatprep.subr.mxu0 0.0
    %846 = vmatpush1.msra.mxu0 0.0
    %847 = vmatprep.subr.mxu0 0.0
    %848 = vmatpush1.msra.mxu0 0.0
    %849 = vmatprep.subr.mxu0 0.0
    %850 = vmatpush1.msra.mxu0 0.0
    %851 = vmatprep.subr.mxu0 0.0
    %852 = vmatpush1.msra.mxu0 0.0
    %853 = vmatprep.subr.mxu0 0.0
    %854 = vmatpush1.msra.mxu0 0.0
    %855 = vmatprep.subr.mxu0 0.0
    %856 = vmatpush1.msra.mxu0 0.0
    %857 = vmatprep.subr.mxu0 0.0
    %858 = vmatpush1.msra.mxu0 0.0
    %859 = vmatprep.subr.mxu0 0.0
    %860 = vmatpush1.msra.mxu0 0.0
    %861 = vmatprep.subr.mxu0 0.0
    %862 = vmatpush1.msra.mxu0 0.0
    %863 = vmatprep.subr.mxu0 0.0
    %864 = vmatpush1.msra.mxu0 0.0
    %865 = vmatprep.subr.mxu0 0.0
    %866 = vmatpush1.msra.mxu0 0.0
    %867 = vmatprep.subr.mxu0 0.0
    %868 = vmatpush1.msra.mxu0 0.0
    %869 = vmatprep.subr.mxu0 0.0
    %870 = vmatpush1.msra.mxu0 0.0
    %871 = vmatprep.subr.mxu0 0.0
    %872 = vmatpush1.msra.mxu0 0.0
    %873 = vmatprep.subr.mxu0 0.0
    %874 = vmatpush1.msra.mxu0 0.0
    %875 = vmatprep.subr.mxu0 0.0
    %876 = vmatpush1.msra.mxu0 0.0
    %877 = vmatprep.subr.mxu0 0.0
    %878 = vmatpush1.msra.mxu0 0.0
    %879 = vmatprep.subr.mxu0 0.0
    %880 = vmatpush1.msra.mxu0 0.0
    %881 = vmatprep.subr.mxu0 0.0
    %882 = vmatpush1.msra.mxu0 0.0
    %883 = vmatprep.subr.mxu0 0.0
    %884 = vmatpush1.msra.mxu0 0.0
    %885 = vmatprep.subr.mxu0 0.0
    %886 = vmatpush1.msra.mxu0 0.0
    %887 = vmatprep.subr.mxu0 0.0
    %888 = vmatpush1.msra.mxu0 0.0
    %889 = vmatprep.mubr.f32.mxu0 0.0
    %890 = vmatmul.mubr.f32.gmra.mrb[0].mxu0 %v748
    %v891 = vpop.f32.mrb[0].mxu0
    %v892 = vadd.f32 0.0, %v891
    %v893 = vpop.f32.mrb[0].mxu0
    %894 = vdwg.mxu0
    %896 = vrot.lane.b32.xlu0 %v824, 80
    %v897 = vpop.permute.xlu0 %896
    %v900 = vsel %vm383, %v892, 0
    %902 = vmatprep.subr.mxu0 0.0
    %903 = vmatpush1.msra.mxu0 %v897
    %904 = vmatprep.subr.mxu0 0.0
    %905 = vmatpush1.msra.mxu0 0.0
    %906 = vmatprep.subr.mxu0 0.0
    %907 = vmatpush1.msra.mxu0 0.0
    %908 = vmatprep.subr.mxu0 0.0
    %909 = vmatpush1.msra.mxu0 0.0
    %910 = vmatprep.subr.mxu0 0.0
    %911 = vmatpush1.msra.mxu0 0.0
    %912 = vmatprep.subr.mxu0 0.0
    %913 = vmatpush1.msra.mxu0 0.0
    %914 = vmatprep.subr.mxu0 0.0
    %915 = vmatpush1.msra.mxu0 0.0
    %916 = vmatprep.subr.mxu0 0.0
    %917 = vmatpush1.msra.mxu0 0.0
    %918 = vmatprep.subr.mxu0 0.0
    %919 = vmatpush1.msra.mxu0 0.0
    %920 = vmatprep.subr.mxu0 0.0
    %921 = vmatpush1.msra.mxu0 0.0
    %922 = vmatprep.subr.mxu0 0.0
    %923 = vmatpush1.msra.mxu0 0.0
    %924 = vmatprep.subr.mxu0 0.0
    %925 = vmatpush1.msra.mxu0 0.0
    %926 = vmatprep.subr.mxu0 0.0
    %927 = vmatpush1.msra.mxu0 0.0
    %928 = vmatprep.subr.mxu0 0.0
    %929 = vmatpush1.msra.mxu0 0.0
    %930 = vmatprep.subr.mxu0 0.0
    %931 = vmatpush1.msra.mxu0 0.0
    %932 = vmatprep.subr.mxu0 0.0
    %933 = vmatpush1.msra.mxu0 0.0
    %934 = vmatprep.subr.mxu0 0.0
    %935 = vmatpush1.msra.mxu0 0.0
    %936 = vmatprep.subr.mxu0 0.0
    %937 = vmatpush1.msra.mxu0 0.0
    %938 = vmatprep.subr.mxu0 0.0
    %939 = vmatpush1.msra.mxu0 0.0
    %940 = vmatprep.subr.mxu0 0.0
    %941 = vmatpush1.msra.mxu0 0.0
    %942 = vmatprep.subr.mxu0 0.0
    %943 = vmatpush1.msra.mxu0 0.0
    %944 = vmatprep.subr.mxu0 0.0
    %945 = vmatpush1.msra.mxu0 0.0
    %946 = vmatprep.subr.mxu0 0.0
    %947 = vmatpush1.msra.mxu0 0.0
    %948 = vmatprep.subr.mxu0 0.0
    %949 = vmatpush1.msra.mxu0 0.0
    %950 = vmatprep.subr.mxu0 0.0
    %951 = vmatpush1.msra.mxu0 0.0
    %952 = vmatprep.subr.mxu0 0.0
    %953 = vmatpush1.msra.mxu0 0.0
    %954 = vmatprep.subr.mxu0 0.0
    %955 = vmatpush1.msra.mxu0 0.0
    %956 = vmatprep.subr.mxu0 0.0
    %957 = vmatpush1.msra.mxu0 0.0
    %958 = vmatprep.subr.mxu0 0.0
    %959 = vmatpush1.msra.mxu0 0.0
    %960 = vmatprep.subr.mxu0 0.0
    %961 = vmatpush1.msra.mxu0 0.0
    %962 = vmatprep.subr.mxu0 0.0
    %963 = vmatpush1.msra.mxu0 0.0
    %964 = vmatprep.subr.mxu0 0.0
    %965 = vmatpush1.msra.mxu0 0.0
    %966 = vmatprep.mubr.f32.mxu0 0.0
    %967 = vmatmul.mubr.f32.gmra.mrb[0].mxu0 %v900
    %v968 = vpop.f32.mrb[0].mxu0
    %v969 = vadd.f32 0.0, %v968
    %v970 = vpop.f32.mrb[0].mxu0
    %971 = vdwg.mxu0
    %973 = vrot.lane.b32.xlu0 %v969, 48
    %v974 = vpop.permute.xlu0 %973
    %v976 = vadd.f32 %v824, %v974
    %v978 = vsel %vm463, %v486, 0
    %980 = vmatprep.subr.mxu0 0.0
    %981 = vmatpush1.xpose.msra.mxu0 %v511
    %982 = vmatprep.subr.mxu0 0.0
    %983 = vmatpush1.xpose.msra.mxu0 0.0
    %984 = vmatprep.subr.mxu0 0.0
    %985 = vmatpush1.xpose.msra.mxu0 0.0
    %986 = vmatprep.subr.mxu0 0.0
    %987 = vmatpush1.xpose.msra.mxu0 0.0
    %988 = vmatprep.subr.mxu0 0.0
    %989 = vmatpush1.xpose.msra.mxu0 0.0
    %990 = vmatprep.subr.mxu0 0.0
    %991 = vmatpush1.xpose.msra.mxu0 0.0
    %992 = vmatprep.subr.mxu0 0.0
    %993 = vmatpush1.xpose.msra.mxu0 0.0
    %994 = vmatprep.subr.mxu0 0.0
    %995 = vmatpush1.xpose.msra.mxu0 0.0
    %996 = vmatprep.subr.mxu0 0.0
    %997 = vmatpush1.xpose.msra.mxu0 0.0
    %998 = vmatprep.subr.mxu0 0.0
    %999 = vmatpush1.xpose.msra.mxu0 0.0
    %1000 = vmatprep.subr.mxu0 0.0
    %1001 = vmatpush1.xpose.msra.mxu0 0.0
    %1002 = vmatprep.subr.mxu0 0.0
    %1003 = vmatpush1.xpose.msra.mxu0 0.0
    %1004 = vmatprep.subr.mxu0 0.0
    %1005 = vmatpush1.xpose.msra.mxu0 0.0
    %1006 = vmatprep.subr.mxu0 0.0
    %1007 = vmatpush1.xpose.msra.mxu0 0.0
    %1008 = vmatprep.subr.mxu0 0.0
    %1009 = vmatpush1.xpose.msra.mxu0 0.0
    %1010 = vmatprep.subr.mxu0 0.0
    %1011 = vmatpush1.xpose.msra.mxu0 0.0
    %1012 = vmatprep.subr.mxu0 0.0
    %1013 = vmatpush1.xpose.msra.mxu0 0.0
    %1014 = vmatprep.subr.mxu0 0.0
    %1015 = vmatpush1.xpose.msra.mxu0 0.0
    %1016 = vmatprep.subr.mxu0 0.0
    %1017 = vmatpush1.xpose.msra.mxu0 0.0
    %1018 = vmatprep.subr.mxu0 0.0
    %1019 = vmatpush1.xpose.msra.mxu0 0.0
    %1020 = vmatprep.subr.mxu0 0.0
    %1021 = vmatpush1.xpose.msra.mxu0 0.0
    %1022 = vmatprep.subr.mxu0 0.0
    %1023 = vmatpush1.xpose.msra.mxu0 0.0
    %1024 = vmatprep.subr.mxu0 0.0
    %1025 = vmatpush1.xpose.msra.mxu0 0.0
    %1026 = vmatprep.subr.mxu0 0.0
    %1027 = vmatpush1.xpose.msra.mxu0 0.0
    %1028 = vmatprep.subr.mxu0 0.0
    %1029 = vmatpush1.xpose.msra.mxu0 0.0
    %1030 = vmatprep.subr.mxu0 0.0
    %1031 = vmatpush1.xpose.msra.mxu0 0.0
    %1032 = vmatprep.subr.mxu0 0.0
    %1033 = vmatpush1.xpose.msra.mxu0 0.0
    %1034 = vmatprep.subr.mxu0 0.0
    %1035 = vmatpush1.xpose.msra.mxu0 0.0
    %1036 = vmatprep.subr.mxu0 0.0
    %1037 = vmatpush1.xpose.msra.mxu0 0.0
    %1038 = vmatprep.subr.mxu0 0.0
    %1039 = vmatpush1.xpose.msra.mxu0 0.0
    %1040 = vmatprep.subr.mxu0 0.0
    %1041 = vmatpush1.xpose.msra.mxu0 0.0
    %1042 = vmatprep.subr.mxu0 0.0
    %1043 = vmatpush1.xpose.msra.mxu0 0.0
    %1044 = vmatprep.mubr.f32.mxu0 0.0
    %1045 = vmatmul.mubr.f32.gmra.mrb[0].mxu0 %v978
    %v1046 = vpop.f32.mrb[0].mxu0
    %v1047 = vadd.f32 0.0, %v1046
    %v1048 = vpop.f32.mrb[0].mxu0
    %1049 = vdwg.mxu0
    %v1050 = vmul.f32 %v379, %v1047
    %1052 = vrot.lane.b32.xlu0 %v976, 80
    %v1053 = vpop.permute.xlu0 %1052
    %v1056 = vsel %vm383, %v1050, 0
    %1058 = vmatprep.subr.mxu0 0.0
    %1059 = vmatpush1.msra.mxu0 %v1053
    %1060 = vmatprep.subr.mxu0 0.0
    %1061 = vmatpush1.msra.mxu0 0.0
    %1062 = vmatprep.subr.mxu0 0.0
    %1063 = vmatpush1.msra.mxu0 0.0
    %1064 = vmatprep.subr.mxu0 0.0
    %1065 = vmatpush1.msra.mxu0 0.0
    %1066 = vmatprep.subr.mxu0 0.0
    %1067 = vmatpush1.msra.mxu0 0.0
    %1068 = vmatprep.subr.mxu0 0.0
    %1069 = vmatpush1.msra.mxu0 0.0
    %1070 = vmatprep.subr.mxu0 0.0
    %1071 = vmatpush1.msra.mxu0 0.0
    %1072 = vmatprep.subr.mxu0 0.0
    %1073 = vmatpush1.msra.mxu0 0.0
    %1074 = vmatprep.subr.mxu0 0.0
    %1075 = vmatpush1.msra.mxu0 0.0
    %1076 = vmatprep.subr.mxu0 0.0
    %1077 = vmatpush1.msra.mxu0 0.0
    %1078 = vmatprep.subr.mxu0 0.0
    %1079 = vmatpush1.msra.mxu0 0.0
    %1080 = vmatprep.subr.mxu0 0.0
    %1081 = vmatpush1.msra.mxu0 0.0
    %1082 = vmatprep.subr.mxu0 0.0
    %1083 = vmatpush1.msra.mxu0 0.0
    %1084 = vmatprep.subr.mxu0 0.0
    %1085 = vmatpush1.msra.mxu0 0.0
    %1086 = vmatprep.subr.mxu0 0.0
    %1087 = vmatpush1.msra.mxu0 0.0
    %1088 = vmatprep.subr.mxu0 0.0
    %1089 = vmatpush1.msra.mxu0 0.0
    %1090 = vmatprep.subr.mxu0 0.0
    %1091 = vmatpush1.msra.mxu0 0.0
    %1092 = vmatprep.subr.mxu0 0.0
    %1093 = vmatpush1.msra.mxu0 0.0
    %1094 = vmatprep.subr.mxu0 0.0
    %1095 = vmatpush1.msra.mxu0 0.0
    %1096 = vmatprep.subr.mxu0 0.0
    %1097 = vmatpush1.msra.mxu0 0.0
    %1098 = vmatprep.subr.mxu0 0.0
    %1099 = vmatpush1.msra.mxu0 0.0
    %1100 = vmatprep.subr.mxu0 0.0
    %1101 = vmatpush1.msra.mxu0 0.0
    %1102 = vmatprep.subr.mxu0 0.0
    %1103 = vmatpush1.msra.mxu0 0.0
    %1104 = vmatprep.subr.mxu0 0.0
    %1105 = vmatpush1.msra.mxu0 0.0
    %1106 = vmatprep.subr.mxu0 0.0
    %1107 = vmatpush1.msra.mxu0 0.0
    %1108 = vmatprep.subr.mxu0 0.0
    %1109 = vmatpush1.msra.mxu0 0.0
    %1110 = vmatprep.subr.mxu0 0.0
    %1111 = vmatpush1.msra.mxu0 0.0
    %1112 = vmatprep.subr.mxu0 0.0
    %1113 = vmatpush1.msra.mxu0 0.0
    %1114 = vmatprep.subr.mxu0 0.0
    %1115 = vmatpush1.msra.mxu0 0.0
    %1116 = vmatprep.subr.mxu0 0.0
    %1117 = vmatpush1.msra.mxu0 0.0
    %1118 = vmatprep.subr.mxu0 0.0
    %1119 = vmatpush1.msra.mxu0 0.0
    %1120 = vmatprep.subr.mxu0 0.0
    %1121 = vmatpush1.msra.mxu0 0.0
    %1122 = vmatprep.mubr.f32.mxu0 0.0
    %1123 = vmatmul.mubr.f32.gmra.mrb[0].mxu0 %v1056
    %v1124 = vpop.f32.mrb[0].mxu0
    %v1125 = vadd.f32 0.0, %v1124
    %v1126 = vpop.f32.mrb[0].mxu0
    %1127 = vdwg.mxu0
    %v1128 = vmul.f32 %v1125, %v1125
    %vm1129 = vcmask 195584
    %v1130 = vsel %vm1129, %v1128, 0.0
    %1131 = vadd.xlane.f32.xlu0 %v1130
    %v1132 = vpop.xlane.xlu0 %1131
    %v1133 = vrcp.pop 24.0
    %v1134 = vmul.f32 %v1132, %v1133
    %v1135 = vadd.f32 %v1134, 1e-05
    %v1136 = vrsqrt.pop %v1135
    %v1137 = vmul.f32 %v1125, %v1136
    %v1138 = vlaneseq
    %v1139 = vshrl.u32 %v1138, 7
    %v1140 = vsub.s32 5, %v1139
    %v1141 = vrot.slane %v205, %v1140
    %v1142 = vmul.f32 %v1137, %v1141
    %v1143 = vmul.f32 %v1142, %v122
    %v1144 = vxor.u32 %v122, 2147483648
    %v1145 = vmul.f32 %v1144, 1.442695
    %v1146 = vpow.pop %v1145
    %v1147 = vadd.f32 %v1146, 1.0
    %v1148 = vrcp.pop %v1147
    %v1149 = vmul.f32 1.0, %v1148
    %v1150 = vmul.f32 %v1143, %v1149
    %1151 = vrot.lane.b32.xlu0 %v462, 116
    %v1152 = vpop.permute.xlu0 %1151
    %v1154 = vsel %vm463, %v1152, 0.0
    %1155 = vadd.xlane.f32.xlu0 %v1154
    %v1156 = vpop.xlane.xlu0 %1155
    %v1157 = vadd.f32 %v1156, 1e-06
    %v1158 = vrsqrt.pop %v1157
    %v1159 = vmul.f32 %v314, %v1158
    %v1160 = vmul.f32 %v1159, 0.28867513
    %1161 = vrot.lane.b32.xlu0 %v462, 92
    %v1162 = vpop.permute.xlu0 %1161
    %v1164 = vsel %vm463, %v1162, 0.0
    %1165 = vadd.xlane.f32.xlu0 %v1164
    %v1166 = vpop.xlane.xlu0 %1165
    %v1167 = vadd.f32 %v1166, 1e-06
    %v1168 = vrsqrt.pop %v1167
    %v1169 = vmul.f32 %v314, %v1168
    %1170 = vset.pattern.permute.xlu0 1
    %1171 = vperm.xlu0 %1170, %v458
    %v1172 = vpop.permute.xlu0 %1171
    %v1174 = vmul.f32 %v1160, %v1172
    %1175 = vset.pattern.permute.xlu0 1
    %1176 = vperm.xlu0 %1175, %v461
    %v1177 = vpop.permute.xlu0 %1176
    %v1179 = vmul.f32 %v1169, %v1177
    %1180 = vset.pattern.permute.xlu0 3
    %1181 = vperm.xlu0 %1180, %v496
    %v1182 = vpop.permute.xlu0 %1181
    %v1184 = vmul.f32 %v1169, %v1182
    %1186 = vrot.lane.b32.xlu0 %v1184, 92
    %v1187 = vpop.permute.xlu0 %1186
    %1189 = vrot.lane.b32.xlu0 %v1179, 92
    %v1190 = vpop.permute.xlu0 %1189
    %v1191 = vsel %vm463, %v1187, 0
    %v1193 = vsel %vm463, %v1190, 0
    %1195 = vmatprep.subr.mxu0 0.0
    %1196 = vmatpush1.xpose.msra.mxu0 %v1193
    %1197 = vmatprep.subr.mxu0 0.0
    %1198 = vmatpush1.xpose.msra.mxu0 0.0
    %1199 = vmatprep.subr.mxu0 0.0
    %1200 = vmatpush1.xpose.msra.mxu0 0.0
    %1201 = vmatprep.subr.mxu0 0.0
    %1202 = vmatpush1.xpose.msra.mxu0 0.0
    %1203 = vmatprep.subr.mxu0 0.0
    %1204 = vmatpush1.xpose.msra.mxu0 0.0
    %1205 = vmatprep.subr.mxu0 0.0
    %1206 = vmatpush1.xpose.msra.mxu0 0.0
    %1207 = vmatprep.subr.mxu0 0.0
    %1208 = vmatpush1.xpose.msra.mxu0 0.0
    %1209 = vmatprep.subr.mxu0 0.0
    %1210 = vmatpush1.xpose.msra.mxu0 0.0
    %1211 = vmatprep.subr.mxu0 0.0
    %1212 = vmatpush1.xpose.msra.mxu0 0.0
    %1213 = vmatprep.subr.mxu0 0.0
    %1214 = vmatpush1.xpose.msra.mxu0 0.0
    %1215 = vmatprep.subr.mxu0 0.0
    %1216 = vmatpush1.xpose.msra.mxu0 0.0
    %1217 = vmatprep.subr.mxu0 0.0
    %1218 = vmatpush1.xpose.msra.mxu0 0.0
    %1219 = vmatprep.subr.mxu0 0.0
    %1220 = vmatpush1.xpose.msra.mxu0 0.0
    %1221 = vmatprep.subr.mxu0 0.0
    %1222 = vmatpush1.xpose.msra.mxu0 0.0
    %1223 = vmatprep.subr.mxu0 0.0
    %1224 = vmatpush1.xpose.msra.mxu0 0.0
    %1225 = vmatprep.subr.mxu0 0.0
    %1226 = vmatpush1.xpose.msra.mxu0 0.0
    %1227 = vmatprep.subr.mxu0 0.0
    %1228 = vmatpush1.xpose.msra.mxu0 0.0
    %1229 = vmatprep.subr.mxu0 0.0
    %1230 = vmatpush1.xpose.msra.mxu0 0.0
    %1231 = vmatprep.subr.mxu0 0.0
    %1232 = vmatpush1.xpose.msra.mxu0 0.0
    %1233 = vmatprep.subr.mxu0 0.0
    %1234 = vmatpush1.xpose.msra.mxu0 0.0
    %1235 = vmatprep.subr.mxu0 0.0
    %1236 = vmatpush1.xpose.msra.mxu0 0.0
    %1237 = vmatprep.subr.mxu0 0.0
    %1238 = vmatpush1.xpose.msra.mxu0 0.0
    %1239 = vmatprep.subr.mxu0 0.0
    %1240 = vmatpush1.xpose.msra.mxu0 0.0
    %1241 = vmatprep.subr.mxu0 0.0
    %1242 = vmatpush1.xpose.msra.mxu0 0.0
    %1243 = vmatprep.subr.mxu0 0.0
    %1244 = vmatpush1.xpose.msra.mxu0 0.0
    %1245 = vmatprep.subr.mxu0 0.0
    %1246 = vmatpush1.xpose.msra.mxu0 0.0
    %1247 = vmatprep.subr.mxu0 0.0
    %1248 = vmatpush1.xpose.msra.mxu0 0.0
    %1249 = vmatprep.subr.mxu0 0.0
    %1250 = vmatpush1.xpose.msra.mxu0 0.0
    %1251 = vmatprep.subr.mxu0 0.0
    %1252 = vmatpush1.xpose.msra.mxu0 0.0
    %1253 = vmatprep.subr.mxu0 0.0
    %1254 = vmatpush1.xpose.msra.mxu0 0.0
    %1255 = vmatprep.subr.mxu0 0.0
    %1256 = vmatpush1.xpose.msra.mxu0 0.0
    %1257 = vmatprep.subr.mxu0 0.0
    %1258 = vmatpush1.xpose.msra.mxu0 0.0
    %1259 = vmatprep.mubr.f32.mxu0 0.0
    %1260 = vmatmul.mubr.f32.gmra.mrb[0].mxu0 %v1191
    %v1261 = vpop.f32.mrb[0].mxu0
    %v1262 = vadd.f32 0.0, %v1261
    %v1263 = vpop.f32.mrb[0].mxu0
    %1264 = vdwg.mxu0
    %v1265 = vmul.f32 %v382, %v1262
    %v1266 = vsub.f32 0.0, %v1265
    %1267 = vset.pattern.permute.xlu0 3
    %1268 = vperm.xlu0 %1267, %v372
    %v1269 = vpop.permute.xlu0 %1268
    %v1271 = vmul.f32 %v314, %v1269
    %1273 = vrot.lane.b32.xlu0 %v1271, 56
    %v1274 = vpop.permute.xlu0 %1273
    %v1277 = vsel %vm383, %v1266, 0
    %1279 = vmatprep.subr.mxu0 0.0
    %1280 = vmatpush1.msra.mxu0 %v1274
    %1281 = vmatprep.subr.mxu0 0.0
    %1282 = vmatpush1.msra.mxu0 0.0
    %1283 = vmatprep.subr.mxu0 0.0
    %1284 = vmatpush1.msra.mxu0 0.0
    %1285 = vmatprep.subr.mxu0 0.0
    %1286 = vmatpush1.msra.mxu0 0.0
    %1287 = vmatprep.subr.mxu0 0.0
    %1288 = vmatpush1.msra.mxu0 0.0
    %1289 = vmatprep.subr.mxu0 0.0
    %1290 = vmatpush1.msra.mxu0 0.0
    %1291 = vmatprep.subr.mxu0 0.0
    %1292 = vmatpush1.msra.mxu0 0.0
    %1293 = vmatprep.subr.mxu0 0.0
    %1294 = vmatpush1.msra.mxu0 0.0
    %1295 = vmatprep.subr.mxu0 0.0
    %1296 = vmatpush1.msra.mxu0 0.0
    %1297 = vmatprep.subr.mxu0 0.0
    %1298 = vmatpush1.msra.mxu0 0.0
    %1299 = vmatprep.subr.mxu0 0.0
    %1300 = vmatpush1.msra.mxu0 0.0
    %1301 = vmatprep.subr.mxu0 0.0
    %1302 = vmatpush1.msra.mxu0 0.0
    %1303 = vmatprep.subr.mxu0 0.0
    %1304 = vmatpush1.msra.mxu0 0.0
    %1305 = vmatprep.subr.mxu0 0.0
    %1306 = vmatpush1.msra.mxu0 0.0
    %1307 = vmatprep.subr.mxu0 0.0
    %1308 = vmatpush1.msra.mxu0 0.0
    %1309 = vmatprep.subr.mxu0 0.0
    %1310 = vmatpush1.msra.mxu0 0.0
    %1311 = vmatprep.subr.mxu0 0.0
    %1312 = vmatpush1.msra.mxu0 0.0
    %1313 = vmatprep.subr.mxu0 0.0
    %1314 = vmatpush1.msra.mxu0 0.0
    %1315 = vmatprep.subr.mxu0 0.0
    %1316 = vmatpush1.msra.mxu0 0.0
    %1317 = vmatprep.subr.mxu0 0.0
    %1318 = vmatpush1.msra.mxu0 0.0
    %1319 = vmatprep.subr.mxu0 0.0
    %1320 = vmatpush1.msra.mxu0 0.0
    %1321 = vmatprep.subr.mxu0 0.0
    %1322 = vmatpush1.msra.mxu0 0.0
    %1323 = vmatprep.subr.mxu0 0.0
    %1324 = vmatpush1.msra.mxu0 0.0
    %1325 = vmatprep.subr.mxu0 0.0
    %1326 = vmatpush1.msra.mxu0 0.0
    %1327 = vmatprep.subr.mxu0 0.0
    %1328 = vmatpush1.msra.mxu0 0.0
    %1329 = vmatprep.subr.mxu0 0.0
    %1330 = vmatpush1.msra.mxu0 0.0
    %1331 = vmatprep.subr.mxu0 0.0
    %1332 = vmatpush1.msra.mxu0 0.0
    %1333 = vmatprep.subr.mxu0 0.0
    %1334 = vmatpush1.msra.mxu0 0.0
    %1335 = vmatprep.subr.mxu0 0.0
    %1336 = vmatpush1.msra.mxu0 0.0
    %1337 = vmatprep.subr.mxu0 0.0
    %1338 = vmatpush1.msra.mxu0 0.0
    %1339 = vmatprep.subr.mxu0 0.0
    %1340 = vmatpush1.msra.mxu0 0.0
    %1341 = vmatprep.subr.mxu0 0.0
    %1342 = vmatpush1.msra.mxu0 0.0
    %1343 = vmatprep.mubr.f32.mxu0 0.0
    %1344 = vmatmul.mubr.f32.gmra.mrb[0].mxu0 %v1277
    %v1345 = vpop.f32.mrb[0].mxu0
    %v1346 = vadd.f32 0.0, %v1345
    %v1347 = vpop.f32.mrb[0].mxu0
    %1348 = vdwg.mxu0
    %1350 = vrot.lane.b32.xlu0 %v1346, 72
    %v1351 = vpop.permute.xlu0 %1350
    %v1353 = vadd.f32 %v1271, %v1351
    %1354 = vmatprep.subr.mxu0 0.0
    %1355 = vmatpush1.msra.mxu0 %v1266
    %1356 = vmatprep.subr.mxu0 0.0
    %1357 = vmatpush1.msra.mxu0 0.0
    %1358 = vmatprep.subr.mxu0 0.0
    %1359 = vmatpush1.msra.mxu0 0.0
    %1360 = vmatprep.subr.mxu0 0.0
    %1361 = vmatpush1.msra.mxu0 0.0
    %1362 = vmatprep.subr.mxu0 0.0
    %1363 = vmatpush1.msra.mxu0 0.0
    %1364 = vmatprep.subr.mxu0 0.0
    %1365 = vmatpush1.msra.mxu0 0.0
    %1366 = vmatprep.subr.mxu0 0.0
    %1367 = vmatpush1.msra.mxu0 0.0
    %1368 = vmatprep.subr.mxu0 0.0
    %1369 = vmatpush1.msra.mxu0 0.0
    %1370 = vmatprep.subr.mxu0 0.0
    %1371 = vmatpush1.msra.mxu0 0.0
    %1372 = vmatprep.subr.mxu0 0.0
    %1373 = vmatpush1.msra.mxu0 0.0
    %1374 = vmatprep.subr.mxu0 0.0
    %1375 = vmatpush1.msra.mxu0 0.0
    %1376 = vmatprep.subr.mxu0 0.0
    %1377 = vmatpush1.msra.mxu0 0.0
    %1378 = vmatprep.subr.mxu0 0.0
    %1379 = vmatpush1.msra.mxu0 0.0
    %1380 = vmatprep.subr.mxu0 0.0
    %1381 = vmatpush1.msra.mxu0 0.0
    %1382 = vmatprep.subr.mxu0 0.0
    %1383 = vmatpush1.msra.mxu0 0.0
    %1384 = vmatprep.subr.mxu0 0.0
    %1385 = vmatpush1.msra.mxu0 0.0
    %1386 = vmatprep.subr.mxu0 0.0
    %1387 = vmatpush1.msra.mxu0 0.0
    %1388 = vmatprep.subr.mxu0 0.0
    %1389 = vmatpush1.msra.mxu0 0.0
    %1390 = vmatprep.subr.mxu0 0.0
    %1391 = vmatpush1.msra.mxu0 0.0
    %1392 = vmatprep.subr.mxu0 0.0
    %1393 = vmatpush1.msra.mxu0 0.0
    %1394 = vmatprep.subr.mxu0 0.0
    %1395 = vmatpush1.msra.mxu0 0.0
    %1396 = vmatprep.subr.mxu0 0.0
    %1397 = vmatpush1.msra.mxu0 0.0
    %1398 = vmatprep.subr.mxu0 0.0
    %1399 = vmatpush1.msra.mxu0 0.0
    %1400 = vmatprep.subr.mxu0 0.0
    %1401 = vmatpush1.msra.mxu0 0.0
    %1402 = vmatprep.subr.mxu0 0.0
    %1403 = vmatpush1.msra.mxu0 0.0
    %1404 = vmatprep.subr.mxu0 0.0
    %1405 = vmatpush1.msra.mxu0 0.0
    %1406 = vmatprep.subr.mxu0 0.0
    %1407 = vmatpush1.msra.mxu0 0.0
    %1408 = vmatprep.subr.mxu0 0.0
    %1409 = vmatpush1.msra.mxu0 0.0
    %1410 = vmatprep.subr.mxu0 0.0
    %1411 = vmatpush1.msra.mxu0 0.0
    %1412 = vmatprep.subr.mxu0 0.0
    %1413 = vmatpush1.msra.mxu0 0.0
    %1414 = vmatprep.subr.mxu0 0.0
    %1415 = vmatpush1.msra.mxu0 0.0
    %1416 = vmatprep.subr.mxu0 0.0
    %1417 = vmatpush1.msra.mxu0 0.0
    %1418 = vmatprep.mubr.f32.mxu0 0.0
    %1419 = vmatmul.mubr.f32.gmra.mrb[0].mxu0 %v1277
    %v1420 = vpop.f32.mrb[0].mxu0
    %v1421 = vadd.f32 0.0, %v1420
    %v1422 = vpop.f32.mrb[0].mxu0
    %1423 = vdwg.mxu0
    %1425 = vrot.lane.b32.xlu0 %v1353, 56
    %v1426 = vpop.permute.xlu0 %1425
    %v1429 = vsel %vm383, %v1421, 0
    %1431 = vmatprep.subr.mxu0 0.0
    %1432 = vmatpush1.msra.mxu0 %v1426
    %1433 = vmatprep.subr.mxu0 0.0
    %1434 = vmatpush1.msra.mxu0 0.0
    %1435 = vmatprep.subr.mxu0 0.0
    %1436 = vmatpush1.msra.mxu0 0.0
    %1437 = vmatprep.subr.mxu0 0.0
    %1438 = vmatpush1.msra.mxu0 0.0
    %1439 = vmatprep.subr.mxu0 0.0
    %1440 = vmatpush1.msra.mxu0 0.0
    %1441 = vmatprep.subr.mxu0 0.0
    %1442 = vmatpush1.msra.mxu0 0.0
    %1443 = vmatprep.subr.mxu0 0.0
    %1444 = vmatpush1.msra.mxu0 0.0
    %1445 = vmatprep.subr.mxu0 0.0
    %1446 = vmatpush1.msra.mxu0 0.0
    %1447 = vmatprep.subr.mxu0 0.0
    %1448 = vmatpush1.msra.mxu0 0.0
    %1449 = vmatprep.subr.mxu0 0.0
    %1450 = vmatpush1.msra.mxu0 0.0
    %1451 = vmatprep.subr.mxu0 0.0
    %1452 = vmatpush1.msra.mxu0 0.0
    %1453 = vmatprep.subr.mxu0 0.0
    %1454 = vmatpush1.msra.mxu0 0.0
    %1455 = vmatprep.subr.mxu0 0.0
    %1456 = vmatpush1.msra.mxu0 0.0
    %1457 = vmatprep.subr.mxu0 0.0
    %1458 = vmatpush1.msra.mxu0 0.0
    %1459 = vmatprep.subr.mxu0 0.0
    %1460 = vmatpush1.msra.mxu0 0.0
    %1461 = vmatprep.subr.mxu0 0.0
    %1462 = vmatpush1.msra.mxu0 0.0
    %1463 = vmatprep.subr.mxu0 0.0
    %1464 = vmatpush1.msra.mxu0 0.0
    %1465 = vmatprep.subr.mxu0 0.0
    %1466 = vmatpush1.msra.mxu0 0.0
    %1467 = vmatprep.subr.mxu0 0.0
    %1468 = vmatpush1.msra.mxu0 0.0
    %1469 = vmatprep.subr.mxu0 0.0
    %1470 = vmatpush1.msra.mxu0 0.0
    %1471 = vmatprep.subr.mxu0 0.0
    %1472 = vmatpush1.msra.mxu0 0.0
    %1473 = vmatprep.subr.mxu0 0.0
    %1474 = vmatpush1.msra.mxu0 0.0
    %1475 = vmatprep.subr.mxu0 0.0
    %1476 = vmatpush1.msra.mxu0 0.0
    %1477 = vmatprep.subr.mxu0 0.0
    %1478 = vmatpush1.msra.mxu0 0.0
    %1479 = vmatprep.subr.mxu0 0.0
    %1480 = vmatpush1.msra.mxu0 0.0
    %1481 = vmatprep.subr.mxu0 0.0
    %1482 = vmatpush1.msra.mxu0 0.0
    %1483 = vmatprep.subr.mxu0 0.0
    %1484 = vmatpush1.msra.mxu0 0.0
    %1485 = vmatprep.subr.mxu0 0.0
    %1486 = vmatpush1.msra.mxu0 0.0
    %1487 = vmatprep.subr.mxu0 0.0
    %1488 = vmatpush1.msra.mxu0 0.0
    %1489 = vmatprep.subr.mxu0 0.0
    %1490 = vmatpush1.msra.mxu0 0.0
    %1491 = vmatprep.subr.mxu0 0.0
    %1492 = vmatpush1.msra.mxu0 0.0
    %1493 = vmatprep.subr.mxu0 0.0
    %1494 = vmatpush1.msra.mxu0 0.0
    %1495 = vmatprep.mubr.f32.mxu0 0.0
    %1496 = vmatmul.mubr.f32.gmra.mrb[0].mxu0 %v1429
    %v1497 = vpop.f32.mrb[0].mxu0
    %v1498 = vadd.f32 0.0, %v1497
    %v1499 = vpop.f32.mrb[0].mxu0
    %1500 = vdwg.mxu0
    %1502 = vrot.lane.b32.xlu0 %v1498, 72
    %v1503 = vpop.permute.xlu0 %1502
    %v1505 = vadd.f32 %v1353, %v1503
    %1506 = vmatprep.subr.mxu0 0.0
    %1507 = vmatpush1.msra.mxu0 %v1421
    %1508 = vmatprep.subr.mxu0 0.0
    %1509 = vmatpush1.msra.mxu0 0.0
    %1510 = vmatprep.subr.mxu0 0.0
    %1511 = vmatpush1.msra.mxu0 0.0
    %1512 = vmatprep.subr.mxu0 0.0
    %1513 = vmatpush1.msra.mxu0 0.0
    %1514 = vmatprep.subr.mxu0 0.0
    %1515 = vmatpush1.msra.mxu0 0.0
    %1516 = vmatprep.subr.mxu0 0.0
    %1517 = vmatpush1.msra.mxu0 0.0
    %1518 = vmatprep.subr.mxu0 0.0
    %1519 = vmatpush1.msra.mxu0 0.0
    %1520 = vmatprep.subr.mxu0 0.0
    %1521 = vmatpush1.msra.mxu0 0.0
    %1522 = vmatprep.subr.mxu0 0.0
    %1523 = vmatpush1.msra.mxu0 0.0
    %1524 = vmatprep.subr.mxu0 0.0
    %1525 = vmatpush1.msra.mxu0 0.0
    %1526 = vmatprep.subr.mxu0 0.0
    %1527 = vmatpush1.msra.mxu0 0.0
    %1528 = vmatprep.subr.mxu0 0.0
    %1529 = vmatpush1.msra.mxu0 0.0
    %1530 = vmatprep.subr.mxu0 0.0
    %1531 = vmatpush1.msra.mxu0 0.0
    %1532 = vmatprep.subr.mxu0 0.0
    %1533 = vmatpush1.msra.mxu0 0.0
    %1534 = vmatprep.subr.mxu0 0.0
    %1535 = vmatpush1.msra.mxu0 0.0
    %1536 = vmatprep.subr.mxu0 0.0
    %1537 = vmatpush1.msra.mxu0 0.0
    %1538 = vmatprep.subr.mxu0 0.0
    %1539 = vmatpush1.msra.mxu0 0.0
    %1540 = vmatprep.subr.mxu0 0.0
    %1541 = vmatpush1.msra.mxu0 0.0
    %1542 = vmatprep.subr.mxu0 0.0
    %1543 = vmatpush1.msra.mxu0 0.0
    %1544 = vmatprep.subr.mxu0 0.0
    %1545 = vmatpush1.msra.mxu0 0.0
    %1546 = vmatprep.subr.mxu0 0.0
    %1547 = vmatpush1.msra.mxu0 0.0
    %1548 = vmatprep.subr.mxu0 0.0
    %1549 = vmatpush1.msra.mxu0 0.0
    %1550 = vmatprep.subr.mxu0 0.0
    %1551 = vmatpush1.msra.mxu0 0.0
    %1552 = vmatprep.subr.mxu0 0.0
    %1553 = vmatpush1.msra.mxu0 0.0
    %1554 = vmatprep.subr.mxu0 0.0
    %1555 = vmatpush1.msra.mxu0 0.0
    %1556 = vmatprep.subr.mxu0 0.0
    %1557 = vmatpush1.msra.mxu0 0.0
    %1558 = vmatprep.subr.mxu0 0.0
    %1559 = vmatpush1.msra.mxu0 0.0
    %1560 = vmatprep.subr.mxu0 0.0
    %1561 = vmatpush1.msra.mxu0 0.0
    %1562 = vmatprep.subr.mxu0 0.0
    %1563 = vmatpush1.msra.mxu0 0.0
    %1564 = vmatprep.subr.mxu0 0.0
    %1565 = vmatpush1.msra.mxu0 0.0
    %1566 = vmatprep.subr.mxu0 0.0
    %1567 = vmatpush1.msra.mxu0 0.0
    %1568 = vmatprep.subr.mxu0 0.0
    %1569 = vmatpush1.msra.mxu0 0.0
    %1570 = vmatprep.mubr.f32.mxu0 0.0
    %1571 = vmatmul.mubr.f32.gmra.mrb[0].mxu0 %v1429
    %v1572 = vpop.f32.mrb[0].mxu0
    %v1573 = vadd.f32 0.0, %v1572
    %v1574 = vpop.f32.mrb[0].mxu0
    %1575 = vdwg.mxu0
    %1577 = vrot.lane.b32.xlu0 %v1505, 56
    %v1578 = vpop.permute.xlu0 %1577
    %v1581 = vsel %vm383, %v1573, 0
    %1583 = vmatprep.subr.mxu0 0.0
    %1584 = vmatpush1.msra.mxu0 %v1578
    %1585 = vmatprep.subr.mxu0 0.0
    %1586 = vmatpush1.msra.mxu0 0.0
    %1587 = vmatprep.subr.mxu0 0.0
    %1588 = vmatpush1.msra.mxu0 0.0
    %1589 = vmatprep.subr.mxu0 0.0
    %1590 = vmatpush1.msra.mxu0 0.0
    %1591 = vmatprep.subr.mxu0 0.0
    %1592 = vmatpush1.msra.mxu0 0.0
    %1593 = vmatprep.subr.mxu0 0.0
    %1594 = vmatpush1.msra.mxu0 0.0
    %1595 = vmatprep.subr.mxu0 0.0
    %1596 = vmatpush1.msra.mxu0 0.0
    %1597 = vmatprep.subr.mxu0 0.0
    %1598 = vmatpush1.msra.mxu0 0.0
    %1599 = vmatprep.subr.mxu0 0.0
    %1600 = vmatpush1.msra.mxu0 0.0
    %1601 = vmatprep.subr.mxu0 0.0
    %1602 = vmatpush1.msra.mxu0 0.0
    %1603 = vmatprep.subr.mxu0 0.0
    %1604 = vmatpush1.msra.mxu0 0.0
    %1605 = vmatprep.subr.mxu0 0.0
    %1606 = vmatpush1.msra.mxu0 0.0
    %1607 = vmatprep.subr.mxu0 0.0
    %1608 = vmatpush1.msra.mxu0 0.0
    %1609 = vmatprep.subr.mxu0 0.0
    %1610 = vmatpush1.msra.mxu0 0.0
    %1611 = vmatprep.subr.mxu0 0.0
    %1612 = vmatpush1.msra.mxu0 0.0
    %1613 = vmatprep.subr.mxu0 0.0
    %1614 = vmatpush1.msra.mxu0 0.0
    %1615 = vmatprep.subr.mxu0 0.0
    %1616 = vmatpush1.msra.mxu0 0.0
    %1617 = vmatprep.subr.mxu0 0.0
    %1618 = vmatpush1.msra.mxu0 0.0
    %1619 = vmatprep.subr.mxu0 0.0
    %1620 = vmatpush1.msra.mxu0 0.0
    %1621 = vmatprep.subr.mxu0 0.0
    %1622 = vmatpush1.msra.mxu0 0.0
    %1623 = vmatprep.subr.mxu0 0.0
    %1624 = vmatpush1.msra.mxu0 0.0
    %1625 = vmatprep.subr.mxu0 0.0
    %1626 = vmatpush1.msra.mxu0 0.0
    %1627 = vmatprep.subr.mxu0 0.0
    %1628 = vmatpush1.msra.mxu0 0.0
    %1629 = vmatprep.subr.mxu0 0.0
    %1630 = vmatpush1.msra.mxu0 0.0
    %1631 = vmatprep.subr.mxu0 0.0
    %1632 = vmatpush1.msra.mxu0 0.0
    %1633 = vmatprep.subr.mxu0 0.0
    %1634 = vmatpush1.msra.mxu0 0.0
    %1635 = vmatprep.subr.mxu0 0.0
    %1636 = vmatpush1.msra.mxu0 0.0
    %1637 = vmatprep.subr.mxu0 0.0
    %1638 = vmatpush1.msra.mxu0 0.0
    %1639 = vmatprep.subr.mxu0 0.0
    %1640 = vmatpush1.msra.mxu0 0.0
    %1641 = vmatprep.subr.mxu0 0.0
    %1642 = vmatpush1.msra.mxu0 0.0
    %1643 = vmatprep.subr.mxu0 0.0
    %1644 = vmatpush1.msra.mxu0 0.0
    %1645 = vmatprep.subr.mxu0 0.0
    %1646 = vmatpush1.msra.mxu0 0.0
    %1647 = vmatprep.mubr.f32.mxu0 0.0
    %1648 = vmatmul.mubr.f32.gmra.mrb[0].mxu0 %v1581
    %v1649 = vpop.f32.mrb[0].mxu0
    %v1650 = vadd.f32 0.0, %v1649
    %v1651 = vpop.f32.mrb[0].mxu0
    %1652 = vdwg.mxu0
    %1654 = vrot.lane.b32.xlu0 %v1650, 72
    %v1655 = vpop.permute.xlu0 %1654
    %v1657 = vadd.f32 %v1505, %v1655
    %1659 = vrot.lane.b32.xlu0 %v1174, 116
    %v1660 = vpop.permute.xlu0 %1659
    %v1661 = vsel %vm463, %v1660, 0
    %1663 = vmatprep.subr.mxu0 0.0
    %1664 = vmatpush1.xpose.msra.mxu0 %v1193
    %1665 = vmatprep.subr.mxu0 0.0
    %1666 = vmatpush1.xpose.msra.mxu0 0.0
    %1667 = vmatprep.subr.mxu0 0.0
    %1668 = vmatpush1.xpose.msra.mxu0 0.0
    %1669 = vmatprep.subr.mxu0 0.0
    %1670 = vmatpush1.xpose.msra.mxu0 0.0
    %1671 = vmatprep.subr.mxu0 0.0
    %1672 = vmatpush1.xpose.msra.mxu0 0.0
    %1673 = vmatprep.subr.mxu0 0.0
    %1674 = vmatpush1.xpose.msra.mxu0 0.0
    %1675 = vmatprep.subr.mxu0 0.0
    %1676 = vmatpush1.xpose.msra.mxu0 0.0
    %1677 = vmatprep.subr.mxu0 0.0
    %1678 = vmatpush1.xpose.msra.mxu0 0.0
    %1679 = vmatprep.subr.mxu0 0.0
    %1680 = vmatpush1.xpose.msra.mxu0 0.0
    %1681 = vmatprep.subr.mxu0 0.0
    %1682 = vmatpush1.xpose.msra.mxu0 0.0
    %1683 = vmatprep.subr.mxu0 0.0
    %1684 = vmatpush1.xpose.msra.mxu0 0.0
    %1685 = vmatprep.subr.mxu0 0.0
    %1686 = vmatpush1.xpose.msra.mxu0 0.0
    %1687 = vmatprep.subr.mxu0 0.0
    %1688 = vmatpush1.xpose.msra.mxu0 0.0
    %1689 = vmatprep.subr.mxu0 0.0
    %1690 = vmatpush1.xpose.msra.mxu0 0.0
    %1691 = vmatprep.subr.mxu0 0.0
    %1692 = vmatpush1.xpose.msra.mxu0 0.0
    %1693 = vmatprep.subr.mxu0 0.0
    %1694 = vmatpush1.xpose.msra.mxu0 0.0
    %1695 = vmatprep.subr.mxu0 0.0
    %1696 = vmatpush1.xpose.msra.mxu0 0.0
    %1697 = vmatprep.subr.mxu0 0.0
    %1698 = vmatpush1.xpose.msra.mxu0 0.0
    %1699 = vmatprep.subr.mxu0 0.0
    %1700 = vmatpush1.xpose.msra.mxu0 0.0
    %1701 = vmatprep.subr.mxu0 0.0
    %1702 = vmatpush1.xpose.msra.mxu0 0.0
    %1703 = vmatprep.subr.mxu0 0.0
    %1704 = vmatpush1.xpose.msra.mxu0 0.0
    %1705 = vmatprep.subr.mxu0 0.0
    %1706 = vmatpush1.xpose.msra.mxu0 0.0
    %1707 = vmatprep.subr.mxu0 0.0
    %1708 = vmatpush1.xpose.msra.mxu0 0.0
    %1709 = vmatprep.subr.mxu0 0.0
    %1710 = vmatpush1.xpose.msra.mxu0 0.0
    %1711 = vmatprep.subr.mxu0 0.0
    %1712 = vmatpush1.xpose.msra.mxu0 0.0
    %1713 = vmatprep.subr.mxu0 0.0
    %1714 = vmatpush1.xpose.msra.mxu0 0.0
    %1715 = vmatprep.subr.mxu0 0.0
    %1716 = vmatpush1.xpose.msra.mxu0 0.0
    %1717 = vmatprep.subr.mxu0 0.0
    %1718 = vmatpush1.xpose.msra.mxu0 0.0
    %1719 = vmatprep.subr.mxu0 0.0
    %1720 = vmatpush1.xpose.msra.mxu0 0.0
    %1721 = vmatprep.subr.mxu0 0.0
    %1722 = vmatpush1.xpose.msra.mxu0 0.0
    %1723 = vmatprep.subr.mxu0 0.0
    %1724 = vmatpush1.xpose.msra.mxu0 0.0
    %1725 = vmatprep.subr.mxu0 0.0
    %1726 = vmatpush1.xpose.msra.mxu0 0.0
    %1727 = vmatprep.mubr.f32.mxu0 0.0
    %1728 = vmatmul.mubr.f32.gmra.mrb[0].mxu0 %v1661
    %v1729 = vpop.f32.mrb[0].mxu0
    %v1730 = vadd.f32 0.0, %v1729
    %v1731 = vpop.f32.mrb[0].mxu0
    %1732 = vdwg.mxu0
    %v1733 = vmul.f32 %v379, %v1730
    %1735 = vrot.lane.b32.xlu0 %v1657, 56
    %v1736 = vpop.permute.xlu0 %1735
    %v1739 = vsel %vm383, %v1733, 0
    %1741 = vmatprep.subr.mxu0 0.0
    %1742 = vmatpush1.msra.mxu0 %v1736
    %1743 = vmatprep.subr.mxu0 0.0
    %1744 = vmatpush1.msra.mxu0 0.0
    %1745 = vmatprep.subr.mxu0 0.0
    %1746 = vmatpush1.msra.mxu0 0.0
    %1747 = vmatprep.subr.mxu0 0.0
    %1748 = vmatpush1.msra.mxu0 0.0
    %1749 = vmatprep.subr.mxu0 0.0
    %1750 = vmatpush1.msra.mxu0 0.0
    %1751 = vmatprep.subr.mxu0 0.0
    %1752 = vmatpush1.msra.mxu0 0.0
    %1753 = vmatprep.subr.mxu0 0.0
    %1754 = vmatpush1.msra.mxu0 0.0
    %1755 = vmatprep.subr.mxu0 0.0
    %1756 = vmatpush1.msra.mxu0 0.0
    %1757 = vmatprep.subr.mxu0 0.0
    %1758 = vmatpush1.msra.mxu0 0.0
    %1759 = vmatprep.subr.mxu0 0.0
    %1760 = vmatpush1.msra.mxu0 0.0
    %1761 = vmatprep.subr.mxu0 0.0
    %1762 = vmatpush1.msra.mxu0 0.0
    %1763 = vmatprep.subr.mxu0 0.0
    %1764 = vmatpush1.msra.mxu0 0.0
    %1765 = vmatprep.subr.mxu0 0.0
    %1766 = vmatpush1.msra.mxu0 0.0
    %1767 = vmatprep.subr.mxu0 0.0
    %1768 = vmatpush1.msra.mxu0 0.0
    %1769 = vmatprep.subr.mxu0 0.0
    %1770 = vmatpush1.msra.mxu0 0.0
    %1771 = vmatprep.subr.mxu0 0.0
    %1772 = vmatpush1.msra.mxu0 0.0
    %1773 = vmatprep.subr.mxu0 0.0
    %1774 = vmatpush1.msra.mxu0 0.0
    %1775 = vmatprep.subr.mxu0 0.0
    %1776 = vmatpush1.msra.mxu0 0.0
    %1777 = vmatprep.subr.mxu0 0.0
    %1778 = vmatpush1.msra.mxu0 0.0
    %1779 = vmatprep.subr.mxu0 0.0
    %1780 = vmatpush1.msra.mxu0 0.0
    %1781 = vmatprep.subr.mxu0 0.0
    %1782 = vmatpush1.msra.mxu0 0.0
    %1783 = vmatprep.subr.mxu0 0.0
    %1784 = vmatpush1.msra.mxu0 0.0
    %1785 = vmatprep.subr.mxu0 0.0
    %1786 = vmatpush1.msra.mxu0 0.0
    %1787 = vmatprep.subr.mxu0 0.0
    %1788 = vmatpush1.msra.mxu0 0.0
    %1789 = vmatprep.subr.mxu0 0.0
    %1790 = vmatpush1.msra.mxu0 0.0
    %1791 = vmatprep.subr.mxu0 0.0
    %1792 = vmatpush1.msra.mxu0 0.0
    %1793 = vmatprep.subr.mxu0 0.0
    %1794 = vmatpush1.msra.mxu0 0.0
    %1795 = vmatprep.subr.mxu0 0.0
    %1796 = vmatpush1.msra.mxu0 0.0
    %1797 = vmatprep.subr.mxu0 0.0
    %1798 = vmatpush1.msra.mxu0 0.0
    %1799 = vmatprep.subr.mxu0 0.0
    %1800 = vmatpush1.msra.mxu0 0.0
    %1801 = vmatprep.subr.mxu0 0.0
    %1802 = vmatpush1.msra.mxu0 0.0
    %1803 = vmatprep.subr.mxu0 0.0
    %1804 = vmatpush1.msra.mxu0 0.0
    %1805 = vmatprep.mubr.f32.mxu0 0.0
    %1806 = vmatmul.mubr.f32.gmra.mrb[0].mxu0 %v1739
    %v1807 = vpop.f32.mrb[0].mxu0
    %v1808 = vadd.f32 0.0, %v1807
    %v1809 = vpop.f32.mrb[0].mxu0
    %1810 = vdwg.mxu0
    %v1811 = vmul.f32 %v1808, %v1808
    %v1812 = vsel %vm1129, %v1811, 0.0
    %1813 = vadd.xlane.f32.xlu0 %v1812
    %v1814 = vpop.xlane.xlu0 %1813
    %v1815 = vmul.f32 %v1814, %v1133
    %v1816 = vadd.f32 %v1815, 1e-05
    %v1817 = vrsqrt.pop %v1816
    %v1818 = vmul.f32 %v1808, %v1817
    %v1819 = vmul.f32 %v1818, %v1141
    %1821 = vrot.lane.b32.xlu0 %v122, 104
    %v1822 = vpop.permute.xlu0 %1821
    %v1824 = vmul.f32 %v1819, %v1822
    %1826 = vrot.lane.b32.xlu0 %v1149, 104
    %v1827 = vpop.permute.xlu0 %1826
    %v1829 = vmul.f32 %v1824, %v1827
    %1831 = vrot.lane.b32.xlu0 %v1829, 24
    %v1832 = vpop.permute.xlu0 %1831
    %v1834 = vsel %vm1129, %v1150, %v1832
    %1835 = vmatprep.subr.mxu0 0.0
    %1836 = vmatpush1.msra.mxu0 %v362
    %1837 = vmatprep.subr.mxu0 0.0
    %1838 = vmatpush1.msra.mxu0 0.0
    %1839 = vmatprep.subr.mxu0 0.0
    %1840 = vmatpush1.msra.mxu0 0.0
    %1841 = vmatprep.subr.mxu0 0.0
    %1842 = vmatpush1.msra.mxu0 0.0
    %1843 = vmatprep.subr.mxu0 0.0
    %1844 = vmatpush1.msra.mxu0 0.0
    %1845 = vmatprep.subr.mxu0 0.0
    %1846 = vmatpush1.msra.mxu0 0.0
    %1847 = vmatprep.subr.mxu0 0.0
    %1848 = vmatpush1.msra.mxu0 0.0
    %1849 = vmatprep.subr.mxu0 0.0
    %1850 = vmatpush1.msra.mxu0 0.0
    %1851 = vmatprep.subr.mxu0 0.0
    %1852 = vmatpush1.msra.mxu0 0.0
    %1853 = vmatprep.subr.mxu0 0.0
    %1854 = vmatpush1.msra.mxu0 0.0
    %1855 = vmatprep.subr.mxu0 0.0
    %1856 = vmatpush1.msra.mxu0 0.0
    %1857 = vmatprep.subr.mxu0 0.0
    %1858 = vmatpush1.msra.mxu0 0.0
    %1859 = vmatprep.subr.mxu0 0.0
    %1860 = vmatpush1.msra.mxu0 0.0
    %1861 = vmatprep.subr.mxu0 0.0
    %1862 = vmatpush1.msra.mxu0 0.0
    %1863 = vmatprep.subr.mxu0 0.0
    %1864 = vmatpush1.msra.mxu0 0.0
    %1865 = vmatprep.subr.mxu0 0.0
    %1866 = vmatpush1.msra.mxu0 0.0
    %1867 = vmatprep.subr.mxu0 0.0
    %1868 = vmatpush1.msra.mxu0 0.0
    %1869 = vmatprep.subr.mxu0 0.0
    %1870 = vmatpush1.msra.mxu0 0.0
    %1871 = vmatprep.subr.mxu0 0.0
    %1872 = vmatpush1.msra.mxu0 0.0
    %1873 = vmatprep.subr.mxu0 0.0
    %1874 = vmatpush1.msra.mxu0 0.0
    %1875 = vmatprep.subr.mxu0 0.0
    %1876 = vmatpush1.msra.mxu0 0.0
    %1877 = vmatprep.subr.mxu0 0.0
    %1878 = vmatpush1.msra.mxu0 0.0
    %1879 = vmatprep.subr.mxu0 0.0
    %1880 = vmatpush1.msra.mxu0 0.0
    %1881 = vmatprep.subr.mxu0 0.0
    %1882 = vmatpush1.msra.mxu0 0.0
    %1883 = vmatprep.subr.mxu0 0.0
    %1884 = vmatpush1.msra.mxu0 0.0
    %1885 = vmatprep.subr.mxu0 0.0
    %1886 = vmatpush1.msra.mxu0 0.0
    %1887 = vmatprep.subr.mxu0 0.0
    %1888 = vmatpush1.msra.mxu0 0.0
    %1889 = vmatprep.subr.mxu0 0.0
    %1890 = vmatpush1.msra.mxu0 0.0
    %1891 = vmatprep.subr.mxu0 0.0
    %1892 = vmatpush1.msra.mxu0 0.0
    %1893 = vmatprep.subr.mxu0 0.0
    %1894 = vmatpush1.msra.mxu0 0.0
    %1895 = vmatprep.subr.mxu0 0.0
    %1896 = vmatpush1.msra.mxu0 0.0
    %1897 = vmatprep.subr.mxu0 0.0
    %1898 = vmatpush1.msra.mxu0 0.0
    %1899 = vmatprep.mubr.f32.mxu0 0.0
    %1900 = vmatmul.mubr.f32.gmra.mrb[0].mxu0 %v385
    %v1901 = vpop.f32.mrb[0].mxu0
    %v1902 = vadd.f32 0.0, %v1901
    %v1903 = vpop.f32.mrb[0].mxu0
    %1904 = vdwg.mxu0
    %v1905 = vmul.f32 %v1902, 1.442695
    %v1906 = vpow.pop %v1905
    %v1907 = vsub.f32 0.0, %v1902
    %v1908 = vmul.f32 %v1907, 1.442695
    %v1909 = vpow.pop %v1908
    %v1910 = vmul.f32 %v315, %v315
    %v1911 = vsel %vm463, %v1910, 0.0
    %1912 = vadd.xlane.f32.xlu0 %v1911
    %v1913 = vpop.xlane.xlu0 %1912
    %v1914 = vadd.f32 %v1913, 1e-06
    %v1915 = vrsqrt.pop %v1914
    %v1916 = vmul.f32 %v315, %v1915
    %v1917 = vmul.f32 %v1916, 0.28867513
    %1919 = vrot.lane.b32.xlu0 %v1910, 104
    %v1920 = vpop.permute.xlu0 %1919
    %v1922 = vsel %vm463, %v1920, 0.0
    %1923 = vadd.xlane.f32.xlu0 %v1922
    %v1924 = vpop.xlane.xlu0 %1923
    %v1925 = vadd.f32 %v1924, 1e-06
    %v1926 = vrsqrt.pop %v1925
    %v1927 = vmul.f32 %v315, %v1926
    %1929 = vset.pattern.permute.xlu0 0
    %1930 = vperm.xlu0 %1929, %v1906
    %v1931 = vpop.permute.xlu0 %1930
    %v1933 = vmul.f32 %v1917, %v1931
    %1935 = vset.pattern.permute.xlu0 0
    %1936 = vperm.xlu0 %1935, %v1909
    %v1937 = vpop.permute.xlu0 %1936
    %v1939 = vmul.f32 %v1927, %v1937
    %1940 = vrot.lane.b32.xlu0 %v1906, 2
    %v1941 = vpop.permute.xlu0 %1940
    %v1943 = vmul.f32 %v374, %v1941
    %1945 = vset.pattern.permute.xlu0 2
    %1946 = vperm.xlu0 %1945, %v1943
    %v1947 = vpop.permute.xlu0 %1946
    %v1949 = vmul.f32 %v1927, %v1947
    %1951 = vrot.lane.b32.xlu0 %v1949, 104
    %v1952 = vpop.permute.xlu0 %1951
    %1954 = vrot.lane.b32.xlu0 %v1939, 104
    %v1955 = vpop.permute.xlu0 %1954
    %v1956 = vsel %vm463, %v1952, 0
    %v1958 = vsel %vm463, %v1955, 0
    %1960 = vmatprep.subr.mxu0 0.0
    %1961 = vmatpush1.xpose.msra.mxu0 %v1958
    %1962 = vmatprep.subr.mxu0 0.0
    %1963 = vmatpush1.xpose.msra.mxu0 0.0
    %1964 = vmatprep.subr.mxu0 0.0
    %1965 = vmatpush1.xpose.msra.mxu0 0.0
    %1966 = vmatprep.subr.mxu0 0.0
    %1967 = vmatpush1.xpose.msra.mxu0 0.0
    %1968 = vmatprep.subr.mxu0 0.0
    %1969 = vmatpush1.xpose.msra.mxu0 0.0
    %1970 = vmatprep.subr.mxu0 0.0
    %1971 = vmatpush1.xpose.msra.mxu0 0.0
    %1972 = vmatprep.subr.mxu0 0.0
    %1973 = vmatpush1.xpose.msra.mxu0 0.0
    %1974 = vmatprep.subr.mxu0 0.0
    %1975 = vmatpush1.xpose.msra.mxu0 0.0
    %1976 = vmatprep.subr.mxu0 0.0
    %1977 = vmatpush1.xpose.msra.mxu0 0.0
    %1978 = vmatprep.subr.mxu0 0.0
    %1979 = vmatpush1.xpose.msra.mxu0 0.0
    %1980 = vmatprep.subr.mxu0 0.0
    %1981 = vmatpush1.xpose.msra.mxu0 0.0
    %1982 = vmatprep.subr.mxu0 0.0
    %1983 = vmatpush1.xpose.msra.mxu0 0.0
    %1984 = vmatprep.subr.mxu0 0.0
    %1985 = vmatpush1.xpose.msra.mxu0 0.0
    %1986 = vmatprep.subr.mxu0 0.0
    %1987 = vmatpush1.xpose.msra.mxu0 0.0
    %1988 = vmatprep.subr.mxu0 0.0
    %1989 = vmatpush1.xpose.msra.mxu0 0.0
    %1990 = vmatprep.subr.mxu0 0.0
    %1991 = vmatpush1.xpose.msra.mxu0 0.0
    %1992 = vmatprep.subr.mxu0 0.0
    %1993 = vmatpush1.xpose.msra.mxu0 0.0
    %1994 = vmatprep.subr.mxu0 0.0
    %1995 = vmatpush1.xpose.msra.mxu0 0.0
    %1996 = vmatprep.subr.mxu0 0.0
    %1997 = vmatpush1.xpose.msra.mxu0 0.0
    %1998 = vmatprep.subr.mxu0 0.0
    %1999 = vmatpush1.xpose.msra.mxu0 0.0
    %2000 = vmatprep.subr.mxu0 0.0
    %2001 = vmatpush1.xpose.msra.mxu0 0.0
    %2002 = vmatprep.subr.mxu0 0.0
    %2003 = vmatpush1.xpose.msra.mxu0 0.0
    %2004 = vmatprep.subr.mxu0 0.0
    %2005 = vmatpush1.xpose.msra.mxu0 0.0
    %2006 = vmatprep.subr.mxu0 0.0
    %2007 = vmatpush1.xpose.msra.mxu0 0.0
    %2008 = vmatprep.subr.mxu0 0.0
    %2009 = vmatpush1.xpose.msra.mxu0 0.0
    %2010 = vmatprep.subr.mxu0 0.0
    %2011 = vmatpush1.xpose.msra.mxu0 0.0
    %2012 = vmatprep.subr.mxu0 0.0
    %2013 = vmatpush1.xpose.msra.mxu0 0.0
    %2014 = vmatprep.subr.mxu0 0.0
    %2015 = vmatpush1.xpose.msra.mxu0 0.0
    %2016 = vmatprep.subr.mxu0 0.0
    %2017 = vmatpush1.xpose.msra.mxu0 0.0
    %2018 = vmatprep.subr.mxu0 0.0
    %2019 = vmatpush1.xpose.msra.mxu0 0.0
    %2020 = vmatprep.subr.mxu0 0.0
    %2021 = vmatpush1.xpose.msra.mxu0 0.0
    %2022 = vmatprep.subr.mxu0 0.0
    %2023 = vmatpush1.xpose.msra.mxu0 0.0
    %2024 = vmatprep.mubr.f32.mxu0 0.0
    %2025 = vmatmul.mubr.f32.gmra.mrb[0].mxu0 %v1956
    %v2026 = vpop.f32.mrb[0].mxu0
    %v2027 = vadd.f32 0.0, %v2026
    %v2028 = vpop.f32.mrb[0].mxu0
    %2029 = vdwg.mxu0
    %v2030 = vmul.f32 %v382, %v2027
    %v2031 = vsub.f32 0.0, %v2030
    %2033 = vset.pattern.permute.xlu0 2
    %2034 = vperm.xlu0 %2033, %v374
    %v2035 = vpop.permute.xlu0 %2034
    %v2037 = vmul.f32 %v315, %v2035
    %2039 = vrot.lane.b32.xlu0 %v2037, 80
    %v2040 = vpop.permute.xlu0 %2039
    %v2043 = vsel %vm383, %v2031, 0
    %2045 = vmatprep.subr.mxu0 0.0
    %2046 = vmatpush1.msra.mxu0 %v2040
    %2047 = vmatprep.subr.mxu0 0.0
    %2048 = vmatpush1.msra.mxu0 0.0
    %2049 = vmatprep.subr.mxu0 0.0
    %2050 = vmatpush1.msra.mxu0 0.0
    %2051 = vmatprep.subr.mxu0 0.0
    %2052 = vmatpush1.msra.mxu0 0.0
    %2053 = vmatprep.subr.mxu0 0.0
    %2054 = vmatpush1.msra.mxu0 0.0
    %2055 = vmatprep.subr.mxu0 0.0
    %2056 = vmatpush1.msra.mxu0 0.0
    %2057 = vmatprep.subr.mxu0 0.0
    %2058 = vmatpush1.msra.mxu0 0.0
    %2059 = vmatprep.subr.mxu0 0.0
    %2060 = vmatpush1.msra.mxu0 0.0
    %2061 = vmatprep.subr.mxu0 0.0
    %2062 = vmatpush1.msra.mxu0 0.0
    %2063 = vmatprep.subr.mxu0 0.0
    %2064 = vmatpush1.msra.mxu0 0.0
    %2065 = vmatprep.subr.mxu0 0.0
    %2066 = vmatpush1.msra.mxu0 0.0
    %2067 = vmatprep.subr.mxu0 0.0
    %2068 = vmatpush1.msra.mxu0 0.0
    %2069 = vmatprep.subr.mxu0 0.0
    %2070 = vmatpush1.msra.mxu0 0.0
    %2071 = vmatprep.subr.mxu0 0.0
    %2072 = vmatpush1.msra.mxu0 0.0
    %2073 = vmatprep.subr.mxu0 0.0
    %2074 = vmatpush1.msra.mxu0 0.0
    %2075 = vmatprep.subr.mxu0 0.0
    %2076 = vmatpush1.msra.mxu0 0.0
    %2077 = vmatprep.subr.mxu0 0.0
    %2078 = vmatpush1.msra.mxu0 0.0
    %2079 = vmatprep.subr.mxu0 0.0
    %2080 = vmatpush1.msra.mxu0 0.0
    %2081 = vmatprep.subr.mxu0 0.0
    %2082 = vmatpush1.msra.mxu0 0.0
    %2083 = vmatprep.subr.mxu0 0.0
    %2084 = vmatpush1.msra.mxu0 0.0
    %2085 = vmatprep.subr.mxu0 0.0
    %2086 = vmatpush1.msra.mxu0 0.0
    %2087 = vmatprep.subr.mxu0 0.0
    %2088 = vmatpush1.msra.mxu0 0.0
    %2089 = vmatprep.subr.mxu0 0.0
    %2090 = vmatpush1.msra.mxu0 0.0
    %2091 = vmatprep.subr.mxu0 0.0
    %2092 = vmatpush1.msra.mxu0 0.0
    %2093 = vmatprep.subr.mxu0 0.0
    %2094 = vmatpush1.msra.mxu0 0.0
    %2095 = vmatprep.subr.mxu0 0.0
    %2096 = vmatpush1.msra.mxu0 0.0
    %2097 = vmatprep.subr.mxu0 0.0
    %2098 = vmatpush1.msra.mxu0 0.0
    %2099 = vmatprep.subr.mxu0 0.0
    %2100 = vmatpush1.msra.mxu0 0.0
    %2101 = vmatprep.subr.mxu0 0.0
    %2102 = vmatpush1.msra.mxu0 0.0
    %2103 = vmatprep.subr.mxu0 0.0
    %2104 = vmatpush1.msra.mxu0 0.0
    %2105 = vmatprep.subr.mxu0 0.0
    %2106 = vmatpush1.msra.mxu0 0.0
    %2107 = vmatprep.subr.mxu0 0.0
    %2108 = vmatpush1.msra.mxu0 0.0
    %2109 = vmatprep.mubr.f32.mxu0 0.0
    %2110 = vmatmul.mubr.f32.gmra.mrb[0].mxu0 %v2043
    %v2111 = vpop.f32.mrb[0].mxu0
    %v2112 = vadd.f32 0.0, %v2111
    %v2113 = vpop.f32.mrb[0].mxu0
    %2114 = vdwg.mxu0
    %2116 = vrot.lane.b32.xlu0 %v2112, 48
    %v2117 = vpop.permute.xlu0 %2116
    %v2119 = vadd.f32 %v2037, %v2117
    %2120 = vmatprep.subr.mxu0 0.0
    %2121 = vmatpush1.msra.mxu0 %v2031
    %2122 = vmatprep.subr.mxu0 0.0
    %2123 = vmatpush1.msra.mxu0 0.0
    %2124 = vmatprep.subr.mxu0 0.0
    %2125 = vmatpush1.msra.mxu0 0.0
    %2126 = vmatprep.subr.mxu0 0.0
    %2127 = vmatpush1.msra.mxu0 0.0
    %2128 = vmatprep.subr.mxu0 0.0
    %2129 = vmatpush1.msra.mxu0 0.0
    %2130 = vmatprep.subr.mxu0 0.0
    %2131 = vmatpush1.msra.mxu0 0.0
    %2132 = vmatprep.subr.mxu0 0.0
    %2133 = vmatpush1.msra.mxu0 0.0
    %2134 = vmatprep.subr.mxu0 0.0
    %2135 = vmatpush1.msra.mxu0 0.0
    %2136 = vmatprep.subr.mxu0 0.0
    %2137 = vmatpush1.msra.mxu0 0.0
    %2138 = vmatprep.subr.mxu0 0.0
    %2139 = vmatpush1.msra.mxu0 0.0
    %2140 = vmatprep.subr.mxu0 0.0
    %2141 = vmatpush1.msra.mxu0 0.0
    %2142 = vmatprep.subr.mxu0 0.0
    %2143 = vmatpush1.msra.mxu0 0.0
    %2144 = vmatprep.subr.mxu0 0.0
    %2145 = vmatpush1.msra.mxu0 0.0
    %2146 = vmatprep.subr.mxu0 0.0
    %2147 = vmatpush1.msra.mxu0 0.0
    %2148 = vmatprep.subr.mxu0 0.0
    %2149 = vmatpush1.msra.mxu0 0.0
    %2150 = vmatprep.subr.mxu0 0.0
    %2151 = vmatpush1.msra.mxu0 0.0
    %2152 = vmatprep.subr.mxu0 0.0
    %2153 = vmatpush1.msra.mxu0 0.0
    %2154 = vmatprep.subr.mxu0 0.0
    %2155 = vmatpush1.msra.mxu0 0.0
    %2156 = vmatprep.subr.mxu0 0.0
    %2157 = vmatpush1.msra.mxu0 0.0
    %2158 = vmatprep.subr.mxu0 0.0
    %2159 = vmatpush1.msra.mxu0 0.0
    %2160 = vmatprep.subr.mxu0 0.0
    %2161 = vmatpush1.msra.mxu0 0.0
    %2162 = vmatprep.subr.mxu0 0.0
    %2163 = vmatpush1.msra.mxu0 0.0
    %2164 = vmatprep.subr.mxu0 0.0
    %2165 = vmatpush1.msra.mxu0 0.0
    %2166 = vmatprep.subr.mxu0 0.0
    %2167 = vmatpush1.msra.mxu0 0.0
    %2168 = vmatprep.subr.mxu0 0.0
    %2169 = vmatpush1.msra.mxu0 0.0
    %2170 = vmatprep.subr.mxu0 0.0
    %2171 = vmatpush1.msra.mxu0 0.0
    %2172 = vmatprep.subr.mxu0 0.0
    %2173 = vmatpush1.msra.mxu0 0.0
    %2174 = vmatprep.subr.mxu0 0.0
    %2175 = vmatpush1.msra.mxu0 0.0
    %2176 = vmatprep.subr.mxu0 0.0
    %2177 = vmatpush1.msra.mxu0 0.0
    %2178 = vmatprep.subr.mxu0 0.0
    %2179 = vmatpush1.msra.mxu0 0.0
    %2180 = vmatprep.subr.mxu0 0.0
    %2181 = vmatpush1.msra.mxu0 0.0
    %2182 = vmatprep.subr.mxu0 0.0
    %2183 = vmatpush1.msra.mxu0 0.0
    %2184 = vmatprep.mubr.f32.mxu0 0.0
    %2185 = vmatmul.mubr.f32.gmra.mrb[0].mxu0 %v2043
    %v2186 = vpop.f32.mrb[0].mxu0
    %v2187 = vadd.f32 0.0, %v2186
    %v2188 = vpop.f32.mrb[0].mxu0
    %2189 = vdwg.mxu0
    %2191 = vrot.lane.b32.xlu0 %v2119, 80
    %v2192 = vpop.permute.xlu0 %2191
    %v2195 = vsel %vm383, %v2187, 0
    %2197 = vmatprep.subr.mxu0 0.0
    %2198 = vmatpush1.msra.mxu0 %v2192
    %2199 = vmatprep.subr.mxu0 0.0
    %2200 = vmatpush1.msra.mxu0 0.0
    %2201 = vmatprep.subr.mxu0 0.0
    %2202 = vmatpush1.msra.mxu0 0.0
    %2203 = vmatprep.subr.mxu0 0.0
    %2204 = vmatpush1.msra.mxu0 0.0
    %2205 = vmatprep.subr.mxu0 0.0
    %2206 = vmatpush1.msra.mxu0 0.0
    %2207 = vmatprep.subr.mxu0 0.0
    %2208 = vmatpush1.msra.mxu0 0.0
    %2209 = vmatprep.subr.mxu0 0.0
    %2210 = vmatpush1.msra.mxu0 0.0
    %2211 = vmatprep.subr.mxu0 0.0
    %2212 = vmatpush1.msra.mxu0 0.0
    %2213 = vmatprep.subr.mxu0 0.0
    %2214 = vmatpush1.msra.mxu0 0.0
    %2215 = vmatprep.subr.mxu0 0.0
    %2216 = vmatpush1.msra.mxu0 0.0
    %2217 = vmatprep.subr.mxu0 0.0
    %2218 = vmatpush1.msra.mxu0 0.0
    %2219 = vmatprep.subr.mxu0 0.0
    %2220 = vmatpush1.msra.mxu0 0.0
    %2221 = vmatprep.subr.mxu0 0.0
    %2222 = vmatpush1.msra.mxu0 0.0
    %2223 = vmatprep.subr.mxu0 0.0
    %2224 = vmatpush1.msra.mxu0 0.0
    %2225 = vmatprep.subr.mxu0 0.0
    %2226 = vmatpush1.msra.mxu0 0.0
    %2227 = vmatprep.subr.mxu0 0.0
    %2228 = vmatpush1.msra.mxu0 0.0
    %2229 = vmatprep.subr.mxu0 0.0
    %2230 = vmatpush1.msra.mxu0 0.0
    %2231 = vmatprep.subr.mxu0 0.0
    %2232 = vmatpush1.msra.mxu0 0.0
    %2233 = vmatprep.subr.mxu0 0.0
    %2234 = vmatpush1.msra.mxu0 0.0
    %2235 = vmatprep.subr.mxu0 0.0
    %2236 = vmatpush1.msra.mxu0 0.0
    %2237 = vmatprep.subr.mxu0 0.0
    %2238 = vmatpush1.msra.mxu0 0.0
    %2239 = vmatprep.subr.mxu0 0.0
    %2240 = vmatpush1.msra.mxu0 0.0
    %2241 = vmatprep.subr.mxu0 0.0
    %2242 = vmatpush1.msra.mxu0 0.0
    %2243 = vmatprep.subr.mxu0 0.0
    %2244 = vmatpush1.msra.mxu0 0.0
    %2245 = vmatprep.subr.mxu0 0.0
    %2246 = vmatpush1.msra.mxu0 0.0
    %2247 = vmatprep.subr.mxu0 0.0
    %2248 = vmatpush1.msra.mxu0 0.0
    %2249 = vmatprep.subr.mxu0 0.0
    %2250 = vmatpush1.msra.mxu0 0.0
    %2251 = vmatprep.subr.mxu0 0.0
    %2252 = vmatpush1.msra.mxu0 0.0
    %2253 = vmatprep.subr.mxu0 0.0
    %2254 = vmatpush1.msra.mxu0 0.0
    %2255 = vmatprep.subr.mxu0 0.0
    %2256 = vmatpush1.msra.mxu0 0.0
    %2257 = vmatprep.subr.mxu0 0.0
    %2258 = vmatpush1.msra.mxu0 0.0
    %2259 = vmatprep.subr.mxu0 0.0
    %2260 = vmatpush1.msra.mxu0 0.0
    %2261 = vmatprep.mubr.f32.mxu0 0.0
    %2262 = vmatmul.mubr.f32.gmra.mrb[0].mxu0 %v2195
    %v2263 = vpop.f32.mrb[0].mxu0
    %v2264 = vadd.f32 0.0, %v2263
    %v2265 = vpop.f32.mrb[0].mxu0
    %2266 = vdwg.mxu0
    %2268 = vrot.lane.b32.xlu0 %v2264, 48
    %v2269 = vpop.permute.xlu0 %2268
    %v2271 = vadd.f32 %v2119, %v2269
    %2272 = vmatprep.subr.mxu0 0.0
    %2273 = vmatpush1.msra.mxu0 %v2187
    %2274 = vmatprep.subr.mxu0 0.0
    %2275 = vmatpush1.msra.mxu0 0.0
    %2276 = vmatprep.subr.mxu0 0.0
    %2277 = vmatpush1.msra.mxu0 0.0
    %2278 = vmatprep.subr.mxu0 0.0
    %2279 = vmatpush1.msra.mxu0 0.0
    %2280 = vmatprep.subr.mxu0 0.0
    %2281 = vmatpush1.msra.mxu0 0.0
    %2282 = vmatprep.subr.mxu0 0.0
    %2283 = vmatpush1.msra.mxu0 0.0
    %2284 = vmatprep.subr.mxu0 0.0
    %2285 = vmatpush1.msra.mxu0 0.0
    %2286 = vmatprep.subr.mxu0 0.0
    %2287 = vmatpush1.msra.mxu0 0.0
    %2288 = vmatprep.subr.mxu0 0.0
    %2289 = vmatpush1.msra.mxu0 0.0
    %2290 = vmatprep.subr.mxu0 0.0
    %2291 = vmatpush1.msra.mxu0 0.0
    %2292 = vmatprep.subr.mxu0 0.0
    %2293 = vmatpush1.msra.mxu0 0.0
    %2294 = vmatprep.subr.mxu0 0.0
    %2295 = vmatpush1.msra.mxu0 0.0
    %2296 = vmatprep.subr.mxu0 0.0
    %2297 = vmatpush1.msra.mxu0 0.0
    %2298 = vmatprep.subr.mxu0 0.0
    %2299 = vmatpush1.msra.mxu0 0.0
    %2300 = vmatprep.subr.mxu0 0.0
    %2301 = vmatpush1.msra.mxu0 0.0
    %2302 = vmatprep.subr.mxu0 0.0
    %2303 = vmatpush1.msra.mxu0 0.0
    %2304 = vmatprep.subr.mxu0 0.0
    %2305 = vmatpush1.msra.mxu0 0.0
    %2306 = vmatprep.subr.mxu0 0.0
    %2307 = vmatpush1.msra.mxu0 0.0
    %2308 = vmatprep.subr.mxu0 0.0
    %2309 = vmatpush1.msra.mxu0 0.0
    %2310 = vmatprep.subr.mxu0 0.0
    %2311 = vmatpush1.msra.mxu0 0.0
    %2312 = vmatprep.subr.mxu0 0.0
    %2313 = vmatpush1.msra.mxu0 0.0
    %2314 = vmatprep.subr.mxu0 0.0
    %2315 = vmatpush1.msra.mxu0 0.0
    %2316 = vmatprep.subr.mxu0 0.0
    %2317 = vmatpush1.msra.mxu0 0.0
    %2318 = vmatprep.subr.mxu0 0.0
    %2319 = vmatpush1.msra.mxu0 0.0
    %2320 = vmatprep.subr.mxu0 0.0
    %2321 = vmatpush1.msra.mxu0 0.0
    %2322 = vmatprep.subr.mxu0 0.0
    %2323 = vmatpush1.msra.mxu0 0.0
    %2324 = vmatprep.subr.mxu0 0.0
    %2325 = vmatpush1.msra.mxu0 0.0
    %2326 = vmatprep.subr.mxu0 0.0
    %2327 = vmatpush1.msra.mxu0 0.0
    %2328 = vmatprep.subr.mxu0 0.0
    %2329 = vmatpush1.msra.mxu0 0.0
    %2330 = vmatprep.subr.mxu0 0.0
    %2331 = vmatpush1.msra.mxu0 0.0
    %2332 = vmatprep.subr.mxu0 0.0
    %2333 = vmatpush1.msra.mxu0 0.0
    %2334 = vmatprep.subr.mxu0 0.0
    %2335 = vmatpush1.msra.mxu0 0.0
    %2336 = vmatprep.mubr.f32.mxu0 0.0
    %2337 = vmatmul.mubr.f32.gmra.mrb[0].mxu0 %v2195
    %v2338 = vpop.f32.mrb[0].mxu0
    %v2339 = vadd.f32 0.0, %v2338
    %v2340 = vpop.f32.mrb[0].mxu0
    %2341 = vdwg.mxu0
    %2343 = vrot.lane.b32.xlu0 %v2271, 80
    %v2344 = vpop.permute.xlu0 %2343
    %v2347 = vsel %vm383, %v2339, 0
    %2349 = vmatprep.subr.mxu0 0.0
    %2350 = vmatpush1.msra.mxu0 %v2344
    %2351 = vmatprep.subr.mxu0 0.0
    %2352 = vmatpush1.msra.mxu0 0.0
    %2353 = vmatprep.subr.mxu0 0.0
    %2354 = vmatpush1.msra.mxu0 0.0
    %2355 = vmatprep.subr.mxu0 0.0
    %2356 = vmatpush1.msra.mxu0 0.0
    %2357 = vmatprep.subr.mxu0 0.0
    %2358 = vmatpush1.msra.mxu0 0.0
    %2359 = vmatprep.subr.mxu0 0.0
    %2360 = vmatpush1.msra.mxu0 0.0
    %2361 = vmatprep.subr.mxu0 0.0
    %2362 = vmatpush1.msra.mxu0 0.0
    %2363 = vmatprep.subr.mxu0 0.0
    %2364 = vmatpush1.msra.mxu0 0.0
    %2365 = vmatprep.subr.mxu0 0.0
    %2366 = vmatpush1.msra.mxu0 0.0
    %2367 = vmatprep.subr.mxu0 0.0
    %2368 = vmatpush1.msra.mxu0 0.0
    %2369 = vmatprep.subr.mxu0 0.0
    %2370 = vmatpush1.msra.mxu0 0.0
    %2371 = vmatprep.subr.mxu0 0.0
    %2372 = vmatpush1.msra.mxu0 0.0
    %2373 = vmatprep.subr.mxu0 0.0
    %2374 = vmatpush1.msra.mxu0 0.0
    %2375 = vmatprep.subr.mxu0 0.0
    %2376 = vmatpush1.msra.mxu0 0.0
    %2377 = vmatprep.subr.mxu0 0.0
    %2378 = vmatpush1.msra.mxu0 0.0
    %2379 = vmatprep.subr.mxu0 0.0
    %2380 = vmatpush1.msra.mxu0 0.0
    %2381 = vmatprep.subr.mxu0 0.0
    %2382 = vmatpush1.msra.mxu0 0.0
    %2383 = vmatprep.subr.mxu0 0.0
    %2384 = vmatpush1.msra.mxu0 0.0
    %2385 = vmatprep.subr.mxu0 0.0
    %2386 = vmatpush1.msra.mxu0 0.0
    %2387 = vmatprep.subr.mxu0 0.0
    %2388 = vmatpush1.msra.mxu0 0.0
    %2389 = vmatprep.subr.mxu0 0.0
    %2390 = vmatpush1.msra.mxu0 0.0
    %2391 = vmatprep.subr.mxu0 0.0
    %2392 = vmatpush1.msra.mxu0 0.0
    %2393 = vmatprep.subr.mxu0 0.0
    %2394 = vmatpush1.msra.mxu0 0.0
    %2395 = vmatprep.subr.mxu0 0.0
    %2396 = vmatpush1.msra.mxu0 0.0
    %2397 = vmatprep.subr.mxu0 0.0
    %2398 = vmatpush1.msra.mxu0 0.0
    %2399 = vmatprep.subr.mxu0 0.0
    %2400 = vmatpush1.msra.mxu0 0.0
    %2401 = vmatprep.subr.mxu0 0.0
    %2402 = vmatpush1.msra.mxu0 0.0
    %2403 = vmatprep.subr.mxu0 0.0
    %2404 = vmatpush1.msra.mxu0 0.0
    %2405 = vmatprep.subr.mxu0 0.0
    %2406 = vmatpush1.msra.mxu0 0.0
    %2407 = vmatprep.subr.mxu0 0.0
    %2408 = vmatpush1.msra.mxu0 0.0
    %2409 = vmatprep.subr.mxu0 0.0
    %2410 = vmatpush1.msra.mxu0 0.0
    %2411 = vmatprep.subr.mxu0 0.0
    %2412 = vmatpush1.msra.mxu0 0.0
    %2413 = vmatprep.mubr.f32.mxu0 0.0
    %2414 = vmatmul.mubr.f32.gmra.mrb[0].mxu0 %v2347
    %v2415 = vpop.f32.mrb[0].mxu0
    %v2416 = vadd.f32 0.0, %v2415
    %v2417 = vpop.f32.mrb[0].mxu0
    %2418 = vdwg.mxu0
    %2420 = vrot.lane.b32.xlu0 %v2416, 48
    %v2421 = vpop.permute.xlu0 %2420
    %v2423 = vadd.f32 %v2271, %v2421
    %v2425 = vsel %vm463, %v1933, 0
    %2427 = vmatprep.subr.mxu0 0.0
    %2428 = vmatpush1.xpose.msra.mxu0 %v1958
    %2429 = vmatprep.subr.mxu0 0.0
    %2430 = vmatpush1.xpose.msra.mxu0 0.0
    %2431 = vmatprep.subr.mxu0 0.0
    %2432 = vmatpush1.xpose.msra.mxu0 0.0
    %2433 = vmatprep.subr.mxu0 0.0
    %2434 = vmatpush1.xpose.msra.mxu0 0.0
    %2435 = vmatprep.subr.mxu0 0.0
    %2436 = vmatpush1.xpose.msra.mxu0 0.0
    %2437 = vmatprep.subr.mxu0 0.0
    %2438 = vmatpush1.xpose.msra.mxu0 0.0
    %2439 = vmatprep.subr.mxu0 0.0
    %2440 = vmatpush1.xpose.msra.mxu0 0.0
    %2441 = vmatprep.subr.mxu0 0.0
    %2442 = vmatpush1.xpose.msra.mxu0 0.0
    %2443 = vmatprep.subr.mxu0 0.0
    %2444 = vmatpush1.xpose.msra.mxu0 0.0
    %2445 = vmatprep.subr.mxu0 0.0
    %2446 = vmatpush1.xpose.msra.mxu0 0.0
    %2447 = vmatprep.subr.mxu0 0.0
    %2448 = vmatpush1.xpose.msra.mxu0 0.0
    %2449 = vmatprep.subr.mxu0 0.0
    %2450 = vmatpush1.xpose.msra.mxu0 0.0
    %2451 = vmatprep.subr.mxu0 0.0
    %2452 = vmatpush1.xpose.msra.mxu0 0.0
    %2453 = vmatprep.subr.mxu0 0.0
    %2454 = vmatpush1.xpose.msra.mxu0 0.0
    %2455 = vmatprep.subr.mxu0 0.0
    %2456 = vmatpush1.xpose.msra.mxu0 0.0
    %2457 = vmatprep.subr.mxu0 0.0
    %2458 = vmatpush1.xpose.msra.mxu0 0.0
    %2459 = vmatprep.subr.mxu0 0.0
    %2460 = vmatpush1.xpose.msra.mxu0 0.0
    %2461 = vmatprep.subr.mxu0 0.0
    %2462 = vmatpush1.xpose.msra.mxu0 0.0
    %2463 = vmatprep.subr.mxu0 0.0
    %2464 = vmatpush1.xpose.msra.mxu0 0.0
    %2465 = vmatprep.subr.mxu0 0.0
    %2466 = vmatpush1.xpose.msra.mxu0 0.0
    %2467 = vmatprep.subr.mxu0 0.0
    %2468 = vmatpush1.xpose.msra.mxu0 0.0
    %2469 = vmatprep.subr.mxu0 0.0
    %2470 = vmatpush1.xpose.msra.mxu0 0.0
    %2471 = vmatprep.subr.mxu0 0.0
    %2472 = vmatpush1.xpose.msra.mxu0 0.0
    %2473 = vmatprep.subr.mxu0 0.0
    %2474 = vmatpush1.xpose.msra.mxu0 0.0
    %2475 = vmatprep.subr.mxu0 0.0
    %2476 = vmatpush1.xpose.msra.mxu0 0.0
    %2477 = vmatprep.subr.mxu0 0.0
    %2478 = vmatpush1.xpose.msra.mxu0 0.0
    %2479 = vmatprep.subr.mxu0 0.0
    %2480 = vmatpush1.xpose.msra.mxu0 0.0
    %2481 = vmatprep.subr.mxu0 0.0
    %2482 = vmatpush1.xpose.msra.mxu0 0.0
    %2483 = vmatprep.subr.mxu0 0.0
    %2484 = vmatpush1.xpose.msra.mxu0 0.0
    %2485 = vmatprep.subr.mxu0 0.0
    %2486 = vmatpush1.xpose.msra.mxu0 0.0
    %2487 = vmatprep.subr.mxu0 0.0
    %2488 = vmatpush1.xpose.msra.mxu0 0.0
    %2489 = vmatprep.subr.mxu0 0.0
    %2490 = vmatpush1.xpose.msra.mxu0 0.0
    %2491 = vmatprep.mubr.f32.mxu0 0.0
    %2492 = vmatmul.mubr.f32.gmra.mrb[0].mxu0 %v2425
    %v2493 = vpop.f32.mrb[0].mxu0
    %v2494 = vadd.f32 0.0, %v2493
    %v2495 = vpop.f32.mrb[0].mxu0
    %2496 = vdwg.mxu0
    %v2497 = vmul.f32 %v379, %v2494
    %2499 = vrot.lane.b32.xlu0 %v2423, 80
    %v2500 = vpop.permute.xlu0 %2499
    %v2503 = vsel %vm383, %v2497, 0
    %2505 = vmatprep.subr.mxu0 0.0
    %2506 = vmatpush1.msra.mxu0 %v2500
    %2507 = vmatprep.subr.mxu0 0.0
    %2508 = vmatpush1.msra.mxu0 0.0
    %2509 = vmatprep.subr.mxu0 0.0
    %2510 = vmatpush1.msra.mxu0 0.0
    %2511 = vmatprep.subr.mxu0 0.0
    %2512 = vmatpush1.msra.mxu0 0.0
    %2513 = vmatprep.subr.mxu0 0.0
    %2514 = vmatpush1.msra.mxu0 0.0
    %2515 = vmatprep.subr.mxu0 0.0
    %2516 = vmatpush1.msra.mxu0 0.0
    %2517 = vmatprep.subr.mxu0 0.0
    %2518 = vmatpush1.msra.mxu0 0.0
    %2519 = vmatprep.subr.mxu0 0.0
    %2520 = vmatpush1.msra.mxu0 0.0
    %2521 = vmatprep.subr.mxu0 0.0
    %2522 = vmatpush1.msra.mxu0 0.0
    %2523 = vmatprep.subr.mxu0 0.0
    %2524 = vmatpush1.msra.mxu0 0.0
    %2525 = vmatprep.subr.mxu0 0.0
    %2526 = vmatpush1.msra.mxu0 0.0
    %2527 = vmatprep.subr.mxu0 0.0
    %2528 = vmatpush1.msra.mxu0 0.0
    %2529 = vmatprep.subr.mxu0 0.0
    %2530 = vmatpush1.msra.mxu0 0.0
    %2531 = vmatprep.subr.mxu0 0.0
    %2532 = vmatpush1.msra.mxu0 0.0
    %2533 = vmatprep.subr.mxu0 0.0
    %2534 = vmatpush1.msra.mxu0 0.0
    %2535 = vmatprep.subr.mxu0 0.0
    %2536 = vmatpush1.msra.mxu0 0.0
    %2537 = vmatprep.subr.mxu0 0.0
    %2538 = vmatpush1.msra.mxu0 0.0
    %2539 = vmatprep.subr.mxu0 0.0
    %2540 = vmatpush1.msra.mxu0 0.0
    %2541 = vmatprep.subr.mxu0 0.0
    %2542 = vmatpush1.msra.mxu0 0.0
    %2543 = vmatprep.subr.mxu0 0.0
    %2544 = vmatpush1.msra.mxu0 0.0
    %2545 = vmatprep.subr.mxu0 0.0
    %2546 = vmatpush1.msra.mxu0 0.0
    %2547 = vmatprep.subr.mxu0 0.0
    %2548 = vmatpush1.msra.mxu0 0.0
    %2549 = vmatprep.subr.mxu0 0.0
    %2550 = vmatpush1.msra.mxu0 0.0
    %2551 = vmatprep.subr.mxu0 0.0
    %2552 = vmatpush1.msra.mxu0 0.0
    %2553 = vmatprep.subr.mxu0 0.0
    %2554 = vmatpush1.msra.mxu0 0.0
    %2555 = vmatprep.subr.mxu0 0.0
    %2556 = vmatpush1.msra.mxu0 0.0
    %2557 = vmatprep.subr.mxu0 0.0
    %2558 = vmatpush1.msra.mxu0 0.0
    %2559 = vmatprep.subr.mxu0 0.0
    %2560 = vmatpush1.msra.mxu0 0.0
    %2561 = vmatprep.subr.mxu0 0.0
    %2562 = vmatpush1.msra.mxu0 0.0
    %2563 = vmatprep.subr.mxu0 0.0
    %2564 = vmatpush1.msra.mxu0 0.0
    %2565 = vmatprep.subr.mxu0 0.0
    %2566 = vmatpush1.msra.mxu0 0.0
    %2567 = vmatprep.subr.mxu0 0.0
    %2568 = vmatpush1.msra.mxu0 0.0
    %2569 = vmatprep.mubr.f32.mxu0 0.0
    %2570 = vmatmul.mubr.f32.gmra.mrb[0].mxu0 %v2503
    %v2571 = vpop.f32.mrb[0].mxu0
    %v2572 = vadd.f32 0.0, %v2571
    %v2573 = vpop.f32.mrb[0].mxu0
    %2574 = vdwg.mxu0
    %v2575 = vmul.f32 %v2572, %v2572
    %v2576 = vsel %vm1129, %v2575, 0.0
    %2577 = vadd.xlane.f32.xlu0 %v2576
    %v2578 = vpop.xlane.xlu0 %2577
    %v2579 = vmul.f32 %v2578, %v1133
    %v2580 = vadd.f32 %v2579, 1e-05
    %v2581 = vrsqrt.pop %v2580
    %v2582 = vmul.f32 %v2572, %v2581
    %v2583 = vmul.f32 %v2582, %v1141
    %v2584 = vmul.f32 %v2583, %v128
    %v2585 = vxor.u32 %v128, 2147483648
    %v2586 = vmul.f32 %v2585, 1.442695
    %v2587 = vpow.pop %v2586
    %v2588 = vadd.f32 %v2587, 1.0
    %v2589 = vrcp.pop %v2588
    %v2590 = vmul.f32 1.0, %v2589
    %v2591 = vmul.f32 %v2584, %v2590
    %2592 = vrot.lane.b32.xlu0 %v1910, 116
    %v2593 = vpop.permute.xlu0 %2592
    %v2595 = vsel %vm463, %v2593, 0.0
    %2596 = vadd.xlane.f32.xlu0 %v2595
    %v2597 = vpop.xlane.xlu0 %2596
    %v2598 = vadd.f32 %v2597, 1e-06
    %v2599 = vrsqrt.pop %v2598
    %v2600 = vmul.f32 %v315, %v2599
    %v2601 = vmul.f32 %v2600, 0.28867513
    %2602 = vrot.lane.b32.xlu0 %v1910, 92
    %v2603 = vpop.permute.xlu0 %2602
    %v2605 = vsel %vm463, %v2603, 0.0
    %2606 = vadd.xlane.f32.xlu0 %v2605
    %v2607 = vpop.xlane.xlu0 %2606
    %v2608 = vadd.f32 %v2607, 1e-06
    %v2609 = vrsqrt.pop %v2608
    %v2610 = vmul.f32 %v315, %v2609
    %2611 = vset.pattern.permute.xlu0 1
    %2612 = vperm.xlu0 %2611, %v1906
    %v2613 = vpop.permute.xlu0 %2612
    %v2615 = vmul.f32 %v2601, %v2613
    %2616 = vset.pattern.permute.xlu0 1
    %2617 = vperm.xlu0 %2616, %v1909
    %v2618 = vpop.permute.xlu0 %2617
    %v2620 = vmul.f32 %v2610, %v2618
    %2621 = vset.pattern.permute.xlu0 3
    %2622 = vperm.xlu0 %2621, %v1943
    %v2623 = vpop.permute.xlu0 %2622
    %v2625 = vmul.f32 %v2610, %v2623
    %2627 = vrot.lane.b32.xlu0 %v2625, 92
    %v2628 = vpop.permute.xlu0 %2627
    %2630 = vrot.lane.b32.xlu0 %v2620, 92
    %v2631 = vpop.permute.xlu0 %2630
    %v2632 = vsel %vm463, %v2628, 0
    %v2634 = vsel %vm463, %v2631, 0
    %2636 = vmatprep.subr.mxu0 0.0
    %2637 = vmatpush1.xpose.msra.mxu0 %v2634
    %2638 = vmatprep.subr.mxu0 0.0
    %2639 = vmatpush1.xpose.msra.mxu0 0.0
    %2640 = vmatprep.subr.mxu0 0.0
    %2641 = vmatpush1.xpose.msra.mxu0 0.0
    %2642 = vmatprep.subr.mxu0 0.0
    %2643 = vmatpush1.xpose.msra.mxu0 0.0
    %2644 = vmatprep.subr.mxu0 0.0
    %2645 = vmatpush1.xpose.msra.mxu0 0.0
    %2646 = vmatprep.subr.mxu0 0.0
    %2647 = vmatpush1.xpose.msra.mxu0 0.0
    %2648 = vmatprep.subr.mxu0 0.0
    %2649 = vmatpush1.xpose.msra.mxu0 0.0
    %2650 = vmatprep.subr.mxu0 0.0
    %2651 = vmatpush1.xpose.msra.mxu0 0.0
    %2652 = vmatprep.subr.mxu0 0.0
    %2653 = vmatpush1.xpose.msra.mxu0 0.0
    %2654 = vmatprep.subr.mxu0 0.0
    %2655 = vmatpush1.xpose.msra.mxu0 0.0
    %2656 = vmatprep.subr.mxu0 0.0
    %2657 = vmatpush1.xpose.msra.mxu0 0.0
    %2658 = vmatprep.subr.mxu0 0.0
    %2659 = vmatpush1.xpose.msra.mxu0 0.0
    %2660 = vmatprep.subr.mxu0 0.0
    %2661 = vmatpush1.xpose.msra.mxu0 0.0
    %2662 = vmatprep.subr.mxu0 0.0
    %2663 = vmatpush1.xpose.msra.mxu0 0.0
    %2664 = vmatprep.subr.mxu0 0.0
    %2665 = vmatpush1.xpose.msra.mxu0 0.0
    %2666 = vmatprep.subr.mxu0 0.0
    %2667 = vmatpush1.xpose.msra.mxu0 0.0
    %2668 = vmatprep.subr.mxu0 0.0
    %2669 = vmatpush1.xpose.msra.mxu0 0.0
    %2670 = vmatprep.subr.mxu0 0.0
    %2671 = vmatpush1.xpose.msra.mxu0 0.0
    %2672 = vmatprep.subr.mxu0 0.0
    %2673 = vmatpush1.xpose.msra.mxu0 0.0
    %2674 = vmatprep.subr.mxu0 0.0
    %2675 = vmatpush1.xpose.msra.mxu0 0.0
    %2676 = vmatprep.subr.mxu0 0.0
    %2677 = vmatpush1.xpose.msra.mxu0 0.0
    %2678 = vmatprep.subr.mxu0 0.0
    %2679 = vmatpush1.xpose.msra.mxu0 0.0
    %2680 = vmatprep.subr.mxu0 0.0
    %2681 = vmatpush1.xpose.msra.mxu0 0.0
    %2682 = vmatprep.subr.mxu0 0.0
    %2683 = vmatpush1.xpose.msra.mxu0 0.0
    %2684 = vmatprep.subr.mxu0 0.0
    %2685 = vmatpush1.xpose.msra.mxu0 0.0
    %2686 = vmatprep.subr.mxu0 0.0
    %2687 = vmatpush1.xpose.msra.mxu0 0.0
    %2688 = vmatprep.subr.mxu0 0.0
    %2689 = vmatpush1.xpose.msra.mxu0 0.0
    %2690 = vmatprep.subr.mxu0 0.0
    %2691 = vmatpush1.xpose.msra.mxu0 0.0
    %2692 = vmatprep.subr.mxu0 0.0
    %2693 = vmatpush1.xpose.msra.mxu0 0.0
    %2694 = vmatprep.subr.mxu0 0.0
    %2695 = vmatpush1.xpose.msra.mxu0 0.0
    %2696 = vmatprep.subr.mxu0 0.0
    %2697 = vmatpush1.xpose.msra.mxu0 0.0
    %2698 = vmatprep.subr.mxu0 0.0
    %2699 = vmatpush1.xpose.msra.mxu0 0.0
    %2700 = vmatprep.mubr.f32.mxu0 0.0
    %2701 = vmatmul.mubr.f32.gmra.mrb[0].mxu0 %v2632
    %v2702 = vpop.f32.mrb[0].mxu0
    %v2703 = vadd.f32 0.0, %v2702
    %v2704 = vpop.f32.mrb[0].mxu0
    %2705 = vdwg.mxu0
    %v2706 = vmul.f32 %v382, %v2703
    %v2707 = vsub.f32 0.0, %v2706
    %2708 = vset.pattern.permute.xlu0 3
    %2709 = vperm.xlu0 %2708, %v374
    %v2710 = vpop.permute.xlu0 %2709
    %v2712 = vmul.f32 %v315, %v2710
    %2714 = vrot.lane.b32.xlu0 %v2712, 56
    %v2715 = vpop.permute.xlu0 %2714
    %v2718 = vsel %vm383, %v2707, 0
    %2720 = vmatprep.subr.mxu0 0.0
    %2721 = vmatpush1.msra.mxu0 %v2715
    %2722 = vmatprep.subr.mxu0 0.0
    %2723 = vmatpush1.msra.mxu0 0.0
    %2724 = vmatprep.subr.mxu0 0.0
    %2725 = vmatpush1.msra.mxu0 0.0
    %2726 = vmatprep.subr.mxu0 0.0
    %2727 = vmatpush1.msra.mxu0 0.0
    %2728 = vmatprep.subr.mxu0 0.0
    %2729 = vmatpush1.msra.mxu0 0.0
    %2730 = vmatprep.subr.mxu0 0.0
    %2731 = vmatpush1.msra.mxu0 0.0
    %2732 = vmatprep.subr.mxu0 0.0
    %2733 = vmatpush1.msra.mxu0 0.0
    %2734 = vmatprep.subr.mxu0 0.0
    %2735 = vmatpush1.msra.mxu0 0.0
    %2736 = vmatprep.subr.mxu0 0.0
    %2737 = vmatpush1.msra.mxu0 0.0
    %2738 = vmatprep.subr.mxu0 0.0
    %2739 = vmatpush1.msra.mxu0 0.0
    %2740 = vmatprep.subr.mxu0 0.0
    %2741 = vmatpush1.msra.mxu0 0.0
    %2742 = vmatprep.subr.mxu0 0.0
    %2743 = vmatpush1.msra.mxu0 0.0
    %2744 = vmatprep.subr.mxu0 0.0
    %2745 = vmatpush1.msra.mxu0 0.0
    %2746 = vmatprep.subr.mxu0 0.0
    %2747 = vmatpush1.msra.mxu0 0.0
    %2748 = vmatprep.subr.mxu0 0.0
    %2749 = vmatpush1.msra.mxu0 0.0
    %2750 = vmatprep.subr.mxu0 0.0
    %2751 = vmatpush1.msra.mxu0 0.0
    %2752 = vmatprep.subr.mxu0 0.0
    %2753 = vmatpush1.msra.mxu0 0.0
    %2754 = vmatprep.subr.mxu0 0.0
    %2755 = vmatpush1.msra.mxu0 0.0
    %2756 = vmatprep.subr.mxu0 0.0
    %2757 = vmatpush1.msra.mxu0 0.0
    %2758 = vmatprep.subr.mxu0 0.0
    %2759 = vmatpush1.msra.mxu0 0.0
    %2760 = vmatprep.subr.mxu0 0.0
    %2761 = vmatpush1.msra.mxu0 0.0
    %2762 = vmatprep.subr.mxu0 0.0
    %2763 = vmatpush1.msra.mxu0 0.0
    %2764 = vmatprep.subr.mxu0 0.0
    %2765 = vmatpush1.msra.mxu0 0.0
    %2766 = vmatprep.subr.mxu0 0.0
    %2767 = vmatpush1.msra.mxu0 0.0
    %2768 = vmatprep.subr.mxu0 0.0
    %2769 = vmatpush1.msra.mxu0 0.0
    %2770 = vmatprep.subr.mxu0 0.0
    %2771 = vmatpush1.msra.mxu0 0.0
    %2772 = vmatprep.subr.mxu0 0.0
    %2773 = vmatpush1.msra.mxu0 0.0
    %2774 = vmatprep.subr.mxu0 0.0
    %2775 = vmatpush1.msra.mxu0 0.0
    %2776 = vmatprep.subr.mxu0 0.0
    %2777 = vmatpush1.msra.mxu0 0.0
    %2778 = vmatprep.subr.mxu0 0.0
    %2779 = vmatpush1.msra.mxu0 0.0
    %2780 = vmatprep.subr.mxu0 0.0
    %2781 = vmatpush1.msra.mxu0 0.0
    %2782 = vmatprep.subr.mxu0 0.0
    %2783 = vmatpush1.msra.mxu0 0.0
    %2784 = vmatprep.mubr.f32.mxu0 0.0
    %2785 = vmatmul.mubr.f32.gmra.mrb[0].mxu0 %v2718
    %v2786 = vpop.f32.mrb[0].mxu0
    %v2787 = vadd.f32 0.0, %v2786
    %v2788 = vpop.f32.mrb[0].mxu0
    %2789 = vdwg.mxu0
    %2791 = vrot.lane.b32.xlu0 %v2787, 72
    %v2792 = vpop.permute.xlu0 %2791
    %v2794 = vadd.f32 %v2712, %v2792
    %2795 = vmatprep.subr.mxu0 0.0
    %2796 = vmatpush1.msra.mxu0 %v2707
    %2797 = vmatprep.subr.mxu0 0.0
    %2798 = vmatpush1.msra.mxu0 0.0
    %2799 = vmatprep.subr.mxu0 0.0
    %2800 = vmatpush1.msra.mxu0 0.0
    %2801 = vmatprep.subr.mxu0 0.0
    %2802 = vmatpush1.msra.mxu0 0.0
    %2803 = vmatprep.subr.mxu0 0.0
    %2804 = vmatpush1.msra.mxu0 0.0
    %2805 = vmatprep.subr.mxu0 0.0
    %2806 = vmatpush1.msra.mxu0 0.0
    %2807 = vmatprep.subr.mxu0 0.0
    %2808 = vmatpush1.msra.mxu0 0.0
    %2809 = vmatprep.subr.mxu0 0.0
    %2810 = vmatpush1.msra.mxu0 0.0
    %2811 = vmatprep.subr.mxu0 0.0
    %2812 = vmatpush1.msra.mxu0 0.0
    %2813 = vmatprep.subr.mxu0 0.0
    %2814 = vmatpush1.msra.mxu0 0.0
    %2815 = vmatprep.subr.mxu0 0.0
    %2816 = vmatpush1.msra.mxu0 0.0
    %2817 = vmatprep.subr.mxu0 0.0
    %2818 = vmatpush1.msra.mxu0 0.0
    %2819 = vmatprep.subr.mxu0 0.0
    %2820 = vmatpush1.msra.mxu0 0.0
    %2821 = vmatprep.subr.mxu0 0.0
    %2822 = vmatpush1.msra.mxu0 0.0
    %2823 = vmatprep.subr.mxu0 0.0
    %2824 = vmatpush1.msra.mxu0 0.0
    %2825 = vmatprep.subr.mxu0 0.0
    %2826 = vmatpush1.msra.mxu0 0.0
    %2827 = vmatprep.subr.mxu0 0.0
    %2828 = vmatpush1.msra.mxu0 0.0
    %2829 = vmatprep.subr.mxu0 0.0
    %2830 = vmatpush1.msra.mxu0 0.0
    %2831 = vmatprep.subr.mxu0 0.0
    %2832 = vmatpush1.msra.mxu0 0.0
    %2833 = vmatprep.subr.mxu0 0.0
    %2834 = vmatpush1.msra.mxu0 0.0
    %2835 = vmatprep.subr.mxu0 0.0
    %2836 = vmatpush1.msra.mxu0 0.0
    %2837 = vmatprep.subr.mxu0 0.0
    %2838 = vmatpush1.msra.mxu0 0.0
    %2839 = vmatprep.subr.mxu0 0.0
    %2840 = vmatpush1.msra.mxu0 0.0
    %2841 = vmatprep.subr.mxu0 0.0
    %2842 = vmatpush1.msra.mxu0 0.0
    %2843 = vmatprep.subr.mxu0 0.0
    %2844 = vmatpush1.msra.mxu0 0.0
    %2845 = vmatprep.subr.mxu0 0.0
    %2846 = vmatpush1.msra.mxu0 0.0
    %2847 = vmatprep.subr.mxu0 0.0
    %2848 = vmatpush1.msra.mxu0 0.0
    %2849 = vmatprep.subr.mxu0 0.0
    %2850 = vmatpush1.msra.mxu0 0.0
    %2851 = vmatprep.subr.mxu0 0.0
    %2852 = vmatpush1.msra.mxu0 0.0
    %2853 = vmatprep.subr.mxu0 0.0
    %2854 = vmatpush1.msra.mxu0 0.0
    %2855 = vmatprep.subr.mxu0 0.0
    %2856 = vmatpush1.msra.mxu0 0.0
    %2857 = vmatprep.subr.mxu0 0.0
    %2858 = vmatpush1.msra.mxu0 0.0
    %2859 = vmatprep.mubr.f32.mxu0 0.0
    %2860 = vmatmul.mubr.f32.gmra.mrb[0].mxu0 %v2718
    %v2861 = vpop.f32.mrb[0].mxu0
    %v2862 = vadd.f32 0.0, %v2861
    %v2863 = vpop.f32.mrb[0].mxu0
    %2864 = vdwg.mxu0
    %2866 = vrot.lane.b32.xlu0 %v2794, 56
    %v2867 = vpop.permute.xlu0 %2866
    %v2870 = vsel %vm383, %v2862, 0
    %2872 = vmatprep.subr.mxu0 0.0
    %2873 = vmatpush1.msra.mxu0 %v2867
    %2874 = vmatprep.subr.mxu0 0.0
    %2875 = vmatpush1.msra.mxu0 0.0
    %2876 = vmatprep.subr.mxu0 0.0
    %2877 = vmatpush1.msra.mxu0 0.0
    %2878 = vmatprep.subr.mxu0 0.0
    %2879 = vmatpush1.msra.mxu0 0.0
    %2880 = vmatprep.subr.mxu0 0.0
    %2881 = vmatpush1.msra.mxu0 0.0
    %2882 = vmatprep.subr.mxu0 0.0
    %2883 = vmatpush1.msra.mxu0 0.0
    %2884 = vmatprep.subr.mxu0 0.0
    %2885 = vmatpush1.msra.mxu0 0.0
    %2886 = vmatprep.subr.mxu0 0.0
    %2887 = vmatpush1.msra.mxu0 0.0
    %2888 = vmatprep.subr.mxu0 0.0
    %2889 = vmatpush1.msra.mxu0 0.0
    %2890 = vmatprep.subr.mxu0 0.0
    %2891 = vmatpush1.msra.mxu0 0.0
    %2892 = vmatprep.subr.mxu0 0.0
    %2893 = vmatpush1.msra.mxu0 0.0
    %2894 = vmatprep.subr.mxu0 0.0
    %2895 = vmatpush1.msra.mxu0 0.0
    %2896 = vmatprep.subr.mxu0 0.0
    %2897 = vmatpush1.msra.mxu0 0.0
    %2898 = vmatprep.subr.mxu0 0.0
    %2899 = vmatpush1.msra.mxu0 0.0
    %2900 = vmatprep.subr.mxu0 0.0
    %2901 = vmatpush1.msra.mxu0 0.0
    %2902 = vmatprep.subr.mxu0 0.0
    %2903 = vmatpush1.msra.mxu0 0.0
    %2904 = vmatprep.subr.mxu0 0.0
    %2905 = vmatpush1.msra.mxu0 0.0
    %2906 = vmatprep.subr.mxu0 0.0
    %2907 = vmatpush1.msra.mxu0 0.0
    %2908 = vmatprep.subr.mxu0 0.0
    %2909 = vmatpush1.msra.mxu0 0.0
    %2910 = vmatprep.subr.mxu0 0.0
    %2911 = vmatpush1.msra.mxu0 0.0
    %2912 = vmatprep.subr.mxu0 0.0
    %2913 = vmatpush1.msra.mxu0 0.0
    %2914 = vmatprep.subr.mxu0 0.0
    %2915 = vmatpush1.msra.mxu0 0.0
    %2916 = vmatprep.subr.mxu0 0.0
    %2917 = vmatpush1.msra.mxu0 0.0
    %2918 = vmatprep.subr.mxu0 0.0
    %2919 = vmatpush1.msra.mxu0 0.0
    %2920 = vmatprep.subr.mxu0 0.0
    %2921 = vmatpush1.msra.mxu0 0.0
    %2922 = vmatprep.subr.mxu0 0.0
    %2923 = vmatpush1.msra.mxu0 0.0
    %2924 = vmatprep.subr.mxu0 0.0
    %2925 = vmatpush1.msra.mxu0 0.0
    %2926 = vmatprep.subr.mxu0 0.0
    %2927 = vmatpush1.msra.mxu0 0.0
    %2928 = vmatprep.subr.mxu0 0.0
    %2929 = vmatpush1.msra.mxu0 0.0
    %2930 = vmatprep.subr.mxu0 0.0
    %2931 = vmatpush1.msra.mxu0 0.0
    %2932 = vmatprep.subr.mxu0 0.0
    %2933 = vmatpush1.msra.mxu0 0.0
    %2934 = vmatprep.subr.mxu0 0.0
    %2935 = vmatpush1.msra.mxu0 0.0
    %2936 = vmatprep.mubr.f32.mxu0 0.0
    %2937 = vmatmul.mubr.f32.gmra.mrb[0].mxu0 %v2870
    %v2938 = vpop.f32.mrb[0].mxu0
    %v2939 = vadd.f32 0.0, %v2938
    %v2940 = vpop.f32.mrb[0].mxu0
    %2941 = vdwg.mxu0
    %2943 = vrot.lane.b32.xlu0 %v2939, 72
    %v2944 = vpop.permute.xlu0 %2943
    %v2946 = vadd.f32 %v2794, %v2944
    %2947 = vmatprep.subr.mxu0 0.0
    %2948 = vmatpush1.msra.mxu0 %v2862
    %2949 = vmatprep.subr.mxu0 0.0
    %2950 = vmatpush1.msra.mxu0 0.0
    %2951 = vmatprep.subr.mxu0 0.0
    %2952 = vmatpush1.msra.mxu0 0.0
    %2953 = vmatprep.subr.mxu0 0.0
    %2954 = vmatpush1.msra.mxu0 0.0
    %2955 = vmatprep.subr.mxu0 0.0
    %2956 = vmatpush1.msra.mxu0 0.0
    %2957 = vmatprep.subr.mxu0 0.0
    %2958 = vmatpush1.msra.mxu0 0.0
    %2959 = vmatprep.subr.mxu0 0.0
    %2960 = vmatpush1.msra.mxu0 0.0
    %2961 = vmatprep.subr.mxu0 0.0
    %2962 = vmatpush1.msra.mxu0 0.0
    %2963 = vmatprep.subr.mxu0 0.0
    %2964 = vmatpush1.msra.mxu0 0.0
    %2965 = vmatprep.subr.mxu0 0.0
    %2966 = vmatpush1.msra.mxu0 0.0
    %2967 = vmatprep.subr.mxu0 0.0
    %2968 = vmatpush1.msra.mxu0 0.0
    %2969 = vmatprep.subr.mxu0 0.0
    %2970 = vmatpush1.msra.mxu0 0.0
    %2971 = vmatprep.subr.mxu0 0.0
    %2972 = vmatpush1.msra.mxu0 0.0
    %2973 = vmatprep.subr.mxu0 0.0
    %2974 = vmatpush1.msra.mxu0 0.0
    %2975 = vmatprep.subr.mxu0 0.0
    %2976 = vmatpush1.msra.mxu0 0.0
    %2977 = vmatprep.subr.mxu0 0.0
    %2978 = vmatpush1.msra.mxu0 0.0
    %2979 = vmatprep.subr.mxu0 0.0
    %2980 = vmatpush1.msra.mxu0 0.0
    %2981 = vmatprep.subr.mxu0 0.0
    %2982 = vmatpush1.msra.mxu0 0.0
    %2983 = vmatprep.subr.mxu0 0.0
    %2984 = vmatpush1.msra.mxu0 0.0
    %2985 = vmatprep.subr.mxu0 0.0
    %2986 = vmatpush1.msra.mxu0 0.0
    %2987 = vmatprep.subr.mxu0 0.0
    %2988 = vmatpush1.msra.mxu0 0.0
    %2989 = vmatprep.subr.mxu0 0.0
    %2990 = vmatpush1.msra.mxu0 0.0
    %2991 = vmatprep.subr.mxu0 0.0
    %2992 = vmatpush1.msra.mxu0 0.0
    %2993 = vmatprep.subr.mxu0 0.0
    %2994 = vmatpush1.msra.mxu0 0.0
    %2995 = vmatprep.subr.mxu0 0.0
    %2996 = vmatpush1.msra.mxu0 0.0
    %2997 = vmatprep.subr.mxu0 0.0
    %2998 = vmatpush1.msra.mxu0 0.0
    %2999 = vmatprep.subr.mxu0 0.0
    %3000 = vmatpush1.msra.mxu0 0.0
    %3001 = vmatprep.subr.mxu0 0.0
    %3002 = vmatpush1.msra.mxu0 0.0
    %3003 = vmatprep.subr.mxu0 0.0
    %3004 = vmatpush1.msra.mxu0 0.0
    %3005 = vmatprep.subr.mxu0 0.0
    %3006 = vmatpush1.msra.mxu0 0.0
    %3007 = vmatprep.subr.mxu0 0.0
    %3008 = vmatpush1.msra.mxu0 0.0
    %3009 = vmatprep.subr.mxu0 0.0
    %3010 = vmatpush1.msra.mxu0 0.0
    %3011 = vmatprep.mubr.f32.mxu0 0.0
    %3012 = vmatmul.mubr.f32.gmra.mrb[0].mxu0 %v2870
    %v3013 = vpop.f32.mrb[0].mxu0
    %v3014 = vadd.f32 0.0, %v3013
    %v3015 = vpop.f32.mrb[0].mxu0
    %3016 = vdwg.mxu0
    %3018 = vrot.lane.b32.xlu0 %v2946, 56
    %v3019 = vpop.permute.xlu0 %3018
    %v3022 = vsel %vm383, %v3014, 0
    %3024 = vmatprep.subr.mxu0 0.0
    %3025 = vmatpush1.msra.mxu0 %v3019
    %3026 = vmatprep.subr.mxu0 0.0
    %3027 = vmatpush1.msra.mxu0 0.0
    %3028 = vmatprep.subr.mxu0 0.0
    %3029 = vmatpush1.msra.mxu0 0.0
    %3030 = vmatprep.subr.mxu0 0.0
    %3031 = vmatpush1.msra.mxu0 0.0
    %3032 = vmatprep.subr.mxu0 0.0
    %3033 = vmatpush1.msra.mxu0 0.0
    %3034 = vmatprep.subr.mxu0 0.0
    %3035 = vmatpush1.msra.mxu0 0.0
    %3036 = vmatprep.subr.mxu0 0.0
    %3037 = vmatpush1.msra.mxu0 0.0
    %3038 = vmatprep.subr.mxu0 0.0
    %3039 = vmatpush1.msra.mxu0 0.0
    %3040 = vmatprep.subr.mxu0 0.0
    %3041 = vmatpush1.msra.mxu0 0.0
    %3042 = vmatprep.subr.mxu0 0.0
    %3043 = vmatpush1.msra.mxu0 0.0
    %3044 = vmatprep.subr.mxu0 0.0
    %3045 = vmatpush1.msra.mxu0 0.0
    %3046 = vmatprep.subr.mxu0 0.0
    %3047 = vmatpush1.msra.mxu0 0.0
    %3048 = vmatprep.subr.mxu0 0.0
    %3049 = vmatpush1.msra.mxu0 0.0
    %3050 = vmatprep.subr.mxu0 0.0
    %3051 = vmatpush1.msra.mxu0 0.0
    %3052 = vmatprep.subr.mxu0 0.0
    %3053 = vmatpush1.msra.mxu0 0.0
    %3054 = vmatprep.subr.mxu0 0.0
    %3055 = vmatpush1.msra.mxu0 0.0
    %3056 = vmatprep.subr.mxu0 0.0
    %3057 = vmatpush1.msra.mxu0 0.0
    %3058 = vmatprep.subr.mxu0 0.0
    %3059 = vmatpush1.msra.mxu0 0.0
    %3060 = vmatprep.subr.mxu0 0.0
    %3061 = vmatpush1.msra.mxu0 0.0
    %3062 = vmatprep.subr.mxu0 0.0
    %3063 = vmatpush1.msra.mxu0 0.0
    %3064 = vmatprep.subr.mxu0 0.0
    %3065 = vmatpush1.msra.mxu0 0.0
    %3066 = vmatprep.subr.mxu0 0.0
    %3067 = vmatpush1.msra.mxu0 0.0
    %3068 = vmatprep.subr.mxu0 0.0
    %3069 = vmatpush1.msra.mxu0 0.0
    %3070 = vmatprep.subr.mxu0 0.0
    %3071 = vmatpush1.msra.mxu0 0.0
    %3072 = vmatprep.subr.mxu0 0.0
    %3073 = vmatpush1.msra.mxu0 0.0
    %3074 = vmatprep.subr.mxu0 0.0
    %3075 = vmatpush1.msra.mxu0 0.0
    %3076 = vmatprep.subr.mxu0 0.0
    %3077 = vmatpush1.msra.mxu0 0.0
    %3078 = vmatprep.subr.mxu0 0.0
    %3079 = vmatpush1.msra.mxu0 0.0
    %3080 = vmatprep.subr.mxu0 0.0
    %3081 = vmatpush1.msra.mxu0 0.0
    %3082 = vmatprep.subr.mxu0 0.0
    %3083 = vmatpush1.msra.mxu0 0.0
    %3084 = vmatprep.subr.mxu0 0.0
    %3085 = vmatpush1.msra.mxu0 0.0
    %3086 = vmatprep.subr.mxu0 0.0
    %3087 = vmatpush1.msra.mxu0 0.0
    %3088 = vmatprep.mubr.f32.mxu0 0.0
    %3089 = vmatmul.mubr.f32.gmra.mrb[0].mxu0 %v3022
    %v3090 = vpop.f32.mrb[0].mxu0
    %v3091 = vadd.f32 0.0, %v3090
    %v3092 = vpop.f32.mrb[0].mxu0
    %3093 = vdwg.mxu0
    %3095 = vrot.lane.b32.xlu0 %v3091, 72
    %v3096 = vpop.permute.xlu0 %3095
    %v3098 = vadd.f32 %v2946, %v3096
    %3100 = vrot.lane.b32.xlu0 %v2615, 116
    %v3101 = vpop.permute.xlu0 %3100
    %v3102 = vsel %vm463, %v3101, 0
    %3104 = vmatprep.subr.mxu0 0.0
    %3105 = vmatpush1.xpose.msra.mxu0 %v2634
    %3106 = vmatprep.subr.mxu0 0.0
    %3107 = vmatpush1.xpose.msra.mxu0 0.0
    %3108 = vmatprep.subr.mxu0 0.0
    %3109 = vmatpush1.xpose.msra.mxu0 0.0
    %3110 = vmatprep.subr.mxu0 0.0
    %3111 = vmatpush1.xpose.msra.mxu0 0.0
    %3112 = vmatprep.subr.mxu0 0.0
    %3113 = vmatpush1.xpose.msra.mxu0 0.0
    %3114 = vmatprep.subr.mxu0 0.0
    %3115 = vmatpush1.xpose.msra.mxu0 0.0
    %3116 = vmatprep.subr.mxu0 0.0
    %3117 = vmatpush1.xpose.msra.mxu0 0.0
    %3118 = vmatprep.subr.mxu0 0.0
    %3119 = vmatpush1.xpose.msra.mxu0 0.0
    %3120 = vmatprep.subr.mxu0 0.0
    %3121 = vmatpush1.xpose.msra.mxu0 0.0
    %3122 = vmatprep.subr.mxu0 0.0
    %3123 = vmatpush1.xpose.msra.mxu0 0.0
    %3124 = vmatprep.subr.mxu0 0.0
    %3125 = vmatpush1.xpose.msra.mxu0 0.0
    %3126 = vmatprep.subr.mxu0 0.0
    %3127 = vmatpush1.xpose.msra.mxu0 0.0
    %3128 = vmatprep.subr.mxu0 0.0
    %3129 = vmatpush1.xpose.msra.mxu0 0.0
    %3130 = vmatprep.subr.mxu0 0.0
    %3131 = vmatpush1.xpose.msra.mxu0 0.0
    %3132 = vmatprep.subr.mxu0 0.0
    %3133 = vmatpush1.xpose.msra.mxu0 0.0
    %3134 = vmatprep.subr.mxu0 0.0
    %3135 = vmatpush1.xpose.msra.mxu0 0.0
    %3136 = vmatprep.subr.mxu0 0.0
    %3137 = vmatpush1.xpose.msra.mxu0 0.0
    %3138 = vmatprep.subr.mxu0 0.0
    %3139 = vmatpush1.xpose.msra.mxu0 0.0
    %3140 = vmatprep.subr.mxu0 0.0
    %3141 = vmatpush1.xpose.msra.mxu0 0.0
    %3142 = vmatprep.subr.mxu0 0.0
    %3143 = vmatpush1.xpose.msra.mxu0 0.0
    %3144 = vmatprep.subr.mxu0 0.0
    %3145 = vmatpush1.xpose.msra.mxu0 0.0
    %3146 = vmatprep.subr.mxu0 0.0
    %3147 = vmatpush1.xpose.msra.mxu0 0.0
    %3148 = vmatprep.subr.mxu0 0.0
    %3149 = vmatpush1.xpose.msra.mxu0 0.0
    %3150 = vmatprep.subr.mxu0 0.0
    %3151 = vmatpush1.xpose.msra.mxu0 0.0
    %3152 = vmatprep.subr.mxu0 0.0
    %3153 = vmatpush1.xpose.msra.mxu0 0.0
    %3154 = vmatprep.subr.mxu0 0.0
    %3155 = vmatpush1.xpose.msra.mxu0 0.0
    %3156 = vmatprep.subr.mxu0 0.0
    %3157 = vmatpush1.xpose.msra.mxu0 0.0
    %3158 = vmatprep.subr.mxu0 0.0
    %3159 = vmatpush1.xpose.msra.mxu0 0.0
    %3160 = vmatprep.subr.mxu0 0.0
    %3161 = vmatpush1.xpose.msra.mxu0 0.0
    %3162 = vmatprep.subr.mxu0 0.0
    %3163 = vmatpush1.xpose.msra.mxu0 0.0
    %3164 = vmatprep.subr.mxu0 0.0
    %3165 = vmatpush1.xpose.msra.mxu0 0.0
    %3166 = vmatprep.subr.mxu0 0.0
    %3167 = vmatpush1.xpose.msra.mxu0 0.0
    %3168 = vmatprep.mubr.f32.mxu0 0.0
    %3169 = vmatmul.mubr.f32.gmra.mrb[0].mxu0 %v3102
    %v3170 = vpop.f32.mrb[0].mxu0
    %v3171 = vadd.f32 0.0, %v3170
    %v3172 = vpop.f32.mrb[0].mxu0
    %3173 = vdwg.mxu0
    %v3174 = vmul.f32 %v379, %v3171
    %3176 = vrot.lane.b32.xlu0 %v3098, 56
    %v3177 = vpop.permute.xlu0 %3176
    %v3180 = vsel %vm383, %v3174, 0
    %3182 = vmatprep.subr.mxu0 0.0
    %3183 = vmatpush1.msra.mxu0 %v3177
    %3184 = vmatprep.subr.mxu0 0.0
    %3185 = vmatpush1.msra.mxu0 0.0
    %3186 = vmatprep.subr.mxu0 0.0
    %3187 = vmatpush1.msra.mxu0 0.0
    %3188 = vmatprep.subr.mxu0 0.0
    %3189 = vmatpush1.msra.mxu0 0.0
    %3190 = vmatprep.subr.mxu0 0.0
    %3191 = vmatpush1.msra.mxu0 0.0
    %3192 = vmatprep.subr.mxu0 0.0
    %3193 = vmatpush1.msra.mxu0 0.0
    %3194 = vmatprep.subr.mxu0 0.0
    %3195 = vmatpush1.msra.mxu0 0.0
    %3196 = vmatprep.subr.mxu0 0.0
    %3197 = vmatpush1.msra.mxu0 0.0
    %3198 = vmatprep.subr.mxu0 0.0
    %3199 = vmatpush1.msra.mxu0 0.0
    %3200 = vmatprep.subr.mxu0 0.0
    %3201 = vmatpush1.msra.mxu0 0.0
    %3202 = vmatprep.subr.mxu0 0.0
    %3203 = vmatpush1.msra.mxu0 0.0
    %3204 = vmatprep.subr.mxu0 0.0
    %3205 = vmatpush1.msra.mxu0 0.0
    %3206 = vmatprep.subr.mxu0 0.0
    %3207 = vmatpush1.msra.mxu0 0.0
    %3208 = vmatprep.subr.mxu0 0.0
    %3209 = vmatpush1.msra.mxu0 0.0
    %3210 = vmatprep.subr.mxu0 0.0
    %3211 = vmatpush1.msra.mxu0 0.0
    %3212 = vmatprep.subr.mxu0 0.0
    %3213 = vmatpush1.msra.mxu0 0.0
    %3214 = vmatprep.subr.mxu0 0.0
    %3215 = vmatpush1.msra.mxu0 0.0
    %3216 = vmatprep.subr.mxu0 0.0
    %3217 = vmatpush1.msra.mxu0 0.0
    %3218 = vmatprep.subr.mxu0 0.0
    %3219 = vmatpush1.msra.mxu0 0.0
    %3220 = vmatprep.subr.mxu0 0.0
    %3221 = vmatpush1.msra.mxu0 0.0
    %3222 = vmatprep.subr.mxu0 0.0
    %3223 = vmatpush1.msra.mxu0 0.0
    %3224 = vmatprep.subr.mxu0 0.0
    %3225 = vmatpush1.msra.mxu0 0.0
    %3226 = vmatprep.subr.mxu0 0.0
    %3227 = vmatpush1.msra.mxu0 0.0
    %3228 = vmatprep.subr.mxu0 0.0
    %3229 = vmatpush1.msra.mxu0 0.0
    %3230 = vmatprep.subr.mxu0 0.0
    %3231 = vmatpush1.msra.mxu0 0.0
    %3232 = vmatprep.subr.mxu0 0.0
    %3233 = vmatpush1.msra.mxu0 0.0
    %3234 = vmatprep.subr.mxu0 0.0
    %3235 = vmatpush1.msra.mxu0 0.0
    %3236 = vmatprep.subr.mxu0 0.0
    %3237 = vmatpush1.msra.mxu0 0.0
    %3238 = vmatprep.subr.mxu0 0.0
    %3239 = vmatpush1.msra.mxu0 0.0
    %3240 = vmatprep.subr.mxu0 0.0
    %3241 = vmatpush1.msra.mxu0 0.0
    %3242 = vmatprep.subr.mxu0 0.0
    %3243 = vmatpush1.msra.mxu0 0.0
    %3244 = vmatprep.subr.mxu0 0.0
    %3245 = vmatpush1.msra.mxu0 0.0
    %3246 = vmatprep.mubr.f32.mxu0 0.0
    %3247 = vmatmul.mubr.f32.gmra.mrb[0].mxu0 %v3180
    %v3248 = vpop.f32.mrb[0].mxu0
    %v3249 = vadd.f32 0.0, %v3248
    %v3250 = vpop.f32.mrb[0].mxu0
    %3251 = vdwg.mxu0
    %v3252 = vmul.f32 %v3249, %v3249
    %v3253 = vsel %vm1129, %v3252, 0.0
    %3254 = vadd.xlane.f32.xlu0 %v3253
    %v3255 = vpop.xlane.xlu0 %3254
    %v3256 = vmul.f32 %v3255, %v1133
    %v3257 = vadd.f32 %v3256, 1e-05
    %v3258 = vrsqrt.pop %v3257
    %v3259 = vmul.f32 %v3249, %v3258
    %v3260 = vmul.f32 %v3259, %v1141
    %3262 = vrot.lane.b32.xlu0 %v128, 104
    %v3263 = vpop.permute.xlu0 %3262
    %v3265 = vmul.f32 %v3260, %v3263
    %3267 = vrot.lane.b32.xlu0 %v2590, 104
    %v3268 = vpop.permute.xlu0 %3267
    %v3270 = vmul.f32 %v3265, %v3268
    %3272 = vrot.lane.b32.xlu0 %v3270, 24
    %v3273 = vpop.permute.xlu0 %3272
    %v3275 = vsel %vm1129, %v2591, %v3273
    %v3276 = vld [vmem:[%s3] sm:$0xff]
    %v3277 = vld [vmem:[%s3 + $0x8] sm:$0xff]
    %v3278 = vld [vmem:[%s3 + $0x10] sm:$0xff]
    %v3279 = vld [vmem:[%s3 + $0x18] sm:$0xff]
    %v3280 = vld [vmem:[%s3 + $0x20] sm:$0xff]
    %v3281 = vld [vmem:[%s3 + $0x28] sm:$0xff]
    %vm3282 = vcmask 392192
    %v3284 = vsel %vm3282, %v1834, 0
    %v3287 = vsel %vm3282, %v3275, 0
    %3289 = vmatprep.subr.mxu0 0.0
    %3290 = vmatpush1.msra.mxu0 %v3276
    %3291 = vmatprep.subr.mxu0 0.0
    %3292 = vmatpush1.msra.mxu0 %v3277
    %3293 = vmatprep.subr.mxu0 0.0
    %3294 = vmatpush1.msra.mxu0 %v3278
    %3295 = vmatprep.subr.mxu0 0.0
    %3296 = vmatpush1.msra.mxu0 %v3279
    %3297 = vmatprep.subr.mxu0 0.0
    %3298 = vmatpush1.msra.mxu0 %v3280
    %3299 = vmatprep.subr.mxu0 0.0
    %3300 = vmatpush1.msra.mxu0 %v3281
    %3301 = vmatprep.subr.mxu0 0.0
    %3302 = vmatpush1.msra.mxu0 0.0
    %3303 = vmatprep.subr.mxu0 0.0
    %3304 = vmatpush1.msra.mxu0 0.0
    %3305 = vmatprep.subr.mxu0 0.0
    %3306 = vmatpush1.msra.mxu0 0.0
    %3307 = vmatprep.subr.mxu0 0.0
    %3308 = vmatpush1.msra.mxu0 0.0
    %3309 = vmatprep.subr.mxu0 0.0
    %3310 = vmatpush1.msra.mxu0 0.0
    %3311 = vmatprep.subr.mxu0 0.0
    %3312 = vmatpush1.msra.mxu0 0.0
    %3313 = vmatprep.subr.mxu0 0.0
    %3314 = vmatpush1.msra.mxu0 0.0
    %3315 = vmatprep.subr.mxu0 0.0
    %3316 = vmatpush1.msra.mxu0 0.0
    %3317 = vmatprep.subr.mxu0 0.0
    %3318 = vmatpush1.msra.mxu0 0.0
    %3319 = vmatprep.subr.mxu0 0.0
    %3320 = vmatpush1.msra.mxu0 0.0
    %3321 = vmatprep.subr.mxu0 0.0
    %3322 = vmatpush1.msra.mxu0 0.0
    %3323 = vmatprep.subr.mxu0 0.0
    %3324 = vmatpush1.msra.mxu0 0.0
    %3325 = vmatprep.subr.mxu0 0.0
    %3326 = vmatpush1.msra.mxu0 0.0
    %3327 = vmatprep.subr.mxu0 0.0
    %3328 = vmatpush1.msra.mxu0 0.0
    %3329 = vmatprep.subr.mxu0 0.0
    %3330 = vmatpush1.msra.mxu0 0.0
    %3331 = vmatprep.subr.mxu0 0.0
    %3332 = vmatpush1.msra.mxu0 0.0
    %3333 = vmatprep.subr.mxu0 0.0
    %3334 = vmatpush1.msra.mxu0 0.0
    %3335 = vmatprep.subr.mxu0 0.0
    %3336 = vmatpush1.msra.mxu0 0.0
    %3337 = vmatprep.subr.mxu0 0.0
    %3338 = vmatpush1.msra.mxu0 0.0
    %3339 = vmatprep.subr.mxu0 0.0
    %3340 = vmatpush1.msra.mxu0 0.0
    %3341 = vmatprep.subr.mxu0 0.0
    %3342 = vmatpush1.msra.mxu0 0.0
    %3343 = vmatprep.subr.mxu0 0.0
    %3344 = vmatpush1.msra.mxu0 0.0
    %3345 = vmatprep.subr.mxu0 0.0
    %3346 = vmatpush1.msra.mxu0 0.0
    %3347 = vmatprep.subr.mxu0 0.0
    %3348 = vmatpush1.msra.mxu0 0.0
    %3349 = vmatprep.subr.mxu0 0.0
    %3350 = vmatpush1.msra.mxu0 0.0
    %3351 = vmatprep.subr.mxu0 0.0
    %3352 = vmatpush1.msra.mxu0 0.0
    %3353 = vmatprep.mubr.f32.mxu0 0.0
    %3354 = vmatmul.mubr.f32.gmra.mrb[0].mxu0 %v3284
    %v3355 = vpop.f32.mrb[0].mxu0
    %v3356 = vadd.f32 0.0, %v3355
    %v3357 = vpop.f32.mrb[0].mxu0
    %3358 = vmatprep.mubr.f32.mxu0 0.0
    %3359 = vmatmul.mubr.f32.gmra.mrb[0].mxu0 %v3287
    %v3360 = vpop.f32.mrb[0].mxu0
    %v3361 = vadd.f32 0.0, %v3360
    %v3362 = vpop.f32.mrb[0].mxu0
    %3363 = vdwg.mxu0
    %3364 = vst.msk [vmem:[#allocation5] sm:$0xff] %vm46, %v3356
    %3365 = vst.msk [vmem:[#allocation5 + $0x8] sm:$0xff] %vm46, %v3361
    // Predicated region
    $region22: #{gated_delta_net_forward.1} parent=1 // pred_check
      _
    $region23: #{gated_delta_net_forward.1} parent=1 // pred_check_branch
      %3367 = sbr.rel (0) target = $region25
    $region24: #{gated_delta_net_forward.1} parent=1 // pred_region
      %s3369 = ssub.s32 256, 256
      %3370 = vsyncadd [#allocation4], %s3369
      %s3371 = sshll.u32 [#allocation5], 4
      %s3372 = int_to_ptr.vmem [resolvable:$true] %s3371
      %3377 = dma.vmem_to_hbm [thread:$0]  %s3372, 256, %s4, [#allocation4], 128, 128, 8
    $region25: #{gated_delta_net_forward.1} parent=1 // pred_fallthru
      _
    // Predicated region
    $region26: #{gated_delta_net_forward.1} parent=1 // pred_check
      _
    $region27: #{gated_delta_net_forward.1} parent=1 // pred_check_branch
      %3379 = sbr.rel (0) target = $region29
    $region28: #{gated_delta_net_forward.1} parent=1 // pred_region
      %3380 = dma.done [#allocation4], 256
    $region29: #{gated_delta_net_forward.1} parent=1 // pred_fallthru
      _
    %3381 = vsyncpa [#allocation3], 1
    %3382 = vsyncpa [#allocation4], 1

</llo_original>
